<compile_context>
chip_gen: v7x
topology: tpu7x:2x2x1
jax: 0.10.0
libtpu: 0.0.40
codegen_flags: <defaults>
</compile_context>

<pallas_src>
import jax
import jax.numpy as jnp
from jax.experimental import pallas as pl
from jax.experimental.pallas import tpu as pltpu

_EPS = 1e-5
_INV_SQRT2 = 0.7071067811865476


def _round_up(x, m):
    return (x + m - 1) // m * m


def _gelu_exact(x):
    # exact GELU: 0.5 * x * (1 + erf(x / sqrt(2)))  (nn.GELU() default)
    return 0.5 * x * (1.0 + jax.lax.erf(x * _INV_SQRT2))


# ---------------------------------------------------------------------------
# Kernel
# ---------------------------------------------------------------------------
def neumf_kernel(
    u_ref, i_ref,                         # (TILE_B, 2D) fused [mlp | mf] rows
    w1a_ref, w1b_ref, b1_ref,             # fc1 (BN folded), split over concat
    w2_ref, b2_ref,                       # fc2 (BN folded)
    w3_ref, b3_ref,                       # fc3 (BN folded)
    w4_ref, b4_ref,                       # fc4 (BN folded)
    wo_mlp_ref, wo_mf_ref, bo_ref,        # affine_output, split over concat
    out_ref,
):
    D = w1a_ref.shape[0]                  # embedding_dim (static)
    cdt = w1a_ref.dtype                   # compute dtype of matmul operands

    u = u_ref[...]
    it = i_ref[...]
    u_mlp = u[:, :D]
    i_mlp = it[:, :D]
    u_mf = u[:, D:]
    i_mf = it[:, D:]

    # fc1: Linear(2D -> L0) on concat(u_mlp, i_mlp) == split matmul (BN folded)
    h = (jnp.dot(u_mlp, w1a_ref[...], preferred_element_type=jnp.float32)
         + jnp.dot(i_mlp, w1b_ref[...], preferred_element_type=jnp.float32)
         + b1_ref[...])
    h = _gelu_exact(h)

    # fc2 (+BN folded) -> GELU; Dropout(p=0.3) is identity in eval mode.
    h = jnp.dot(h.astype(cdt), w2_ref[...],
                preferred_element_type=jnp.float32) + b2_ref[...]
    h = _gelu_exact(h)

    # fc3 (+BN folded) -> GELU; Dropout(p=0.3) is identity in eval mode.
    h = jnp.dot(h.astype(cdt), w3_ref[...],
                preferred_element_type=jnp.float32) + b3_ref[...]
    h = _gelu_exact(h)

    # fc4 (+BN folded) -> GELU
    h = jnp.dot(h.astype(cdt), w4_ref[...],
                preferred_element_type=jnp.float32) + b4_ref[...]
    h = _gelu_exact(h)

    # GMF branch: elementwise product (in f32; safe on v5e's f32-only VPU).
    mf = u_mf.astype(jnp.float32) * i_mf.astype(jnp.float32)

    # affine_output on concat(h, mf) == split lane reductions (XLU, idle here).
    logits = (jnp.sum(h * wo_mlp_ref[...], axis=-1, keepdims=True)
              + jnp.sum(mf * wo_mf_ref[...], axis=-1, keepdims=True)
              + bo_ref[...])

    out_ref[...] = jax.nn.sigmoid(logits)


# ---------------------------------------------------------------------------
# Parameters
# ---------------------------------------------------------------------------
def make_params(key, num_users, num_items, embedding_dim, layers):
    """Deterministic synthetic parameters (shapes match the PyTorch module)."""
    D = embedding_dim
    L0, L1, L2, L3 = layers
    ks = jax.random.split(key, 16)
    gain = jnp.sqrt(2.0)  # calculate_gain('relu')

    def xavier(k, shape):
        fan_in, fan_out = shape[0], shape[1]
        bound = gain * jnp.sqrt(6.0 / (fan_in + fan_out))
        return jax.random.uniform(k, shape, jnp.float32, -bound, bound)

    def bn_params(width):
        # rows: gamma, beta, running_mean, running_var  (eval-mode defaults)
        return jnp.stack([
            jnp.ones((width,), jnp.float32),
            jnp.zeros((width,), jnp.float32),
            jnp.zeros((width,), jnp.float32),
            jnp.ones((width,), jnp.float32),
        ], axis=0)

    return dict(
        emb_user_mlp=xavier(ks[0], (num_users + 1, D)),
        emb_item_mlp=xavier(ks[1], (num_items + 1, D)),
        emb_user_mf=xavier(ks[2], (num_users + 1, D)),
        emb_item_mf=xavier(ks[3], (num_items + 1, D)),
        w1=xavier(ks[4], (2 * D, L0)), b1=0.01 * jnp.ones((1, L0), jnp.float32),
        bn1=bn_params(L0),
        w2=xavier(ks[5], (L0, L1)), b2=0.01 * jnp.ones((1, L1), jnp.float32),
        bn2=bn_params(L1),
        w3=xavier(ks[6], (L1, L2)), b3=0.01 * jnp.ones((1, L2), jnp.float32),
        bn3=bn_params(L2),
        w4=xavier(ks[7], (L2, L3)), b4=0.01 * jnp.ones((1, L3), jnp.float32),
        bn4=bn_params(L3),
        wo_mlp=xavier(ks[8], (1, L3)),       # affine_output weight, MLP part
        wo_mf=xavier(ks[9], (1, D)),         # affine_output weight, MF part
        bo=jnp.zeros((1, 1), jnp.float32),   # affine_output bias
    )


def prepare_inference_params(params, dtype=jnp.bfloat16):
    """Fold eval-mode BatchNorm into the linears, fuse embedding tables,
    cast matmul operands to `dtype` (biases / epilogue weights stay f32)."""
    D = params["emb_user_mlp"].shape[1]

    def fold(w, b, bn):
        gamma, beta, mean, var = bn[0], bn[1], bn[2], bn[3]
        scale = gamma / jnp.sqrt(var + _EPS)
        w_f = (w * scale[None, :]).astype(dtype)
        b_f = ((b - mean[None, :]) * scale[None, :] + beta[None, :]).astype(jnp.float32)
        return w_f, b_f

    w1, b1 = fold(params["w1"], params["b1"], params["bn1"])
    w2, b2 = fold(params["w2"], params["b2"], params["bn2"])
    w3, b3 = fold(params["w3"], params["b3"], params["bn3"])
    w4, b4 = fold(params["w4"], params["b4"], params["bn4"])

    return dict(
        # fused tables: one gather per side -> (B, 2D) rows [mlp | mf]
        emb_user=jnp.concatenate(
            [params["emb_user_mlp"], params["emb_user_mf"]], axis=1).astype(dtype),
        emb_item=jnp.concatenate(
            [params["emb_item_mlp"], params["emb_item_mf"]], axis=1).astype(dtype),
        w1a=w1[:D, :], w1b=w1[D:, :], b1=b1,
        w2=w2, b2=b2,
        w3=w3, b3=b3,
        w4=w4, b4=b4,
        wo_mlp=params["wo_mlp"].astype(jnp.float32),
        wo_mf=params["wo_mf"].astype(jnp.float32),
        bo=params["bo"].astype(jnp.float32),
    )


# ---------------------------------------------------------------------------
# Forward wrapper
# ---------------------------------------------------------------------------
@jax.jit
def neumf_forward(user_indices, item_indices, iparams):
    D2 = iparams["emb_user"].shape[1]      # 2 * embedding_dim
    B = user_indices.shape[0]

    # Batch tile: multiple of 512 (MXU M-dim on v6e/v7x), capped at 2048 so the
    # per-tile footprint stays far below v7x's 64 MiB VMEM even double-buffered.
    TILE_B = min(2048, _round_up(max(B, 1), 512))
    B_pad = _round_up(B, TILE_B)
    if B_pad != B:
        pad = B_pad - B
        zeros = jnp.zeros((pad,), user_indices.dtype)
        user_indices = jnp.concatenate([user_indices, zeros])
        item_indices = jnp.concatenate([item_indices, zeros])

    # Embedding lookups (data-dependent gather, done in plain JAX glue).
    u = jnp.take(iparams["emb_user"], user_indices, axis=0)   # (B_pad, 2D)
    i = jnp.take(iparams["emb_item"], item_indices, axis=0)   # (B_pad, 2D)

    num_tiles = B_pad // TILE_B

    act_spec = pl.BlockSpec((TILE_B, D2), lambda t: (t, 0))

    def resident(x):
        # whole tensor, same block every grid step -> stays VMEM-resident
        return pl.BlockSpec(x.shape, lambda t: (0, 0))

    inputs = (
        u, i,
        iparams["w1a"], iparams["w1b"], iparams["b1"],
        iparams["w2"], iparams["b2"],
        iparams["w3"], iparams["b3"],
        iparams["w4"], iparams["b4"],
        iparams["wo_mlp"], iparams["wo_mf"], iparams["bo"],
    )
    in_specs = [act_spec, act_spec] + [resident(x) for x in inputs[2:]]

    out = pl.pallas_call(
        neumf_kernel,
        out_shape=jax.ShapeDtypeStruct((B_pad, 1), jnp.float32),
        grid=(num_tiles,),
        in_specs=in_specs,
        out_specs=pl.BlockSpec((TILE_B, 1), lambda t: (t, 0)),
        compiler_params=pltpu.CompilerParams(
            dimension_semantics=("parallel",)),
    )(*inputs)

    return out[:B]


# ---------------------------------------------------------------------------
# Pure-JAX reference (mirrors the PyTorch module, f32, eval mode)
# ---------------------------------------------------------------------------
def neumf_reference(user_indices, item_indices, params):
    u_mlp = params["emb_user_mlp"][user_indices]
    i_mlp = params["emb_item_mlp"][item_indices]
    u_mf = params["emb_user_mf"][user_indices]
    i_mf = params["emb_item_mf"][item_indices]

    def bn_gelu(x, bn):
        y = (x - bn[2]) / jnp.sqrt(bn[3] + _EPS) * bn[0] + bn[1]
        return jax.nn.gelu(y, approximate=False)

    x = jnp.concatenate([u_mlp, i_mlp], axis=-1)
    h = bn_gelu(x @ params["w1"] + params["b1"], params["bn1"])
    h = bn_gelu(h @ params["w2"] + params["b2"], params["bn2"])
    h = bn_gelu(h @ params["w3"] + params["b3"], params["bn3"])
    h = bn_gelu(h @ params["w4"] + params["b4"], params["bn4"])
    mf = u_mf * i_mf
    cat = jnp.concatenate([h, mf], axis=-1)
    w_out = jnp.concatenate([params["wo_mlp"], params["wo_mf"]], axis=-1)
    logits = cat @ w_out.T + params["bo"]
    return jax.nn.sigmoid(logits)


if __name__ == "__main__":
    num_users, num_items = 100, 200
    embedding_dim = 32
    layers = [64, 32, 16, 8]
    layers_neumf = [64, 32, 16, 8]  # stored by the module but unused in forward
    batch = 8

    key = jax.random.PRNGKey(0)
    k_params, k_u, k_i, k_u2, k_i2 = jax.random.split(key, 5)
    params = make_params(k_params, num_users, num_items, embedding_dim, layers)

    user_indices = jax.random.randint(k_u, (batch,), 0, num_users + 1, jnp.int32)
    item_indices = jax.random.randint(k_i, (batch,), 0, num_items + 1, jnp.int32)
    ref = neumf_reference(user_indices, item_indices, params)

    # --- f32 parameter path: tight correctness check ------------------------
    ip32 = prepare_inference_params(params, jnp.float32)
    out32 = jax.block_until_ready(neumf_forward(user_indices, item_indices, ip32))
    assert out32.shape == (batch, 1), out32.shape
    assert jnp.allclose(out32, ref, atol=1e-4, rtol=1e-4), (out32, ref)

    # --- bf16 parameter path (production config): loose check vs f32 ref ----
    ip16 = prepare_inference_params(params, jnp.bfloat16)
    out16 = jax.block_until_ready(neumf_forward(user_indices, item_indices, ip16))
    assert out16.shape == (batch, 1), out16.shape
    assert jnp.allclose(out16, ref, atol=5e-2), (out16, ref)

    # --- larger batch: exercises padding + multi-tile grid ("parallel") -----
    big_batch = 3000
    u_big = jax.random.randint(k_u2, (big_batch,), 0, num_users + 1, jnp.int32)
    i_big = jax.random.randint(k_i2, (big_batch,), 0, num_items + 1, jnp.int32)
    out_big = jax.block_until_ready(neumf_forward(u_big, i_big, ip16))
    ref_big = neumf_reference(u_big, i_big, params)
    assert out_big.shape == (big_batch, 1), out_big.shape
    assert jnp.allclose(out_big, ref_big, atol=5e-2), "large-batch mismatch"

    print("KERNEL_OK")
</pallas_src>

<mosaic_0001>
module attributes {stable_mosaic.version = 11 : i64} {
  func.func @neumf_kernel(%arg0: i32, %arg1: memref<512x64xf32, #tpu.memory_space<vmem>>, %arg2: memref<512x64xf32, #tpu.memory_space<vmem>>, %arg3: memref<32x64xf32, #tpu.memory_space<vmem>>, %arg4: memref<32x64xf32, #tpu.memory_space<vmem>>, %arg5: memref<1x64xf32, #tpu.memory_space<vmem>>, %arg6: memref<64x32xf32, #tpu.memory_space<vmem>>, %arg7: memref<1x32xf32, #tpu.memory_space<vmem>>, %arg8: memref<32x16xf32, #tpu.memory_space<vmem>>, %arg9: memref<1x16xf32, #tpu.memory_space<vmem>>, %arg10: memref<16x8xf32, #tpu.memory_space<vmem>>, %arg11: memref<1x8xf32, #tpu.memory_space<vmem>>, %arg12: memref<1x8xf32, #tpu.memory_space<vmem>>, %arg13: memref<1x32xf32, #tpu.memory_space<vmem>>, %arg14: memref<1x1xf32, #tpu.memory_space<vmem>>, %arg15: memref<512x1xf32, #tpu.memory_space<vmem>>) attributes {dimension_semantics = [#tpu.dimension_semantics<parallel>], iteration_bounds = array<i64: 1>, scalar_prefetch = 0 : i64, scratch_operands = 0 : i64, tpu.core_type = #tpu.core_type<tc>, window_params = [{transform_indices = @transform_0, window_bounds = array<i64: 512, 64>}, {transform_indices = @transform_1, window_bounds = array<i64: 512, 64>}, {pipeline_mode = #tpu.pipeline_mode<synchronous>, transform_indices = @transform_2, window_bounds = array<i64: 32, 64>}, {pipeline_mode = #tpu.pipeline_mode<synchronous>, transform_indices = @transform_3, window_bounds = array<i64: 32, 64>}, {pipeline_mode = #tpu.pipeline_mode<synchronous>, transform_indices = @transform_4, window_bounds = array<i64: 1, 64>}, {pipeline_mode = #tpu.pipeline_mode<synchronous>, transform_indices = @transform_5, window_bounds = array<i64: 64, 32>}, {pipeline_mode = #tpu.pipeline_mode<synchronous>, transform_indices = @transform_6, window_bounds = array<i64: 1, 32>}, {pipeline_mode = #tpu.pipeline_mode<synchronous>, transform_indices = @transform_7, window_bounds = array<i64: 32, 16>}, {pipeline_mode = #tpu.pipeline_mode<synchronous>, transform_indices = @transform_8, window_bounds = array<i64: 1, 16>}, {pipeline_mode = #tpu.pipeline_mode<synchronous>, transform_indices = @transform_9, window_bounds = array<i64: 16, 8>}, {pipeline_mode = #tpu.pipeline_mode<synchronous>, transform_indices = @transform_10, window_bounds = array<i64: 1, 8>}, {pipeline_mode = #tpu.pipeline_mode<synchronous>, transform_indices = @transform_11, window_bounds = array<i64: 1, 8>}, {pipeline_mode = #tpu.pipeline_mode<synchronous>, transform_indices = @transform_12, window_bounds = array<i64: 1, 32>}, {pipeline_mode = #tpu.pipeline_mode<synchronous>, transform_indices = @transform_13, window_bounds = array<i64: 1, 1>}, {transform_indices = @transform_14, window_bounds = array<i64: 512, 1>}]} {
    %c0 = arith.constant 0 : index
    %c0_0 = arith.constant 0 : index
    %0 = vector.load %arg1[%c0, %c0_0] : memref<512x64xf32, #tpu.memory_space<vmem>>, vector<512x64xf32>
    %c0_1 = arith.constant 0 : index
    %c0_2 = arith.constant 0 : index
    %1 = vector.load %arg2[%c0_1, %c0_2] : memref<512x64xf32, #tpu.memory_space<vmem>>, vector<512x64xf32>
    %2 = vector.extract_strided_slice %0 {offsets = [0, 0], sizes = [512, 32], strides = [1, 1]} : vector<512x64xf32> to vector<512x32xf32>
    %3 = vector.extract_strided_slice %1 {offsets = [0, 0], sizes = [512, 32], strides = [1, 1]} : vector<512x64xf32> to vector<512x32xf32>
    %4 = vector.extract_strided_slice %0 {offsets = [0, 32], sizes = [512, 32], strides = [1, 1]} : vector<512x64xf32> to vector<512x32xf32>
    %5 = vector.extract_strided_slice %1 {offsets = [0, 32], sizes = [512, 32], strides = [1, 1]} : vector<512x64xf32> to vector<512x32xf32>
    %c0_3 = arith.constant 0 : index
    %c0_4 = arith.constant 0 : index
    %6 = vector.load %arg3[%c0_3, %c0_4] : memref<32x64xf32, #tpu.memory_space<vmem>>, vector<32x64xf32>
    %cst = arith.constant dense<0.000000e+00> : vector<512x64xf32>
    %7 = tpu.matmul %2, %6, %cst {dimension_numbers = #tpu.dot_dimension_numbers<[1], [0], [0], [1], [0, 0, 1, 1], [], []>} : vector<512x32xf32>, vector<32x64xf32>, vector<512x64xf32> -> vector<512x64xf32>
    %c0_5 = arith.constant 0 : index
    %c0_6 = arith.constant 0 : index
    %8 = vector.load %arg4[%c0_5, %c0_6] : memref<32x64xf32, #tpu.memory_space<vmem>>, vector<32x64xf32>
    %cst_7 = arith.constant dense<0.000000e+00> : vector<512x64xf32>
    %9 = tpu.matmul %3, %8, %cst_7 {dimension_numbers = #tpu.dot_dimension_numbers<[1], [0], [0], [1], [0, 0, 1, 1], [], []>} : vector<512x32xf32>, vector<32x64xf32>, vector<512x64xf32> -> vector<512x64xf32>
    %10 = arith.addf %7, %9 : vector<512x64xf32>
    %c0_8 = arith.constant 0 : index
    %c0_9 = arith.constant 0 : index
    %11 = vector.load %arg5[%c0_8, %c0_9] : memref<1x64xf32, #tpu.memory_space<vmem>>, vector<1x64xf32>
    %12 = vector.broadcast %11 : vector<1x64xf32> to vector<512x64xf32>
    %13 = arith.addf %10, %12 : vector<512x64xf32>
    %cst_10 = arith.constant 5.000000e-01 : f32
    %14 = vector.broadcast %cst_10 : f32 to vector<512x64xf32>
    %15 = arith.mulf %14, %13 : vector<512x64xf32>
    %cst_11 = arith.constant 0.707106769 : f32
    %16 = vector.broadcast %cst_11 : f32 to vector<512x64xf32>
    %17 = arith.mulf %13, %16 : vector<512x64xf32>
    %18 = math.erf %17 : vector<512x64xf32>
    %cst_12 = arith.constant 1.000000e+00 : f32
    %19 = vector.broadcast %cst_12 : f32 to vector<512x64xf32>
    %20 = arith.addf %19, %18 : vector<512x64xf32>
    %21 = arith.mulf %15, %20 : vector<512x64xf32>
    %c0_13 = arith.constant 0 : index
    %c0_14 = arith.constant 0 : index
    %22 = vector.load %arg6[%c0_13, %c0_14] : memref<64x32xf32, #tpu.memory_space<vmem>>, vector<64x32xf32>
    %cst_15 = arith.constant dense<0.000000e+00> : vector<512x32xf32>
    %23 = tpu.matmul %21, %22, %cst_15 {dimension_numbers = #tpu.dot_dimension_numbers<[1], [0], [0], [1], [0, 0, 1, 1], [], []>} : vector<512x64xf32>, vector<64x32xf32>, vector<512x32xf32> -> vector<512x32xf32>
    %c0_16 = arith.constant 0 : index
    %c0_17 = arith.constant 0 : index
    %24 = vector.load %arg7[%c0_16, %c0_17] : memref<1x32xf32, #tpu.memory_space<vmem>>, vector<1x32xf32>
    %25 = vector.broadcast %24 : vector<1x32xf32> to vector<512x32xf32>
    %26 = arith.addf %23, %25 : vector<512x32xf32>
    %cst_18 = arith.constant 5.000000e-01 : f32
    %27 = vector.broadcast %cst_18 : f32 to vector<512x32xf32>
    %28 = arith.mulf %27, %26 : vector<512x32xf32>
    %cst_19 = arith.constant 0.707106769 : f32
    %29 = vector.broadcast %cst_19 : f32 to vector<512x32xf32>
    %30 = arith.mulf %26, %29 : vector<512x32xf32>
    %31 = math.erf %30 : vector<512x32xf32>
    %cst_20 = arith.constant 1.000000e+00 : f32
    %32 = vector.broadcast %cst_20 : f32 to vector<512x32xf32>
    %33 = arith.addf %32, %31 : vector<512x32xf32>
    %34 = arith.mulf %28, %33 : vector<512x32xf32>
    %c0_21 = arith.constant 0 : index
    %c0_22 = arith.constant 0 : index
    %35 = vector.load %arg8[%c0_21, %c0_22] : memref<32x16xf32, #tpu.memory_space<vmem>>, vector<32x16xf32>
    %cst_23 = arith.constant dense<0.000000e+00> : vector<512x16xf32>
    %36 = tpu.matmul %34, %35, %cst_23 {dimension_numbers = #tpu.dot_dimension_numbers<[1], [0], [0], [1], [0, 0, 1, 1], [], []>} : vector<512x32xf32>, vector<32x16xf32>, vector<512x16xf32> -> vector<512x16xf32>
    %c0_24 = arith.constant 0 : index
    %c0_25 = arith.constant 0 : index
    %37 = vector.load %arg9[%c0_24, %c0_25] : memref<1x16xf32, #tpu.memory_space<vmem>>, vector<1x16xf32>
    %38 = vector.broadcast %37 : vector<1x16xf32> to vector<512x16xf32>
    %39 = arith.addf %36, %38 : vector<512x16xf32>
    %cst_26 = arith.constant 5.000000e-01 : f32
    %40 = vector.broadcast %cst_26 : f32 to vector<512x16xf32>
    %41 = arith.mulf %40, %39 : vector<512x16xf32>
    %cst_27 = arith.constant 0.707106769 : f32
    %42 = vector.broadcast %cst_27 : f32 to vector<512x16xf32>
    %43 = arith.mulf %39, %42 : vector<512x16xf32>
    %44 = math.erf %43 : vector<512x16xf32>
    %cst_28 = arith.constant 1.000000e+00 : f32
    %45 = vector.broadcast %cst_28 : f32 to vector<512x16xf32>
    %46 = arith.addf %45, %44 : vector<512x16xf32>
    %47 = arith.mulf %41, %46 : vector<512x16xf32>
    %c0_29 = arith.constant 0 : index
    %c0_30 = arith.constant 0 : index
    %48 = vector.load %arg10[%c0_29, %c0_30] : memref<16x8xf32, #tpu.memory_space<vmem>>, vector<16x8xf32>
    %cst_31 = arith.constant dense<0.000000e+00> : vector<512x8xf32>
    %49 = tpu.matmul %47, %48, %cst_31 {dimension_numbers = #tpu.dot_dimension_numbers<[1], [0], [0], [1], [0, 0, 1, 1], [], []>} : vector<512x16xf32>, vector<16x8xf32>, vector<512x8xf32> -> vector<512x8xf32>
    %c0_32 = arith.constant 0 : index
    %c0_33 = arith.constant 0 : index
    %50 = vector.load %arg11[%c0_32, %c0_33] : memref<1x8xf32, #tpu.memory_space<vmem>>, vector<1x8xf32>
    %51 = vector.broadcast %50 : vector<1x8xf32> to vector<512x8xf32>
    %52 = arith.addf %49, %51 : vector<512x8xf32>
    %cst_34 = arith.constant 5.000000e-01 : f32
    %53 = vector.broadcast %cst_34 : f32 to vector<512x8xf32>
    %54 = arith.mulf %53, %52 : vector<512x8xf32>
    %cst_35 = arith.constant 0.707106769 : f32
    %55 = vector.broadcast %cst_35 : f32 to vector<512x8xf32>
    %56 = arith.mulf %52, %55 : vector<512x8xf32>
    %57 = math.erf %56 : vector<512x8xf32>
    %cst_36 = arith.constant 1.000000e+00 : f32
    %58 = vector.broadcast %cst_36 : f32 to vector<512x8xf32>
    %59 = arith.addf %58, %57 : vector<512x8xf32>
    %60 = arith.mulf %54, %59 : vector<512x8xf32>
    %61 = arith.mulf %4, %5 : vector<512x32xf32>
    %c0_37 = arith.constant 0 : index
    %c0_38 = arith.constant 0 : index
    %62 = vector.load %arg12[%c0_37, %c0_38] : memref<1x8xf32, #tpu.memory_space<vmem>>, vector<1x8xf32>
    %63 = vector.broadcast %62 : vector<1x8xf32> to vector<512x8xf32>
    %64 = arith.mulf %60, %63 : vector<512x8xf32>
    %cst_39 = arith.constant dense<0.000000e+00> : vector<512xf32>
    %65 = vector.multi_reduction <add>, %64, %cst_39 [1] : vector<512x8xf32> to vector<512xf32>
    %66 = vector.shape_cast %65 : vector<512xf32> to vector<512x1xf32>
    %c0_40 = arith.constant 0 : index
    %c0_41 = arith.constant 0 : index
    %67 = vector.load %arg13[%c0_40, %c0_41] : memref<1x32xf32, #tpu.memory_space<vmem>>, vector<1x32xf32>
    %68 = vector.broadcast %67 : vector<1x32xf32> to vector<512x32xf32>
    %69 = arith.mulf %61, %68 : vector<512x32xf32>
    %cst_42 = arith.constant dense<0.000000e+00> : vector<512xf32>
    %70 = vector.multi_reduction <add>, %69, %cst_42 [1] : vector<512x32xf32> to vector<512xf32>
    %71 = vector.shape_cast %70 : vector<512xf32> to vector<512x1xf32>
    %72 = arith.addf %66, %71 : vector<512x1xf32>
    %c0_43 = arith.constant 0 : index
    %c0_44 = arith.constant 0 : index
    %73 = vector.load %arg14[%c0_43, %c0_44] : memref<1x1xf32, #tpu.memory_space<vmem>>, vector<1x1xf32>
    %74 = vector.broadcast %73 : vector<1x1xf32> to vector<512x1xf32>
    %75 = arith.addf %72, %74 : vector<512x1xf32>
    %76 = arith.negf %75 : vector<512x1xf32>
    %77 = math.exp %76 : vector<512x1xf32>
    %cst_45 = arith.constant 1.000000e+00 : f32
    %78 = vector.broadcast %cst_45 : f32 to vector<512x1xf32>
    %79 = arith.addf %78, %77 : vector<512x1xf32>
    %80 = arith.divf %78, %79 : vector<512x1xf32>
    %c0_46 = arith.constant 0 : index
    %c0_47 = arith.constant 0 : index
    %81 = vector.load %arg15[%c0_46, %c0_47] : memref<512x1xf32, #tpu.memory_space<vmem>>, vector<512x1xf32>
    tpu.vector_store %arg15[%c0_46, %c0_47], %80 {strides = array<i32>} : memref<512x1xf32, #tpu.memory_space<vmem>>, vector<512x1xf32>,
    return
  }
  func.func @transform_0(%arg0: i32) -> (i32, i32) {
    %c0_i32 = arith.constant 0 : i32
    %c0_i32_0 = arith.constant 0 : i32
    return %arg0, %c0_i32 : i32, i32
  }
  func.func @transform_1(%arg0: i32) -> (i32, i32) {
    %c0_i32 = arith.constant 0 : i32
    %c0_i32_0 = arith.constant 0 : i32
    return %arg0, %c0_i32 : i32, i32
  }
  func.func @transform_2(%arg0: i32) -> (i32, i32) {
    %c0_i32 = arith.constant 0 : i32
    %c0_i32_0 = arith.constant 0 : i32
    %c0_i32_1 = arith.constant 0 : i32
    return %c0_i32, %c0_i32_0 : i32, i32
  }
  func.func @transform_3(%arg0: i32) -> (i32, i32) {
    %c0_i32 = arith.constant 0 : i32
    %c0_i32_0 = arith.constant 0 : i32
    %c0_i32_1 = arith.constant 0 : i32
    return %c0_i32, %c0_i32_0 : i32, i32
  }
  func.func @transform_4(%arg0: i32) -> (i32, i32) {
    %c0_i32 = arith.constant 0 : i32
    %c0_i32_0 = arith.constant 0 : i32
    %c0_i32_1 = arith.constant 0 : i32
    return %c0_i32, %c0_i32_0 : i32, i32
  }
  func.func @transform_5(%arg0: i32) -> (i32, i32) {
    %c0_i32 = arith.constant 0 : i32
    %c0_i32_0 = arith.constant 0 : i32
    %c0_i32_1 = arith.constant 0 : i32
    return %c0_i32, %c0_i32_0 : i32, i32
  }
  func.func @transform_6(%arg0: i32) -> (i32, i32) {
    %c0_i32 = arith.constant 0 : i32
    %c0_i32_0 = arith.constant 0 : i32
    %c0_i32_1 = arith.constant 0 : i32
    return %c0_i32, %c0_i32_0 : i32, i32
  }
  func.func @transform_7(%arg0: i32) -> (i32, i32) {
    %c0_i32 = arith.constant 0 : i32
    %c0_i32_0 = arith.constant 0 : i32
    %c0_i32_1 = arith.constant 0 : i32
    return %c0_i32, %c0_i32_0 : i32, i32
  }
  func.func @transform_8(%arg0: i32) -> (i32, i32) {
    %c0_i32 = arith.constant 0 : i32
    %c0_i32_0 = arith.constant 0 : i32
    %c0_i32_1 = arith.constant 0 : i32
    return %c0_i32, %c0_i32_0 : i32, i32
  }
  func.func @transform_9(%arg0: i32) -> (i32, i32) {
    %c0_i32 = arith.constant 0 : i32
    %c0_i32_0 = arith.constant 0 : i32
    %c0_i32_1 = arith.constant 0 : i32
    return %c0_i32, %c0_i32_0 : i32, i32
  }
  func.func @transform_10(%arg0: i32) -> (i32, i32) {
    %c0_i32 = arith.constant 0 : i32
    %c0_i32_0 = arith.constant 0 : i32
    %c0_i32_1 = arith.constant 0 : i32
    return %c0_i32, %c0_i32_0 : i32, i32
  }
  func.func @transform_11(%arg0: i32) -> (i32, i32) {
    %c0_i32 = arith.constant 0 : i32
    %c0_i32_0 = arith.constant 0 : i32
    %c0_i32_1 = arith.constant 0 : i32
    return %c0_i32, %c0_i32_0 : i32, i32
  }
  func.func @transform_12(%arg0: i32) -> (i32, i32) {
    %c0_i32 = arith.constant 0 : i32
    %c0_i32_0 = arith.constant 0 : i32
    %c0_i32_1 = arith.constant 0 : i32
    return %c0_i32, %c0_i32_0 : i32, i32
  }
  func.func @transform_13(%arg0: i32) -> (i32, i32) {
    %c0_i32 = arith.constant 0 : i32
    %c0_i32_0 = arith.constant 0 : i32
    %c0_i32_1 = arith.constant 0 : i32
    return %c0_i32, %c0_i32_0 : i32, i32
  }
  func.func @transform_14(%arg0: i32) -> (i32, i32) {
    %c0_i32 = arith.constant 0 : i32
    %c0_i32_0 = arith.constant 0 : i32
    return %arg0, %c0_i32 : i32, i32
  }
}

</mosaic_0001>

<llo_original>
// kernel: neumf_forward.1
$region0: #{neumf_forward.1}
  #allocation0 [shape = 'u32[]', space=smem, size = 0x4, offset = 0x4, fixed_abs, tag = 'smem constant byte address 0x4 - core index']
  #allocation1 [shape = 'u32[144,128]{1,0:T(1,128)}', space=vmem, size = 0x12000, scoped, tag = 'internal scratch']
  #allocation2 [shape = 'f32[1,1]{1,0:T(1,128)S(1)}', space=vmem, size = 0x200, scoped, tag = 'scoped memory for neumf_forward.1']
  %s0 = inlined_call_operand.vmem [shape: f32[512,64], index: 0, kind: input, shape index: {}]
  %s1 = inlined_call_operand.vmem [shape: f32[512,64], index: 1, kind: input, shape index: {}]
  %s2 = inlined_call_operand.vmem [shape: f32[32,64], index: 2, kind: input, shape index: {}]
  %s3 = inlined_call_operand.vmem [shape: f32[32,64], index: 3, kind: input, shape index: {}]
  %s4 = inlined_call_operand.vmem [shape: f32[1,64], index: 4, kind: input, shape index: {}]
  %s5 = inlined_call_operand.vmem [shape: f32[64,32], index: 5, kind: input, shape index: {}]
  %s6 = inlined_call_operand.vmem [shape: f32[1,32], index: 6, kind: input, shape index: {}]
  %s7 = inlined_call_operand.vmem [shape: f32[32,16], index: 7, kind: input, shape index: {}]
  %s8 = inlined_call_operand.vmem [shape: f32[1,16], index: 8, kind: input, shape index: {}]
  %s9 = inlined_call_operand.vmem [shape: f32[16,8], index: 9, kind: input, shape index: {}]
  %s10 = inlined_call_operand.vmem [shape: f32[1,8], index: 10, kind: input, shape index: {}]
  %s11 = inlined_call_operand.vmem [shape: f32[1,8], index: 11, kind: input, shape index: {}]
  %s12 = inlined_call_operand.vmem [shape: f32[1,32], index: 12, kind: input, shape index: {}]
  %s13 = inlined_call_operand.<no memory space> [shape: f32[1,1], index: 13, kind: input, shape index: {}]
  %s14 = inlined_call_operand.vmem [shape: f32[512,1], index: 14, kind: output, shape index: {}]
  %s15 = sld [smem:[#allocation0]]
  $region66: #{neumf_forward.1} parent=0
    _
  %s17 = ssub.s32 1, %s15
  %s18 = scalar_select 0, %s17, %s15
  %v19 = vstv %s13
  %20 = vst [vmem:[#allocation2] sm:$0x1] %v19
  // Predicated region
  $region2: #{neumf_forward.1} parent=0 // pred_check
    _
  $region3: #{neumf_forward.1} parent=0 // pred_check_branch
    %22 = sbr.rel (0) target = $region5
  $region4: #{neumf_forward.1} parent=0 // pred_region
    _
  $region5: #{neumf_forward.1} parent=0 // pred_fallthru
    _
  // Predicated region
  $region6: #{neumf_forward.1} parent=0 // pred_check
    _
  $region7: #{neumf_forward.1} parent=0 // pred_check_branch
    %24 = sbr.rel (0) target = $region9
  $region8: #{neumf_forward.1} parent=0 // pred_region
    _
  $region9: #{neumf_forward.1} parent=0 // pred_fallthru
    _
  // Predicated region
  $region10: #{neumf_forward.1} parent=0 // pred_check
    _
  $region11: #{neumf_forward.1} parent=0 // pred_check_branch
    %26 = sbr.rel (0) target = $region13
  $region12: #{neumf_forward.1} parent=0 // pred_region
    _
  $region13: #{neumf_forward.1} parent=0 // pred_fallthru
    _
  // Predicated region
  $region14: #{neumf_forward.1} parent=0 // pred_check
    _
  $region15: #{neumf_forward.1} parent=0 // pred_check_branch
    %28 = sbr.rel (0) target = $region17
  $region16: #{neumf_forward.1} parent=0 // pred_region
    _
  $region17: #{neumf_forward.1} parent=0 // pred_fallthru
    _
  // Predicated region
  $region18: #{neumf_forward.1} parent=0 // pred_check
    _
  $region19: #{neumf_forward.1} parent=0 // pred_check_branch
    %30 = sbr.rel (0) target = $region21
  $region20: #{neumf_forward.1} parent=0 // pred_region
    _
  $region21: #{neumf_forward.1} parent=0 // pred_fallthru
    _
  // Predicated region
  $region22: #{neumf_forward.1} parent=0 // pred_check
    _
  $region23: #{neumf_forward.1} parent=0 // pred_check_branch
    %32 = sbr.rel (0) target = $region25
  $region24: #{neumf_forward.1} parent=0 // pred_region
    _
  $region25: #{neumf_forward.1} parent=0 // pred_fallthru
    _
  // Predicated region
  $region26: #{neumf_forward.1} parent=0 // pred_check
    _
  $region27: #{neumf_forward.1} parent=0 // pred_check_branch
    %34 = sbr.rel (0) target = $region29
  $region28: #{neumf_forward.1} parent=0 // pred_region
    _
  $region29: #{neumf_forward.1} parent=0 // pred_fallthru
    _
  // Predicated region
  $region30: #{neumf_forward.1} parent=0 // pred_check
    _
  $region31: #{neumf_forward.1} parent=0 // pred_check_branch
    %36 = sbr.rel (0) target = $region33
  $region32: #{neumf_forward.1} parent=0 // pred_region
    _
  $region33: #{neumf_forward.1} parent=0 // pred_fallthru
    _
  // Predicated region
  $region34: #{neumf_forward.1} parent=0 // pred_check
    _
  $region35: #{neumf_forward.1} parent=0 // pred_check_branch
    %38 = sbr.rel (0) target = $region37
  $region36: #{neumf_forward.1} parent=0 // pred_region
    _
  $region37: #{neumf_forward.1} parent=0 // pred_fallthru
    _
  // Predicated region
  $region38: #{neumf_forward.1} parent=0 // pred_check
    _
  $region39: #{neumf_forward.1} parent=0 // pred_check_branch
    %40 = sbr.rel (0) target = $region41
  $region40: #{neumf_forward.1} parent=0 // pred_region
    _
  $region41: #{neumf_forward.1} parent=0 // pred_fallthru
    _
  // Predicated region
  $region42: #{neumf_forward.1} parent=0 // pred_check
    _
  $region43: #{neumf_forward.1} parent=0 // pred_check_branch
    %42 = sbr.rel (0) target = $region45
  $region44: #{neumf_forward.1} parent=0 // pred_region
    _
  $region45: #{neumf_forward.1} parent=0 // pred_fallthru
    _
  // Predicated region
  $region46: #{neumf_forward.1} parent=0 // pred_check
    _
  $region47: #{neumf_forward.1} parent=0 // pred_check_branch
    %44 = sbr.rel (0) target = $region49
  $region48: #{neumf_forward.1} parent=0 // pred_region
    _
  $region49: #{neumf_forward.1} parent=0 // pred_fallthru
    _
  // Predicated region
  $region50: #{neumf_forward.1} parent=0 // pred_check
    _
  $region51: #{neumf_forward.1} parent=0 // pred_check_branch
    %46 = sbr.rel (0) target = $region53
  $region52: #{neumf_forward.1} parent=0 // pred_region
    _
  $region53: #{neumf_forward.1} parent=0 // pred_fallthru
    _
  // Predicated region
  $region54: #{neumf_forward.1} parent=0 // pred_check
    _
  $region55: #{neumf_forward.1} parent=0 // pred_check_branch
    %48 = sbr.rel (0) target = $region57
  $region56: #{neumf_forward.1} parent=0 // pred_region
    _
  $region57: #{neumf_forward.1} parent=0 // pred_fallthru
    _
  %v49 = vld [vmem:[%s0] sm:$0xff]
  %v50 = vld [vmem:[%s0 + $0x8] sm:$0xff]
  %v51 = vld [vmem:[%s0 + $0x10] sm:$0xff]
  %v52 = vld [vmem:[%s0 + $0x18] sm:$0xff]
  %v53 = vld [vmem:[%s0 + $0x20] sm:$0xff]
  %v54 = vld [vmem:[%s0 + $0x28] sm:$0xff]
  %v55 = vld [vmem:[%s0 + $0x30] sm:$0xff]
  %v56 = vld [vmem:[%s0 + $0x38] sm:$0xff]
  %v57 = vld [vmem:[%s0 + $0x40] sm:$0xff]
  %v58 = vld [vmem:[%s0 + $0x48] sm:$0xff]
  %v59 = vld [vmem:[%s0 + $0x50] sm:$0xff]
  %v60 = vld [vmem:[%s0 + $0x58] sm:$0xff]
  %v61 = vld [vmem:[%s0 + $0x60] sm:$0xff]
  %v62 = vld [vmem:[%s0 + $0x68] sm:$0xff]
  %v63 = vld [vmem:[%s0 + $0x70] sm:$0xff]
  %v64 = vld [vmem:[%s0 + $0x78] sm:$0xff]
  %v65 = vld [vmem:[%s0 + $0x80] sm:$0xff]
  %v66 = vld [vmem:[%s0 + $0x88] sm:$0xff]
  %v67 = vld [vmem:[%s0 + $0x90] sm:$0xff]
  %v68 = vld [vmem:[%s0 + $0x98] sm:$0xff]
  %v69 = vld [vmem:[%s0 + $0xa0] sm:$0xff]
  %v70 = vld [vmem:[%s0 + $0xa8] sm:$0xff]
  %v71 = vld [vmem:[%s0 + $0xb0] sm:$0xff]
  %v72 = vld [vmem:[%s0 + $0xb8] sm:$0xff]
  %v73 = vld [vmem:[%s0 + $0xc0] sm:$0xff]
  %v74 = vld [vmem:[%s0 + $0xc8] sm:$0xff]
  %v75 = vld [vmem:[%s0 + $0xd0] sm:$0xff]
  %v76 = vld [vmem:[%s0 + $0xd8] sm:$0xff]
  %v77 = vld [vmem:[%s0 + $0xe0] sm:$0xff]
  %v78 = vld [vmem:[%s0 + $0xe8] sm:$0xff]
  %v79 = vld [vmem:[%s0 + $0xf0] sm:$0xff]
  %v80 = vld [vmem:[%s0 + $0xf8] sm:$0xff]
  %v81 = vld [vmem:[%s0 + $0x100] sm:$0xff]
  %v82 = vld [vmem:[%s0 + $0x108] sm:$0xff]
  %v83 = vld [vmem:[%s0 + $0x110] sm:$0xff]
  %v84 = vld [vmem:[%s0 + $0x118] sm:$0xff]
  %v85 = vld [vmem:[%s0 + $0x120] sm:$0xff]
  %v86 = vld [vmem:[%s0 + $0x128] sm:$0xff]
  %v87 = vld [vmem:[%s0 + $0x130] sm:$0xff]
  %v88 = vld [vmem:[%s0 + $0x138] sm:$0xff]
  %v89 = vld [vmem:[%s0 + $0x140] sm:$0xff]
  %v90 = vld [vmem:[%s0 + $0x148] sm:$0xff]
  %v91 = vld [vmem:[%s0 + $0x150] sm:$0xff]
  %v92 = vld [vmem:[%s0 + $0x158] sm:$0xff]
  %v93 = vld [vmem:[%s0 + $0x160] sm:$0xff]
  %v94 = vld [vmem:[%s0 + $0x168] sm:$0xff]
  %v95 = vld [vmem:[%s0 + $0x170] sm:$0xff]
  %v96 = vld [vmem:[%s0 + $0x178] sm:$0xff]
  %v97 = vld [vmem:[%s0 + $0x180] sm:$0xff]
  %v98 = vld [vmem:[%s0 + $0x188] sm:$0xff]
  %v99 = vld [vmem:[%s0 + $0x190] sm:$0xff]
  %v100 = vld [vmem:[%s0 + $0x198] sm:$0xff]
  %v101 = vld [vmem:[%s0 + $0x1a0] sm:$0xff]
  %v102 = vld [vmem:[%s0 + $0x1a8] sm:$0xff]
  %v103 = vld [vmem:[%s0 + $0x1b0] sm:$0xff]
  %v104 = vld [vmem:[%s0 + $0x1b8] sm:$0xff]
  %v105 = vld [vmem:[%s0 + $0x1c0] sm:$0xff]
  %v106 = vld [vmem:[%s0 + $0x1c8] sm:$0xff]
  %v107 = vld [vmem:[%s0 + $0x1d0] sm:$0xff]
  %v108 = vld [vmem:[%s0 + $0x1d8] sm:$0xff]
  %v109 = vld [vmem:[%s0 + $0x1e0] sm:$0xff]
  %v110 = vld [vmem:[%s0 + $0x1e8] sm:$0xff]
  %v111 = vld [vmem:[%s0 + $0x1f0] sm:$0xff]
  %v112 = vld [vmem:[%s0 + $0x1f8] sm:$0xff]
  %v113 = vld [vmem:[%s1] sm:$0xff]
  %v114 = vld [vmem:[%s1 + $0x8] sm:$0xff]
  %v115 = vld [vmem:[%s1 + $0x10] sm:$0xff]
  %v116 = vld [vmem:[%s1 + $0x18] sm:$0xff]
  %v117 = vld [vmem:[%s1 + $0x20] sm:$0xff]
  %v118 = vld [vmem:[%s1 + $0x28] sm:$0xff]
  %v119 = vld [vmem:[%s1 + $0x30] sm:$0xff]
  %v120 = vld [vmem:[%s1 + $0x38] sm:$0xff]
  %v121 = vld [vmem:[%s1 + $0x40] sm:$0xff]
  %v122 = vld [vmem:[%s1 + $0x48] sm:$0xff]
  %v123 = vld [vmem:[%s1 + $0x50] sm:$0xff]
  %v124 = vld [vmem:[%s1 + $0x58] sm:$0xff]
  %v125 = vld [vmem:[%s1 + $0x60] sm:$0xff]
  %v126 = vld [vmem:[%s1 + $0x68] sm:$0xff]
  %v127 = vld [vmem:[%s1 + $0x70] sm:$0xff]
  %v128 = vld [vmem:[%s1 + $0x78] sm:$0xff]
  %v129 = vld [vmem:[%s1 + $0x80] sm:$0xff]
  %v130 = vld [vmem:[%s1 + $0x88] sm:$0xff]
  %v131 = vld [vmem:[%s1 + $0x90] sm:$0xff]
  %v132 = vld [vmem:[%s1 + $0x98] sm:$0xff]
  %v133 = vld [vmem:[%s1 + $0xa0] sm:$0xff]
  %v134 = vld [vmem:[%s1 + $0xa8] sm:$0xff]
  %v135 = vld [vmem:[%s1 + $0xb0] sm:$0xff]
  %v136 = vld [vmem:[%s1 + $0xb8] sm:$0xff]
  %v137 = vld [vmem:[%s1 + $0xc0] sm:$0xff]
  %v138 = vld [vmem:[%s1 + $0xc8] sm:$0xff]
  %v139 = vld [vmem:[%s1 + $0xd0] sm:$0xff]
  %v140 = vld [vmem:[%s1 + $0xd8] sm:$0xff]
  %v141 = vld [vmem:[%s1 + $0xe0] sm:$0xff]
  %v142 = vld [vmem:[%s1 + $0xe8] sm:$0xff]
  %v143 = vld [vmem:[%s1 + $0xf0] sm:$0xff]
  %v144 = vld [vmem:[%s1 + $0xf8] sm:$0xff]
  %v145 = vld [vmem:[%s1 + $0x100] sm:$0xff]
  %v146 = vld [vmem:[%s1 + $0x108] sm:$0xff]
  %v147 = vld [vmem:[%s1 + $0x110] sm:$0xff]
  %v148 = vld [vmem:[%s1 + $0x118] sm:$0xff]
  %v149 = vld [vmem:[%s1 + $0x120] sm:$0xff]
  %v150 = vld [vmem:[%s1 + $0x128] sm:$0xff]
  %v151 = vld [vmem:[%s1 + $0x130] sm:$0xff]
  %v152 = vld [vmem:[%s1 + $0x138] sm:$0xff]
  %v153 = vld [vmem:[%s1 + $0x140] sm:$0xff]
  %v154 = vld [vmem:[%s1 + $0x148] sm:$0xff]
  %v155 = vld [vmem:[%s1 + $0x150] sm:$0xff]
  %v156 = vld [vmem:[%s1 + $0x158] sm:$0xff]
  %v157 = vld [vmem:[%s1 + $0x160] sm:$0xff]
  %v158 = vld [vmem:[%s1 + $0x168] sm:$0xff]
  %v159 = vld [vmem:[%s1 + $0x170] sm:$0xff]
  %v160 = vld [vmem:[%s1 + $0x178] sm:$0xff]
  %v161 = vld [vmem:[%s1 + $0x180] sm:$0xff]
  %v162 = vld [vmem:[%s1 + $0x188] sm:$0xff]
  %v163 = vld [vmem:[%s1 + $0x190] sm:$0xff]
  %v164 = vld [vmem:[%s1 + $0x198] sm:$0xff]
  %v165 = vld [vmem:[%s1 + $0x1a0] sm:$0xff]
  %v166 = vld [vmem:[%s1 + $0x1a8] sm:$0xff]
  %v167 = vld [vmem:[%s1 + $0x1b0] sm:$0xff]
  %v168 = vld [vmem:[%s1 + $0x1b8] sm:$0xff]
  %v169 = vld [vmem:[%s1 + $0x1c0] sm:$0xff]
  %v170 = vld [vmem:[%s1 + $0x1c8] sm:$0xff]
  %v171 = vld [vmem:[%s1 + $0x1d0] sm:$0xff]
  %v172 = vld [vmem:[%s1 + $0x1d8] sm:$0xff]
  %v173 = vld [vmem:[%s1 + $0x1e0] sm:$0xff]
  %v174 = vld [vmem:[%s1 + $0x1e8] sm:$0xff]
  %v175 = vld [vmem:[%s1 + $0x1f0] sm:$0xff]
  %v176 = vld [vmem:[%s1 + $0x1f8] sm:$0xff]
  %v177 = vld [vmem:[%s2] sm:$0xff]
  %v178 = vld [vmem:[%s2 + $0x8] sm:$0xff]
  %v179 = vld [vmem:[%s2 + $0x10] sm:$0xff]
  %v180 = vld [vmem:[%s2 + $0x18] sm:$0xff]
  %v181 = vld [vmem:[%s3] sm:$0xff]
  %v182 = vld [vmem:[%s3 + $0x8] sm:$0xff]
  %v183 = vld [vmem:[%s3 + $0x10] sm:$0xff]
  %v184 = vld [vmem:[%s3 + $0x18] sm:$0xff]
  %vm185 = vcmask 261120
  %v187 = vsel %vm185, %v113, 0
  %v190 = vsel %vm185, %v114, 0
  %v193 = vsel %vm185, %v115, 0
  %v196 = vsel %vm185, %v116, 0
  %v199 = vsel %vm185, %v117, 0
  %v202 = vsel %vm185, %v118, 0
  %v205 = vsel %vm185, %v119, 0
  %v208 = vsel %vm185, %v120, 0
  %v211 = vsel %vm185, %v121, 0
  %v214 = vsel %vm185, %v122, 0
  %v217 = vsel %vm185, %v123, 0
  %v220 = vsel %vm185, %v124, 0
  %v223 = vsel %vm185, %v125, 0
  %v226 = vsel %vm185, %v126, 0
  %v229 = vsel %vm185, %v127, 0
  %v232 = vsel %vm185, %v128, 0
  %v235 = vsel %vm185, %v129, 0
  %v238 = vsel %vm185, %v130, 0
  %v241 = vsel %vm185, %v131, 0
  %v244 = vsel %vm185, %v132, 0
  %v247 = vsel %vm185, %v133, 0
  %v250 = vsel %vm185, %v134, 0
  %v253 = vsel %vm185, %v135, 0
  %v256 = vsel %vm185, %v136, 0
  %v259 = vsel %vm185, %v137, 0
  %v262 = vsel %vm185, %v138, 0
  %v265 = vsel %vm185, %v139, 0
  %v268 = vsel %vm185, %v140, 0
  %v271 = vsel %vm185, %v141, 0
  %v274 = vsel %vm185, %v142, 0
  %v277 = vsel %vm185, %v143, 0
  %v280 = vsel %vm185, %v144, 0
  %v283 = vsel %vm185, %v145, 0
  %v286 = vsel %vm185, %v146, 0
  %v289 = vsel %vm185, %v147, 0
  %v292 = vsel %vm185, %v148, 0
  %v295 = vsel %vm185, %v149, 0
  %v298 = vsel %vm185, %v150, 0
  %v301 = vsel %vm185, %v151, 0
  %v304 = vsel %vm185, %v152, 0
  %v307 = vsel %vm185, %v153, 0
  %v310 = vsel %vm185, %v154, 0
  %v313 = vsel %vm185, %v155, 0
  %v316 = vsel %vm185, %v156, 0
  %v319 = vsel %vm185, %v157, 0
  %v322 = vsel %vm185, %v158, 0
  %v325 = vsel %vm185, %v159, 0
  %v328 = vsel %vm185, %v160, 0
  %v331 = vsel %vm185, %v161, 0
  %v334 = vsel %vm185, %v162, 0
  %v337 = vsel %vm185, %v163, 0
  %v340 = vsel %vm185, %v164, 0
  %v343 = vsel %vm185, %v165, 0
  %v346 = vsel %vm185, %v166, 0
  %v349 = vsel %vm185, %v167, 0
  %v352 = vsel %vm185, %v168, 0
  %v355 = vsel %vm185, %v169, 0
  %v358 = vsel %vm185, %v170, 0
  %v361 = vsel %vm185, %v171, 0
  %v364 = vsel %vm185, %v172, 0
  %v367 = vsel %vm185, %v173, 0
  %v370 = vsel %vm185, %v174, 0
  %v373 = vsel %vm185, %v175, 0
  %v376 = vsel %vm185, %v176, 0
  %378 = vmatprep.subr.mxu0 0.0
  %379 = vmatpush1.msra.mxu0 %v181
  %380 = vmatprep.subr.mxu0 0.0
  %381 = vmatpush1.msra.mxu0 %v182
  %382 = vmatprep.subr.mxu0 0.0
  %383 = vmatpush1.msra.mxu0 %v183
  %384 = vmatprep.subr.mxu0 0.0
  %385 = vmatpush1.msra.mxu0 %v184
  %386 = vmatprep.subr.mxu0 0.0
  %387 = vmatpush1.msra.mxu0 0.0
  %388 = vmatprep.subr.mxu0 0.0
  %389 = vmatpush1.msra.mxu0 0.0
  %390 = vmatprep.subr.mxu0 0.0
  %391 = vmatpush1.msra.mxu0 0.0
  %392 = vmatprep.subr.mxu0 0.0
  %393 = vmatpush1.msra.mxu0 0.0
  %394 = vmatprep.subr.mxu0 0.0
  %395 = vmatpush1.msra.mxu0 0.0
  %396 = vmatprep.subr.mxu0 0.0
  %397 = vmatpush1.msra.mxu0 0.0
  %398 = vmatprep.subr.mxu0 0.0
  %399 = vmatpush1.msra.mxu0 0.0
  %400 = vmatprep.subr.mxu0 0.0
  %401 = vmatpush1.msra.mxu0 0.0
  %402 = vmatprep.subr.mxu0 0.0
  %403 = vmatpush1.msra.mxu0 0.0
  %404 = vmatprep.subr.mxu0 0.0
  %405 = vmatpush1.msra.mxu0 0.0
  %406 = vmatprep.subr.mxu0 0.0
  %407 = vmatpush1.msra.mxu0 0.0
  %408 = vmatprep.subr.mxu0 0.0
  %409 = vmatpush1.msra.mxu0 0.0
  %410 = vmatprep.subr.mxu0 0.0
  %411 = vmatpush1.msra.mxu0 0.0
  %412 = vmatprep.subr.mxu0 0.0
  %413 = vmatpush1.msra.mxu0 0.0
  %414 = vmatprep.subr.mxu0 0.0
  %415 = vmatpush1.msra.mxu0 0.0
  %416 = vmatprep.subr.mxu0 0.0
  %417 = vmatpush1.msra.mxu0 0.0
  %418 = vmatprep.subr.mxu0 0.0
  %419 = vmatpush1.msra.mxu0 0.0
  %420 = vmatprep.subr.mxu0 0.0
  %421 = vmatpush1.msra.mxu0 0.0
  %422 = vmatprep.subr.mxu0 0.0
  %423 = vmatpush1.msra.mxu0 0.0
  %424 = vmatprep.subr.mxu0 0.0
  %425 = vmatpush1.msra.mxu0 0.0
  %426 = vmatprep.subr.mxu0 0.0
  %427 = vmatpush1.msra.mxu0 0.0
  %428 = vmatprep.subr.mxu0 0.0
  %429 = vmatpush1.msra.mxu0 0.0
  %430 = vmatprep.subr.mxu0 0.0
  %431 = vmatpush1.msra.mxu0 0.0
  %432 = vmatprep.subr.mxu0 0.0
  %433 = vmatpush1.msra.mxu0 0.0
  %434 = vmatprep.subr.mxu0 0.0
  %435 = vmatpush1.msra.mxu0 0.0
  %436 = vmatprep.subr.mxu0 0.0
  %437 = vmatpush1.msra.mxu0 0.0
  %438 = vmatprep.subr.mxu0 0.0
  %439 = vmatpush1.msra.mxu0 0.0
  %440 = vmatprep.subr.mxu0 0.0
  %441 = vmatpush1.msra.mxu0 0.0
  %442 = vmatprep.mubr.f32.mxu0 0.0
  %443 = vmatmul.mubr.f32.gmra.mrb[0].mxu0 %v187
  %v444 = vpop.f32.mrb[0].mxu0
  %v445 = vadd.f32 0.0, %v444
  %v446 = vpop.f32.mrb[0].mxu0
  %447 = vmatprep.mubr.f32.mxu0 0.0
  %448 = vmatmul.mubr.f32.gmra.mrb[0].mxu0 %v190
  %v449 = vpop.f32.mrb[0].mxu0
  %v450 = vadd.f32 0.0, %v449
  %v451 = vpop.f32.mrb[0].mxu0
  %452 = vmatprep.mubr.f32.mxu0 0.0
  %453 = vmatmul.mubr.f32.gmra.mrb[0].mxu0 %v193
  %v454 = vpop.f32.mrb[0].mxu0
  %v455 = vadd.f32 0.0, %v454
  %v456 = vpop.f32.mrb[0].mxu0
  %457 = vmatprep.mubr.f32.mxu0 0.0
  %458 = vmatmul.mubr.f32.gmra.mrb[0].mxu0 %v196
  %v459 = vpop.f32.mrb[0].mxu0
  %v460 = vadd.f32 0.0, %v459
  %v461 = vpop.f32.mrb[0].mxu0
  %462 = vmatprep.mubr.f32.mxu0 0.0
  %463 = vmatmul.mubr.f32.gmra.mrb[0].mxu0 %v199
  %v464 = vpop.f32.mrb[0].mxu0
  %v465 = vadd.f32 0.0, %v464
  %v466 = vpop.f32.mrb[0].mxu0
  %467 = vmatprep.mubr.f32.mxu0 0.0
  %468 = vmatmul.mubr.f32.gmra.mrb[0].mxu0 %v202
  %v469 = vpop.f32.mrb[0].mxu0
  %v470 = vadd.f32 0.0, %v469
  %v471 = vpop.f32.mrb[0].mxu0
  %472 = vmatprep.mubr.f32.mxu0 0.0
  %473 = vmatmul.mubr.f32.gmra.mrb[0].mxu0 %v205
  %v474 = vpop.f32.mrb[0].mxu0
  %v475 = vadd.f32 0.0, %v474
  %v476 = vpop.f32.mrb[0].mxu0
  %477 = vmatprep.mubr.f32.mxu0 0.0
  %478 = vmatmul.mubr.f32.gmra.mrb[0].mxu0 %v208
  %v479 = vpop.f32.mrb[0].mxu0
  %v480 = vadd.f32 0.0, %v479
  %v481 = vpop.f32.mrb[0].mxu0
  %482 = vmatprep.mubr.f32.mxu0 0.0
  %483 = vmatmul.mubr.f32.gmra.mrb[0].mxu0 %v211
  %v484 = vpop.f32.mrb[0].mxu0
  %v485 = vadd.f32 0.0, %v484
  %v486 = vpop.f32.mrb[0].mxu0
  %487 = vmatprep.mubr.f32.mxu0 0.0
  %488 = vmatmul.mubr.f32.gmra.mrb[0].mxu0 %v214
  %v489 = vpop.f32.mrb[0].mxu0
  %v490 = vadd.f32 0.0, %v489
  %v491 = vpop.f32.mrb[0].mxu0
  %492 = vmatprep.mubr.f32.mxu0 0.0
  %493 = vmatmul.mubr.f32.gmra.mrb[0].mxu0 %v217
  %v494 = vpop.f32.mrb[0].mxu0
  %v495 = vadd.f32 0.0, %v494
  %v496 = vpop.f32.mrb[0].mxu0
  %497 = vmatprep.mubr.f32.mxu0 0.0
  %498 = vmatmul.mubr.f32.gmra.mrb[0].mxu0 %v220
  %v499 = vpop.f32.mrb[0].mxu0
  %v500 = vadd.f32 0.0, %v499
  %v501 = vpop.f32.mrb[0].mxu0
  %502 = vmatprep.mubr.f32.mxu0 0.0
  %503 = vmatmul.mubr.f32.gmra.mrb[0].mxu0 %v223
  %v504 = vpop.f32.mrb[0].mxu0
  %v505 = vadd.f32 0.0, %v504
  %v506 = vpop.f32.mrb[0].mxu0
  %507 = vmatprep.mubr.f32.mxu0 0.0
  %508 = vmatmul.mubr.f32.gmra.mrb[0].mxu0 %v226
  %v509 = vpop.f32.mrb[0].mxu0
  %v510 = vadd.f32 0.0, %v509
  %v511 = vpop.f32.mrb[0].mxu0
  %512 = vmatprep.mubr.f32.mxu0 0.0
  %513 = vmatmul.mubr.f32.gmra.mrb[0].mxu0 %v229
  %v514 = vpop.f32.mrb[0].mxu0
  %v515 = vadd.f32 0.0, %v514
  %v516 = vpop.f32.mrb[0].mxu0
  %517 = vmatprep.mubr.f32.mxu0 0.0
  %518 = vmatmul.mubr.f32.gmra.mrb[0].mxu0 %v232
  %v519 = vpop.f32.mrb[0].mxu0
  %v520 = vadd.f32 0.0, %v519
  %v521 = vpop.f32.mrb[0].mxu0
  %522 = vmatprep.mubr.f32.mxu0 0.0
  %523 = vmatmul.mubr.f32.gmra.mrb[0].mxu0 %v235
  %v524 = vpop.f32.mrb[0].mxu0
  %v525 = vadd.f32 0.0, %v524
  %v526 = vpop.f32.mrb[0].mxu0
  %527 = vmatprep.mubr.f32.mxu0 0.0
  %528 = vmatmul.mubr.f32.gmra.mrb[0].mxu0 %v238
  %v529 = vpop.f32.mrb[0].mxu0
  %v530 = vadd.f32 0.0, %v529
  %v531 = vpop.f32.mrb[0].mxu0
  %532 = vmatprep.mubr.f32.mxu0 0.0
  %533 = vmatmul.mubr.f32.gmra.mrb[0].mxu0 %v241
  %v534 = vpop.f32.mrb[0].mxu0
  %v535 = vadd.f32 0.0, %v534
  %v536 = vpop.f32.mrb[0].mxu0
  %537 = vmatprep.mubr.f32.mxu0 0.0
  %538 = vmatmul.mubr.f32.gmra.mrb[0].mxu0 %v244
  %v539 = vpop.f32.mrb[0].mxu0
  %v540 = vadd.f32 0.0, %v539
  %v541 = vpop.f32.mrb[0].mxu0
  %542 = vmatprep.mubr.f32.mxu0 0.0
  %543 = vmatmul.mubr.f32.gmra.mrb[0].mxu0 %v247
  %v544 = vpop.f32.mrb[0].mxu0
  %v545 = vadd.f32 0.0, %v544
  %v546 = vpop.f32.mrb[0].mxu0
  %547 = vmatprep.mubr.f32.mxu0 0.0
  %548 = vmatmul.mubr.f32.gmra.mrb[0].mxu0 %v250
  %v549 = vpop.f32.mrb[0].mxu0
  %v550 = vadd.f32 0.0, %v549
  %v551 = vpop.f32.mrb[0].mxu0
  %552 = vmatprep.mubr.f32.mxu0 0.0
  %553 = vmatmul.mubr.f32.gmra.mrb[0].mxu0 %v253
  %v554 = vpop.f32.mrb[0].mxu0
  %v555 = vadd.f32 0.0, %v554
  %v556 = vpop.f32.mrb[0].mxu0
  %557 = vmatprep.mubr.f32.mxu0 0.0
  %558 = vmatmul.mubr.f32.gmra.mrb[0].mxu0 %v256
  %v559 = vpop.f32.mrb[0].mxu0
  %v560 = vadd.f32 0.0, %v559
  %v561 = vpop.f32.mrb[0].mxu0
  %562 = vmatprep.mubr.f32.mxu0 0.0
  %563 = vmatmul.mubr.f32.gmra.mrb[0].mxu0 %v259
  %v564 = vpop.f32.mrb[0].mxu0
  %v565 = vadd.f32 0.0, %v564
  %v566 = vpop.f32.mrb[0].mxu0
  %567 = vmatprep.mubr.f32.mxu0 0.0
  %568 = vmatmul.mubr.f32.gmra.mrb[0].mxu0 %v262
  %v569 = vpop.f32.mrb[0].mxu0
  %v570 = vadd.f32 0.0, %v569
  %v571 = vpop.f32.mrb[0].mxu0
  %572 = vmatprep.mubr.f32.mxu0 0.0
  %573 = vmatmul.mubr.f32.gmra.mrb[0].mxu0 %v265
  %v574 = vpop.f32.mrb[0].mxu0
  %v575 = vadd.f32 0.0, %v574
  %v576 = vpop.f32.mrb[0].mxu0
  %577 = vmatprep.mubr.f32.mxu0 0.0
  %578 = vmatmul.mubr.f32.gmra.mrb[0].mxu0 %v268
  %v579 = vpop.f32.mrb[0].mxu0
  %v580 = vadd.f32 0.0, %v579
  %v581 = vpop.f32.mrb[0].mxu0
  %582 = vmatprep.mubr.f32.mxu0 0.0
  %583 = vmatmul.mubr.f32.gmra.mrb[0].mxu0 %v271
  %v584 = vpop.f32.mrb[0].mxu0
  %v585 = vadd.f32 0.0, %v584
  %v586 = vpop.f32.mrb[0].mxu0
  %587 = vmatprep.mubr.f32.mxu0 0.0
  %588 = vmatmul.mubr.f32.gmra.mrb[0].mxu0 %v274
  %v589 = vpop.f32.mrb[0].mxu0
  %v590 = vadd.f32 0.0, %v589
  %v591 = vpop.f32.mrb[0].mxu0
  %592 = vmatprep.mubr.f32.mxu0 0.0
  %593 = vmatmul.mubr.f32.gmra.mrb[0].mxu0 %v277
  %v594 = vpop.f32.mrb[0].mxu0
  %v595 = vadd.f32 0.0, %v594
  %v596 = vpop.f32.mrb[0].mxu0
  %597 = vmatprep.mubr.f32.mxu0 0.0
  %598 = vmatmul.mubr.f32.gmra.mrb[0].mxu0 %v280
  %v599 = vpop.f32.mrb[0].mxu0
  %v600 = vadd.f32 0.0, %v599
  %v601 = vpop.f32.mrb[0].mxu0
  %602 = vmatprep.mubr.f32.mxu0 0.0
  %603 = vmatmul.mubr.f32.gmra.mrb[0].mxu0 %v283
  %v604 = vpop.f32.mrb[0].mxu0
  %v605 = vadd.f32 0.0, %v604
  %v606 = vpop.f32.mrb[0].mxu0
  %607 = vmatprep.mubr.f32.mxu0 0.0
  %608 = vmatmul.mubr.f32.gmra.mrb[0].mxu0 %v286
  %v609 = vpop.f32.mrb[0].mxu0
  %v610 = vadd.f32 0.0, %v609
  %v611 = vpop.f32.mrb[0].mxu0
  %612 = vmatprep.mubr.f32.mxu0 0.0
  %613 = vmatmul.mubr.f32.gmra.mrb[0].mxu0 %v289
  %v614 = vpop.f32.mrb[0].mxu0
  %v615 = vadd.f32 0.0, %v614
  %v616 = vpop.f32.mrb[0].mxu0
  %617 = vmatprep.mubr.f32.mxu0 0.0
  %618 = vmatmul.mubr.f32.gmra.mrb[0].mxu0 %v292
  %v619 = vpop.f32.mrb[0].mxu0
  %v620 = vadd.f32 0.0, %v619
  %v621 = vpop.f32.mrb[0].mxu0
  %622 = vmatprep.mubr.f32.mxu0 0.0
  %623 = vmatmul.mubr.f32.gmra.mrb[0].mxu0 %v295
  %v624 = vpop.f32.mrb[0].mxu0
  %v625 = vadd.f32 0.0, %v624
  %v626 = vpop.f32.mrb[0].mxu0
  %627 = vmatprep.mubr.f32.mxu0 0.0
  %628 = vmatmul.mubr.f32.gmra.mrb[0].mxu0 %v298
  %v629 = vpop.f32.mrb[0].mxu0
  %v630 = vadd.f32 0.0, %v629
  %v631 = vpop.f32.mrb[0].mxu0
  %632 = vmatprep.mubr.f32.mxu0 0.0
  %633 = vmatmul.mubr.f32.gmra.mrb[0].mxu0 %v301
  %v634 = vpop.f32.mrb[0].mxu0
  %v635 = vadd.f32 0.0, %v634
  %v636 = vpop.f32.mrb[0].mxu0
  %637 = vmatprep.mubr.f32.mxu0 0.0
  %638 = vmatmul.mubr.f32.gmra.mrb[0].mxu0 %v304
  %v639 = vpop.f32.mrb[0].mxu0
  %v640 = vadd.f32 0.0, %v639
  %v641 = vpop.f32.mrb[0].mxu0
  %642 = vmatprep.mubr.f32.mxu0 0.0
  %643 = vmatmul.mubr.f32.gmra.mrb[0].mxu0 %v307
  %v644 = vpop.f32.mrb[0].mxu0
  %v645 = vadd.f32 0.0, %v644
  %v646 = vpop.f32.mrb[0].mxu0
  %647 = vmatprep.mubr.f32.mxu0 0.0
  %648 = vmatmul.mubr.f32.gmra.mrb[0].mxu0 %v310
  %v649 = vpop.f32.mrb[0].mxu0
  %v650 = vadd.f32 0.0, %v649
  %v651 = vpop.f32.mrb[0].mxu0
  %652 = vmatprep.mubr.f32.mxu0 0.0
  %653 = vmatmul.mubr.f32.gmra.mrb[0].mxu0 %v313
  %v654 = vpop.f32.mrb[0].mxu0
  %v655 = vadd.f32 0.0, %v654
  %v656 = vpop.f32.mrb[0].mxu0
  %657 = vmatprep.mubr.f32.mxu0 0.0
  %658 = vmatmul.mubr.f32.gmra.mrb[0].mxu0 %v316
  %v659 = vpop.f32.mrb[0].mxu0
  %v660 = vadd.f32 0.0, %v659
  %v661 = vpop.f32.mrb[0].mxu0
  %662 = vmatprep.mubr.f32.mxu0 0.0
  %663 = vmatmul.mubr.f32.gmra.mrb[0].mxu0 %v319
  %v664 = vpop.f32.mrb[0].mxu0
  %v665 = vadd.f32 0.0, %v664
  %v666 = vpop.f32.mrb[0].mxu0
  %667 = vmatprep.mubr.f32.mxu0 0.0
  %668 = vmatmul.mubr.f32.gmra.mrb[0].mxu0 %v322
  %v669 = vpop.f32.mrb[0].mxu0
  %v670 = vadd.f32 0.0, %v669
  %v671 = vpop.f32.mrb[0].mxu0
  %672 = vmatprep.mubr.f32.mxu0 0.0
  %673 = vmatmul.mubr.f32.gmra.mrb[0].mxu0 %v325
  %v674 = vpop.f32.mrb[0].mxu0
  %v675 = vadd.f32 0.0, %v674
  %v676 = vpop.f32.mrb[0].mxu0
  %677 = vmatprep.mubr.f32.mxu0 0.0
  %678 = vmatmul.mubr.f32.gmra.mrb[0].mxu0 %v328
  %v679 = vpop.f32.mrb[0].mxu0
  %v680 = vadd.f32 0.0, %v679
  %v681 = vpop.f32.mrb[0].mxu0
  %682 = vmatprep.mubr.f32.mxu0 0.0
  %683 = vmatmul.mubr.f32.gmra.mrb[0].mxu0 %v331
  %v684 = vpop.f32.mrb[0].mxu0
  %v685 = vadd.f32 0.0, %v684
  %v686 = vpop.f32.mrb[0].mxu0
  %687 = vmatprep.mubr.f32.mxu0 0.0
  %688 = vmatmul.mubr.f32.gmra.mrb[0].mxu0 %v334
  %v689 = vpop.f32.mrb[0].mxu0
  %v690 = vadd.f32 0.0, %v689
  %v691 = vpop.f32.mrb[0].mxu0
  %692 = vmatprep.mubr.f32.mxu0 0.0
  %693 = vmatmul.mubr.f32.gmra.mrb[0].mxu0 %v337
  %v694 = vpop.f32.mrb[0].mxu0
  %v695 = vadd.f32 0.0, %v694
  %v696 = vpop.f32.mrb[0].mxu0
  %697 = vmatprep.mubr.f32.mxu0 0.0
  %698 = vmatmul.mubr.f32.gmra.mrb[0].mxu0 %v340
  %v699 = vpop.f32.mrb[0].mxu0
  %v700 = vadd.f32 0.0, %v699
  %v701 = vpop.f32.mrb[0].mxu0
  %702 = vmatprep.mubr.f32.mxu0 0.0
  %703 = vmatmul.mubr.f32.gmra.mrb[0].mxu0 %v343
  %v704 = vpop.f32.mrb[0].mxu0
  %v705 = vadd.f32 0.0, %v704
  %v706 = vpop.f32.mrb[0].mxu0
  %707 = vmatprep.mubr.f32.mxu0 0.0
  %708 = vmatmul.mubr.f32.gmra.mrb[0].mxu0 %v346
  %v709 = vpop.f32.mrb[0].mxu0
  %v710 = vadd.f32 0.0, %v709
  %v711 = vpop.f32.mrb[0].mxu0
  %712 = vmatprep.mubr.f32.mxu0 0.0
  %713 = vmatmul.mubr.f32.gmra.mrb[0].mxu0 %v349
  %v714 = vpop.f32.mrb[0].mxu0
  %v715 = vadd.f32 0.0, %v714
  %v716 = vpop.f32.mrb[0].mxu0
  %717 = vmatprep.mubr.f32.mxu0 0.0
  %718 = vmatmul.mubr.f32.gmra.mrb[0].mxu0 %v352
  %v719 = vpop.f32.mrb[0].mxu0
  %v720 = vadd.f32 0.0, %v719
  %v721 = vpop.f32.mrb[0].mxu0
  %722 = vmatprep.mubr.f32.mxu0 0.0
  %723 = vmatmul.mubr.f32.gmra.mrb[0].mxu0 %v355
  %v724 = vpop.f32.mrb[0].mxu0
  %v725 = vadd.f32 0.0, %v724
  %v726 = vpop.f32.mrb[0].mxu0
  %727 = vmatprep.mubr.f32.mxu0 0.0
  %728 = vmatmul.mubr.f32.gmra.mrb[0].mxu0 %v358
  %v729 = vpop.f32.mrb[0].mxu0
  %v730 = vadd.f32 0.0, %v729
  %v731 = vpop.f32.mrb[0].mxu0
  %732 = vmatprep.mubr.f32.mxu0 0.0
  %733 = vmatmul.mubr.f32.gmra.mrb[0].mxu0 %v361
  %v734 = vpop.f32.mrb[0].mxu0
  %v735 = vadd.f32 0.0, %v734
  %v736 = vpop.f32.mrb[0].mxu0
  %737 = vmatprep.mubr.f32.mxu0 0.0
  %738 = vmatmul.mubr.f32.gmra.mrb[0].mxu0 %v364
  %v739 = vpop.f32.mrb[0].mxu0
  %v740 = vadd.f32 0.0, %v739
  %v741 = vpop.f32.mrb[0].mxu0
  %742 = vmatprep.mubr.f32.mxu0 0.0
  %743 = vmatmul.mubr.f32.gmra.mrb[0].mxu0 %v367
  %v744 = vpop.f32.mrb[0].mxu0
  %v745 = vadd.f32 0.0, %v744
  %v746 = vpop.f32.mrb[0].mxu0
  %747 = vmatprep.mubr.f32.mxu0 0.0
  %748 = vmatmul.mubr.f32.gmra.mrb[0].mxu0 %v370
  %v749 = vpop.f32.mrb[0].mxu0
  %v750 = vadd.f32 0.0, %v749
  %v751 = vpop.f32.mrb[0].mxu0
  %752 = vmatprep.mubr.f32.mxu0 0.0
  %753 = vmatmul.mubr.f32.gmra.mrb[0].mxu0 %v373
  %v754 = vpop.f32.mrb[0].mxu0
  %v755 = vadd.f32 0.0, %v754
  %v756 = vpop.f32.mrb[0].mxu0
  %757 = vmatprep.mubr.f32.mxu0 0.0
  %758 = vmatmul.mubr.f32.gmra.mrb[0].mxu0 %v376
  %v759 = vpop.f32.mrb[0].mxu0
  %v760 = vadd.f32 0.0, %v759
  %v761 = vpop.f32.mrb[0].mxu0
  %762 = vdwg.mxu0
  %v764 = vsel %vm185, %v49, 0
  %v767 = vsel %vm185, %v50, 0
  %v770 = vsel %vm185, %v51, 0
  %v773 = vsel %vm185, %v52, 0
  %v776 = vsel %vm185, %v53, 0
  %v779 = vsel %vm185, %v54, 0
  %v782 = vsel %vm185, %v55, 0
  %v785 = vsel %vm185, %v56, 0
  %v788 = vsel %vm185, %v57, 0
  %v791 = vsel %vm185, %v58, 0
  %v794 = vsel %vm185, %v59, 0
  %v797 = vsel %vm185, %v60, 0
  %v800 = vsel %vm185, %v61, 0
  %v803 = vsel %vm185, %v62, 0
  %v806 = vsel %vm185, %v63, 0
  %v809 = vsel %vm185, %v64, 0
  %v812 = vsel %vm185, %v65, 0
  %v815 = vsel %vm185, %v66, 0
  %v818 = vsel %vm185, %v67, 0
  %v821 = vsel %vm185, %v68, 0
  %v824 = vsel %vm185, %v69, 0
  %v827 = vsel %vm185, %v70, 0
  %v830 = vsel %vm185, %v71, 0
  %v833 = vsel %vm185, %v72, 0
  %v836 = vsel %vm185, %v73, 0
  %v839 = vsel %vm185, %v74, 0
  %v842 = vsel %vm185, %v75, 0
  %v845 = vsel %vm185, %v76, 0
  %v848 = vsel %vm185, %v77, 0
  %v851 = vsel %vm185, %v78, 0
  %v854 = vsel %vm185, %v79, 0
  %v857 = vsel %vm185, %v80, 0
  %v860 = vsel %vm185, %v81, 0
  %v863 = vsel %vm185, %v82, 0
  %v866 = vsel %vm185, %v83, 0
  %v869 = vsel %vm185, %v84, 0
  %v872 = vsel %vm185, %v85, 0
  %v875 = vsel %vm185, %v86, 0
  %v878 = vsel %vm185, %v87, 0
  %v881 = vsel %vm185, %v88, 0
  %v884 = vsel %vm185, %v89, 0
  %v887 = vsel %vm185, %v90, 0
  %v890 = vsel %vm185, %v91, 0
  %v893 = vsel %vm185, %v92, 0
  %v896 = vsel %vm185, %v93, 0
  %v899 = vsel %vm185, %v94, 0
  %v902 = vsel %vm185, %v95, 0
  %v905 = vsel %vm185, %v96, 0
  %v908 = vsel %vm185, %v97, 0
  %v911 = vsel %vm185, %v98, 0
  %v914 = vsel %vm185, %v99, 0
  %v917 = vsel %vm185, %v100, 0
  %v920 = vsel %vm185, %v101, 0
  %v923 = vsel %vm185, %v102, 0
  %v926 = vsel %vm185, %v103, 0
  %v929 = vsel %vm185, %v104, 0
  %v932 = vsel %vm185, %v105, 0
  %v935 = vsel %vm185, %v106, 0
  %v938 = vsel %vm185, %v107, 0
  %v941 = vsel %vm185, %v108, 0
  %v944 = vsel %vm185, %v109, 0
  %v947 = vsel %vm185, %v110, 0
  %v950 = vsel %vm185, %v111, 0
  %v953 = vsel %vm185, %v112, 0
  %955 = vmatprep.subr.mxu0 0.0
  %956 = vmatpush1.msra.mxu0 %v177
  %957 = vmatprep.subr.mxu0 0.0
  %958 = vmatpush1.msra.mxu0 %v178
  %959 = vmatprep.subr.mxu0 0.0
  %960 = vmatpush1.msra.mxu0 %v179
  %961 = vmatprep.subr.mxu0 0.0
  %962 = vmatpush1.msra.mxu0 %v180
  %963 = vmatprep.subr.mxu0 0.0
  %964 = vmatpush1.msra.mxu0 0.0
  %965 = vmatprep.subr.mxu0 0.0
  %966 = vmatpush1.msra.mxu0 0.0
  %967 = vmatprep.subr.mxu0 0.0
  %968 = vmatpush1.msra.mxu0 0.0
  %969 = vmatprep.subr.mxu0 0.0
  %970 = vmatpush1.msra.mxu0 0.0
  %971 = vmatprep.subr.mxu0 0.0
  %972 = vmatpush1.msra.mxu0 0.0
  %973 = vmatprep.subr.mxu0 0.0
  %974 = vmatpush1.msra.mxu0 0.0
  %975 = vmatprep.subr.mxu0 0.0
  %976 = vmatpush1.msra.mxu0 0.0
  %977 = vmatprep.subr.mxu0 0.0
  %978 = vmatpush1.msra.mxu0 0.0
  %979 = vmatprep.subr.mxu0 0.0
  %980 = vmatpush1.msra.mxu0 0.0
  %981 = vmatprep.subr.mxu0 0.0
  %982 = vmatpush1.msra.mxu0 0.0
  %983 = vmatprep.subr.mxu0 0.0
  %984 = vmatpush1.msra.mxu0 0.0
  %985 = vmatprep.subr.mxu0 0.0
  %986 = vmatpush1.msra.mxu0 0.0
  %987 = vmatprep.subr.mxu0 0.0
  %988 = vmatpush1.msra.mxu0 0.0
  %989 = vmatprep.subr.mxu0 0.0
  %990 = vmatpush1.msra.mxu0 0.0
  %991 = vmatprep.subr.mxu0 0.0
  %992 = vmatpush1.msra.mxu0 0.0
  %993 = vmatprep.subr.mxu0 0.0
  %994 = vmatpush1.msra.mxu0 0.0
  %995 = vmatprep.subr.mxu0 0.0
  %996 = vmatpush1.msra.mxu0 0.0
  %997 = vmatprep.subr.mxu0 0.0
  %998 = vmatpush1.msra.mxu0 0.0
  %999 = vmatprep.subr.mxu0 0.0
  %1000 = vmatpush1.msra.mxu0 0.0
  %1001 = vmatprep.subr.mxu0 0.0
  %1002 = vmatpush1.msra.mxu0 0.0
  %1003 = vmatprep.subr.mxu0 0.0
  %1004 = vmatpush1.msra.mxu0 0.0
  %1005 = vmatprep.subr.mxu0 0.0
  %1006 = vmatpush1.msra.mxu0 0.0
  %1007 = vmatprep.subr.mxu0 0.0
  %1008 = vmatpush1.msra.mxu0 0.0
  %1009 = vmatprep.subr.mxu0 0.0
  %1010 = vmatpush1.msra.mxu0 0.0
  %1011 = vmatprep.subr.mxu0 0.0
  %1012 = vmatpush1.msra.mxu0 0.0
  %1013 = vmatprep.subr.mxu0 0.0
  %1014 = vmatpush1.msra.mxu0 0.0
  %1015 = vmatprep.subr.mxu0 0.0
  %1016 = vmatpush1.msra.mxu0 0.0
  %1017 = vmatprep.subr.mxu0 0.0
  %1018 = vmatpush1.msra.mxu0 0.0
  %1019 = vmatprep.mubr.f32.mxu0 0.0
  %1020 = vmatmul.mubr.f32.gmra.mrb[0].mxu0 %v764
  %v1021 = vpop.f32.mrb[0].mxu0
  %v1022 = vadd.f32 %v445, %v1021
  %v1023 = vpop.f32.mrb[0].mxu0
  %1024 = vmatprep.mubr.f32.mxu0 0.0
  %1025 = vmatmul.mubr.f32.gmra.mrb[0].mxu0 %v767
  %v1026 = vpop.f32.mrb[0].mxu0
  %v1027 = vadd.f32 %v450, %v1026
  %v1028 = vpop.f32.mrb[0].mxu0
  %1029 = vmatprep.mubr.f32.mxu0 0.0
  %1030 = vmatmul.mubr.f32.gmra.mrb[0].mxu0 %v770
  %v1031 = vpop.f32.mrb[0].mxu0
  %v1032 = vadd.f32 %v455, %v1031
  %v1033 = vpop.f32.mrb[0].mxu0
  %1034 = vmatprep.mubr.f32.mxu0 0.0
  %1035 = vmatmul.mubr.f32.gmra.mrb[0].mxu0 %v773
  %v1036 = vpop.f32.mrb[0].mxu0
  %v1037 = vadd.f32 %v460, %v1036
  %v1038 = vpop.f32.mrb[0].mxu0
  %1039 = vmatprep.mubr.f32.mxu0 0.0
  %1040 = vmatmul.mubr.f32.gmra.mrb[0].mxu0 %v776
  %v1041 = vpop.f32.mrb[0].mxu0
  %v1042 = vadd.f32 %v465, %v1041
  %v1043 = vpop.f32.mrb[0].mxu0
  %1044 = vmatprep.mubr.f32.mxu0 0.0
  %1045 = vmatmul.mubr.f32.gmra.mrb[0].mxu0 %v779
  %v1046 = vpop.f32.mrb[0].mxu0
  %v1047 = vadd.f32 %v470, %v1046
  %v1048 = vpop.f32.mrb[0].mxu0
  %1049 = vmatprep.mubr.f32.mxu0 0.0
  %1050 = vmatmul.mubr.f32.gmra.mrb[0].mxu0 %v782
  %v1051 = vpop.f32.mrb[0].mxu0
  %v1052 = vadd.f32 %v475, %v1051
  %v1053 = vpop.f32.mrb[0].mxu0
  %1054 = vmatprep.mubr.f32.mxu0 0.0
  %1055 = vmatmul.mubr.f32.gmra.mrb[0].mxu0 %v785
  %v1056 = vpop.f32.mrb[0].mxu0
  %v1057 = vadd.f32 %v480, %v1056
  %v1058 = vpop.f32.mrb[0].mxu0
  %1059 = vmatprep.mubr.f32.mxu0 0.0
  %1060 = vmatmul.mubr.f32.gmra.mrb[0].mxu0 %v788
  %v1061 = vpop.f32.mrb[0].mxu0
  %v1062 = vadd.f32 %v485, %v1061
  %v1063 = vpop.f32.mrb[0].mxu0
  %1064 = vmatprep.mubr.f32.mxu0 0.0
  %1065 = vmatmul.mubr.f32.gmra.mrb[0].mxu0 %v791
  %v1066 = vpop.f32.mrb[0].mxu0
  %v1067 = vadd.f32 %v490, %v1066
  %v1068 = vpop.f32.mrb[0].mxu0
  %1069 = vmatprep.mubr.f32.mxu0 0.0
  %1070 = vmatmul.mubr.f32.gmra.mrb[0].mxu0 %v794
  %v1071 = vpop.f32.mrb[0].mxu0
  %v1072 = vadd.f32 %v495, %v1071
  %v1073 = vpop.f32.mrb[0].mxu0
  %1074 = vmatprep.mubr.f32.mxu0 0.0
  %1075 = vmatmul.mubr.f32.gmra.mrb[0].mxu0 %v797
  %v1076 = vpop.f32.mrb[0].mxu0
  %v1077 = vadd.f32 %v500, %v1076
  %v1078 = vpop.f32.mrb[0].mxu0
  %1079 = vmatprep.mubr.f32.mxu0 0.0
  %1080 = vmatmul.mubr.f32.gmra.mrb[0].mxu0 %v800
  %v1081 = vpop.f32.mrb[0].mxu0
  %v1082 = vadd.f32 %v505, %v1081
  %v1083 = vpop.f32.mrb[0].mxu0
  %1084 = vmatprep.mubr.f32.mxu0 0.0
  %1085 = vmatmul.mubr.f32.gmra.mrb[0].mxu0 %v803
  %v1086 = vpop.f32.mrb[0].mxu0
  %v1087 = vadd.f32 %v510, %v1086
  %v1088 = vpop.f32.mrb[0].mxu0
  %1089 = vmatprep.mubr.f32.mxu0 0.0
  %1090 = vmatmul.mubr.f32.gmra.mrb[0].mxu0 %v806
  %v1091 = vpop.f32.mrb[0].mxu0
  %v1092 = vadd.f32 %v515, %v1091
  %v1093 = vpop.f32.mrb[0].mxu0
  %1094 = vmatprep.mubr.f32.mxu0 0.0
  %1095 = vmatmul.mubr.f32.gmra.mrb[0].mxu0 %v809
  %v1096 = vpop.f32.mrb[0].mxu0
  %v1097 = vadd.f32 %v520, %v1096
  %v1098 = vpop.f32.mrb[0].mxu0
  %1099 = vmatprep.mubr.f32.mxu0 0.0
  %1100 = vmatmul.mubr.f32.gmra.mrb[0].mxu0 %v812
  %v1101 = vpop.f32.mrb[0].mxu0
  %v1102 = vadd.f32 %v525, %v1101
  %v1103 = vpop.f32.mrb[0].mxu0
  %1104 = vmatprep.mubr.f32.mxu0 0.0
  %1105 = vmatmul.mubr.f32.gmra.mrb[0].mxu0 %v815
  %v1106 = vpop.f32.mrb[0].mxu0
  %v1107 = vadd.f32 %v530, %v1106
  %v1108 = vpop.f32.mrb[0].mxu0
  %1109 = vmatprep.mubr.f32.mxu0 0.0
  %1110 = vmatmul.mubr.f32.gmra.mrb[0].mxu0 %v818
  %v1111 = vpop.f32.mrb[0].mxu0
  %v1112 = vadd.f32 %v535, %v1111
  %v1113 = vpop.f32.mrb[0].mxu0
  %1114 = vmatprep.mubr.f32.mxu0 0.0
  %1115 = vmatmul.mubr.f32.gmra.mrb[0].mxu0 %v821
  %v1116 = vpop.f32.mrb[0].mxu0
  %v1117 = vadd.f32 %v540, %v1116
  %v1118 = vpop.f32.mrb[0].mxu0
  %1119 = vmatprep.mubr.f32.mxu0 0.0
  %1120 = vmatmul.mubr.f32.gmra.mrb[0].mxu0 %v824
  %v1121 = vpop.f32.mrb[0].mxu0
  %v1122 = vadd.f32 %v545, %v1121
  %v1123 = vpop.f32.mrb[0].mxu0
  %1124 = vmatprep.mubr.f32.mxu0 0.0
  %1125 = vmatmul.mubr.f32.gmra.mrb[0].mxu0 %v827
  %v1126 = vpop.f32.mrb[0].mxu0
  %v1127 = vadd.f32 %v550, %v1126
  %v1128 = vpop.f32.mrb[0].mxu0
  %1129 = vmatprep.mubr.f32.mxu0 0.0
  %1130 = vmatmul.mubr.f32.gmra.mrb[0].mxu0 %v830
  %v1131 = vpop.f32.mrb[0].mxu0
  %v1132 = vadd.f32 %v555, %v1131
  %v1133 = vpop.f32.mrb[0].mxu0
  %1134 = vmatprep.mubr.f32.mxu0 0.0
  %1135 = vmatmul.mubr.f32.gmra.mrb[0].mxu0 %v833
  %v1136 = vpop.f32.mrb[0].mxu0
  %v1137 = vadd.f32 %v560, %v1136
  %v1138 = vpop.f32.mrb[0].mxu0
  %1139 = vmatprep.mubr.f32.mxu0 0.0
  %1140 = vmatmul.mubr.f32.gmra.mrb[0].mxu0 %v836
  %v1141 = vpop.f32.mrb[0].mxu0
  %v1142 = vadd.f32 %v565, %v1141
  %v1143 = vpop.f32.mrb[0].mxu0
  %1144 = vmatprep.mubr.f32.mxu0 0.0
  %1145 = vmatmul.mubr.f32.gmra.mrb[0].mxu0 %v839
  %v1146 = vpop.f32.mrb[0].mxu0
  %v1147 = vadd.f32 %v570, %v1146
  %v1148 = vpop.f32.mrb[0].mxu0
  %1149 = vmatprep.mubr.f32.mxu0 0.0
  %1150 = vmatmul.mubr.f32.gmra.mrb[0].mxu0 %v842
  %v1151 = vpop.f32.mrb[0].mxu0
  %v1152 = vadd.f32 %v575, %v1151
  %v1153 = vpop.f32.mrb[0].mxu0
  %1154 = vmatprep.mubr.f32.mxu0 0.0
  %1155 = vmatmul.mubr.f32.gmra.mrb[0].mxu0 %v845
  %v1156 = vpop.f32.mrb[0].mxu0
  %v1157 = vadd.f32 %v580, %v1156
  %v1158 = vpop.f32.mrb[0].mxu0
  %1159 = vmatprep.mubr.f32.mxu0 0.0
  %1160 = vmatmul.mubr.f32.gmra.mrb[0].mxu0 %v848
  %v1161 = vpop.f32.mrb[0].mxu0
  %v1162 = vadd.f32 %v585, %v1161
  %v1163 = vpop.f32.mrb[0].mxu0
  %1164 = vmatprep.mubr.f32.mxu0 0.0
  %1165 = vmatmul.mubr.f32.gmra.mrb[0].mxu0 %v851
  %v1166 = vpop.f32.mrb[0].mxu0
  %v1167 = vadd.f32 %v590, %v1166
  %v1168 = vpop.f32.mrb[0].mxu0
  %1169 = vmatprep.mubr.f32.mxu0 0.0
  %1170 = vmatmul.mubr.f32.gmra.mrb[0].mxu0 %v854
  %v1171 = vpop.f32.mrb[0].mxu0
  %v1172 = vadd.f32 %v595, %v1171
  %v1173 = vpop.f32.mrb[0].mxu0
  %1174 = vmatprep.mubr.f32.mxu0 0.0
  %1175 = vmatmul.mubr.f32.gmra.mrb[0].mxu0 %v857
  %v1176 = vpop.f32.mrb[0].mxu0
  %v1177 = vadd.f32 %v600, %v1176
  %v1178 = vpop.f32.mrb[0].mxu0
  %1179 = vmatprep.mubr.f32.mxu0 0.0
  %1180 = vmatmul.mubr.f32.gmra.mrb[0].mxu0 %v860
  %v1181 = vpop.f32.mrb[0].mxu0
  %v1182 = vadd.f32 %v605, %v1181
  %v1183 = vpop.f32.mrb[0].mxu0
  %1184 = vmatprep.mubr.f32.mxu0 0.0
  %1185 = vmatmul.mubr.f32.gmra.mrb[0].mxu0 %v863
  %v1186 = vpop.f32.mrb[0].mxu0
  %v1187 = vadd.f32 %v610, %v1186
  %v1188 = vpop.f32.mrb[0].mxu0
  %1189 = vmatprep.mubr.f32.mxu0 0.0
  %1190 = vmatmul.mubr.f32.gmra.mrb[0].mxu0 %v866
  %v1191 = vpop.f32.mrb[0].mxu0
  %v1192 = vadd.f32 %v615, %v1191
  %v1193 = vpop.f32.mrb[0].mxu0
  %1194 = vmatprep.mubr.f32.mxu0 0.0
  %1195 = vmatmul.mubr.f32.gmra.mrb[0].mxu0 %v869
  %v1196 = vpop.f32.mrb[0].mxu0
  %v1197 = vadd.f32 %v620, %v1196
  %v1198 = vpop.f32.mrb[0].mxu0
  %1199 = vmatprep.mubr.f32.mxu0 0.0
  %1200 = vmatmul.mubr.f32.gmra.mrb[0].mxu0 %v872
  %v1201 = vpop.f32.mrb[0].mxu0
  %v1202 = vadd.f32 %v625, %v1201
  %v1203 = vpop.f32.mrb[0].mxu0
  %1204 = vmatprep.mubr.f32.mxu0 0.0
  %1205 = vmatmul.mubr.f32.gmra.mrb[0].mxu0 %v875
  %v1206 = vpop.f32.mrb[0].mxu0
  %v1207 = vadd.f32 %v630, %v1206
  %v1208 = vpop.f32.mrb[0].mxu0
  %1209 = vmatprep.mubr.f32.mxu0 0.0
  %1210 = vmatmul.mubr.f32.gmra.mrb[0].mxu0 %v878
  %v1211 = vpop.f32.mrb[0].mxu0
  %v1212 = vadd.f32 %v635, %v1211
  %v1213 = vpop.f32.mrb[0].mxu0
  %1214 = vmatprep.mubr.f32.mxu0 0.0
  %1215 = vmatmul.mubr.f32.gmra.mrb[0].mxu0 %v881
  %v1216 = vpop.f32.mrb[0].mxu0
  %v1217 = vadd.f32 %v640, %v1216
  %v1218 = vpop.f32.mrb[0].mxu0
  %1219 = vmatprep.mubr.f32.mxu0 0.0
  %1220 = vmatmul.mubr.f32.gmra.mrb[0].mxu0 %v884
  %v1221 = vpop.f32.mrb[0].mxu0
  %v1222 = vadd.f32 %v645, %v1221
  %v1223 = vpop.f32.mrb[0].mxu0
  %1224 = vmatprep.mubr.f32.mxu0 0.0
  %1225 = vmatmul.mubr.f32.gmra.mrb[0].mxu0 %v887
  %v1226 = vpop.f32.mrb[0].mxu0
  %v1227 = vadd.f32 %v650, %v1226
  %v1228 = vpop.f32.mrb[0].mxu0
  %1229 = vmatprep.mubr.f32.mxu0 0.0
  %1230 = vmatmul.mubr.f32.gmra.mrb[0].mxu0 %v890
  %v1231 = vpop.f32.mrb[0].mxu0
  %v1232 = vadd.f32 %v655, %v1231
  %v1233 = vpop.f32.mrb[0].mxu0
  %1234 = vmatprep.mubr.f32.mxu0 0.0
  %1235 = vmatmul.mubr.f32.gmra.mrb[0].mxu0 %v893
  %v1236 = vpop.f32.mrb[0].mxu0
  %v1237 = vadd.f32 %v660, %v1236
  %v1238 = vpop.f32.mrb[0].mxu0
  %1239 = vmatprep.mubr.f32.mxu0 0.0
  %1240 = vmatmul.mubr.f32.gmra.mrb[0].mxu0 %v896
  %v1241 = vpop.f32.mrb[0].mxu0
  %v1242 = vadd.f32 %v665, %v1241
  %v1243 = vpop.f32.mrb[0].mxu0
  %1244 = vmatprep.mubr.f32.mxu0 0.0
  %1245 = vmatmul.mubr.f32.gmra.mrb[0].mxu0 %v899
  %v1246 = vpop.f32.mrb[0].mxu0
  %v1247 = vadd.f32 %v670, %v1246
  %v1248 = vpop.f32.mrb[0].mxu0
  %1249 = vmatprep.mubr.f32.mxu0 0.0
  %1250 = vmatmul.mubr.f32.gmra.mrb[0].mxu0 %v902
  %v1251 = vpop.f32.mrb[0].mxu0
  %v1252 = vadd.f32 %v675, %v1251
  %v1253 = vpop.f32.mrb[0].mxu0
  %1254 = vmatprep.mubr.f32.mxu0 0.0
  %1255 = vmatmul.mubr.f32.gmra.mrb[0].mxu0 %v905
  %v1256 = vpop.f32.mrb[0].mxu0
  %v1257 = vadd.f32 %v680, %v1256
  %v1258 = vpop.f32.mrb[0].mxu0
  %1259 = vmatprep.mubr.f32.mxu0 0.0
  %1260 = vmatmul.mubr.f32.gmra.mrb[0].mxu0 %v908
  %v1261 = vpop.f32.mrb[0].mxu0
  %v1262 = vadd.f32 %v685, %v1261
  %v1263 = vpop.f32.mrb[0].mxu0
  %1264 = vmatprep.mubr.f32.mxu0 0.0
  %1265 = vmatmul.mubr.f32.gmra.mrb[0].mxu0 %v911
  %v1266 = vpop.f32.mrb[0].mxu0
  %v1267 = vadd.f32 %v690, %v1266
  %v1268 = vpop.f32.mrb[0].mxu0
  %1269 = vmatprep.mubr.f32.mxu0 0.0
  %1270 = vmatmul.mubr.f32.gmra.mrb[0].mxu0 %v914
  %v1271 = vpop.f32.mrb[0].mxu0
  %v1272 = vadd.f32 %v695, %v1271
  %v1273 = vpop.f32.mrb[0].mxu0
  %1274 = vmatprep.mubr.f32.mxu0 0.0
  %1275 = vmatmul.mubr.f32.gmra.mrb[0].mxu0 %v917
  %v1276 = vpop.f32.mrb[0].mxu0
  %v1277 = vadd.f32 %v700, %v1276
  %v1278 = vpop.f32.mrb[0].mxu0
  %1279 = vmatprep.mubr.f32.mxu0 0.0
  %1280 = vmatmul.mubr.f32.gmra.mrb[0].mxu0 %v920
  %v1281 = vpop.f32.mrb[0].mxu0
  %v1282 = vadd.f32 %v705, %v1281
  %v1283 = vpop.f32.mrb[0].mxu0
  %1284 = vmatprep.mubr.f32.mxu0 0.0
  %1285 = vmatmul.mubr.f32.gmra.mrb[0].mxu0 %v923
  %v1286 = vpop.f32.mrb[0].mxu0
  %v1287 = vadd.f32 %v710, %v1286
  %v1288 = vpop.f32.mrb[0].mxu0
  %1289 = vmatprep.mubr.f32.mxu0 0.0
  %1290 = vmatmul.mubr.f32.gmra.mrb[0].mxu0 %v926
  %v1291 = vpop.f32.mrb[0].mxu0
  %v1292 = vadd.f32 %v715, %v1291
  %v1293 = vpop.f32.mrb[0].mxu0
  %1294 = vmatprep.mubr.f32.mxu0 0.0
  %1295 = vmatmul.mubr.f32.gmra.mrb[0].mxu0 %v929
  %v1296 = vpop.f32.mrb[0].mxu0
  %v1297 = vadd.f32 %v720, %v1296
  %v1298 = vpop.f32.mrb[0].mxu0
  %1299 = vmatprep.mubr.f32.mxu0 0.0
  %1300 = vmatmul.mubr.f32.gmra.mrb[0].mxu0 %v932
  %v1301 = vpop.f32.mrb[0].mxu0
  %v1302 = vadd.f32 %v725, %v1301
  %v1303 = vpop.f32.mrb[0].mxu0
  %1304 = vmatprep.mubr.f32.mxu0 0.0
  %1305 = vmatmul.mubr.f32.gmra.mrb[0].mxu0 %v935
  %v1306 = vpop.f32.mrb[0].mxu0
  %v1307 = vadd.f32 %v730, %v1306
  %v1308 = vpop.f32.mrb[0].mxu0
  %1309 = vmatprep.mubr.f32.mxu0 0.0
  %1310 = vmatmul.mubr.f32.gmra.mrb[0].mxu0 %v938
  %v1311 = vpop.f32.mrb[0].mxu0
  %v1312 = vadd.f32 %v735, %v1311
  %v1313 = vpop.f32.mrb[0].mxu0
  %1314 = vmatprep.mubr.f32.mxu0 0.0
  %1315 = vmatmul.mubr.f32.gmra.mrb[0].mxu0 %v941
  %v1316 = vpop.f32.mrb[0].mxu0
  %v1317 = vadd.f32 %v740, %v1316
  %v1318 = vpop.f32.mrb[0].mxu0
  %1319 = vmatprep.mubr.f32.mxu0 0.0
  %1320 = vmatmul.mubr.f32.gmra.mrb[0].mxu0 %v944
  %v1321 = vpop.f32.mrb[0].mxu0
  %v1322 = vadd.f32 %v745, %v1321
  %v1323 = vpop.f32.mrb[0].mxu0
  %1324 = vmatprep.mubr.f32.mxu0 0.0
  %1325 = vmatmul.mubr.f32.gmra.mrb[0].mxu0 %v947
  %v1326 = vpop.f32.mrb[0].mxu0
  %v1327 = vadd.f32 %v750, %v1326
  %v1328 = vpop.f32.mrb[0].mxu0
  %1329 = vmatprep.mubr.f32.mxu0 0.0
  %1330 = vmatmul.mubr.f32.gmra.mrb[0].mxu0 %v950
  %v1331 = vpop.f32.mrb[0].mxu0
  %v1332 = vadd.f32 %v755, %v1331
  %v1333 = vpop.f32.mrb[0].mxu0
  %1334 = vmatprep.mubr.f32.mxu0 0.0
  %1335 = vmatmul.mubr.f32.gmra.mrb[0].mxu0 %v953
  %v1336 = vpop.f32.mrb[0].mxu0
  %v1337 = vadd.f32 %v760, %v1336
  %v1338 = vpop.f32.mrb[0].mxu0
  %1339 = vdwg.mxu0
  %v1340 = vld [vmem:[%s4] sm:$0x1]
  %v1342 = vlaneseq
  %v1343 = vshrl.u32 %v1342, 7
  %v1344 = vsub.s32 0, %v1343
  %v1345 = vrot.slane %v1340, %v1344
  %v1347 = vadd.f32 %v1022, %v1345
  %v1348 = vadd.f32 %v1027, %v1345
  %v1349 = vadd.f32 %v1032, %v1345
  %v1350 = vadd.f32 %v1037, %v1345
  %v1351 = vadd.f32 %v1042, %v1345
  %v1352 = vadd.f32 %v1047, %v1345
  %v1353 = vadd.f32 %v1052, %v1345
  %v1354 = vadd.f32 %v1057, %v1345
  %v1355 = vadd.f32 %v1062, %v1345
  %v1356 = vadd.f32 %v1067, %v1345
  %v1357 = vadd.f32 %v1072, %v1345
  %v1358 = vadd.f32 %v1077, %v1345
  %v1359 = vadd.f32 %v1082, %v1345
  %v1360 = vadd.f32 %v1087, %v1345
  %v1361 = vadd.f32 %v1092, %v1345
  %v1362 = vadd.f32 %v1097, %v1345
  %v1363 = vadd.f32 %v1102, %v1345
  %v1364 = vadd.f32 %v1107, %v1345
  %v1365 = vadd.f32 %v1112, %v1345
  %v1366 = vadd.f32 %v1117, %v1345
  %v1367 = vadd.f32 %v1122, %v1345
  %v1368 = vadd.f32 %v1127, %v1345
  %v1369 = vadd.f32 %v1132, %v1345
  %v1370 = vadd.f32 %v1137, %v1345
  %v1371 = vadd.f32 %v1142, %v1345
  %v1372 = vadd.f32 %v1147, %v1345
  %v1373 = vadd.f32 %v1152, %v1345
  %v1374 = vadd.f32 %v1157, %v1345
  %v1375 = vadd.f32 %v1162, %v1345
  %v1376 = vadd.f32 %v1167, %v1345
  %v1377 = vadd.f32 %v1172, %v1345
  %v1378 = vadd.f32 %v1177, %v1345
  %v1379 = vadd.f32 %v1182, %v1345
  %v1380 = vadd.f32 %v1187, %v1345
  %v1381 = vadd.f32 %v1192, %v1345
  %v1382 = vadd.f32 %v1197, %v1345
  %v1383 = vadd.f32 %v1202, %v1345
  %v1384 = vadd.f32 %v1207, %v1345
  %v1385 = vadd.f32 %v1212, %v1345
  %v1386 = vadd.f32 %v1217, %v1345
  %v1387 = vadd.f32 %v1222, %v1345
  %v1388 = vadd.f32 %v1227, %v1345
  %v1389 = vadd.f32 %v1232, %v1345
  %v1390 = vadd.f32 %v1237, %v1345
  %v1391 = vadd.f32 %v1242, %v1345
  %v1392 = vadd.f32 %v1247, %v1345
  %v1393 = vadd.f32 %v1252, %v1345
  %v1394 = vadd.f32 %v1257, %v1345
  %v1395 = vadd.f32 %v1262, %v1345
  %v1396 = vadd.f32 %v1267, %v1345
  %v1397 = vadd.f32 %v1272, %v1345
  %v1398 = vadd.f32 %v1277, %v1345
  %v1399 = vadd.f32 %v1282, %v1345
  %v1400 = vadd.f32 %v1287, %v1345
  %v1401 = vadd.f32 %v1292, %v1345
  %v1402 = vadd.f32 %v1297, %v1345
  %v1403 = vadd.f32 %v1302, %v1345
  %v1404 = vadd.f32 %v1307, %v1345
  %v1405 = vadd.f32 %v1312, %v1345
  %v1406 = vadd.f32 %v1317, %v1345
  %v1407 = vadd.f32 %v1322, %v1345
  %v1408 = vadd.f32 %v1327, %v1345
  %v1409 = vadd.f32 %v1332, %v1345
  %v1410 = vadd.f32 %v1337, %v1345
  %v1411 = vmul.f32 %v1347, 0.5
  %v1412 = vmul.f32 %v1348, 0.5
  %v1413 = vmul.f32 %v1349, 0.5
  %v1414 = vmul.f32 %v1350, 0.5
  %v1415 = vmul.f32 %v1351, 0.5
  %v1416 = vmul.f32 %v1352, 0.5
  %v1417 = vmul.f32 %v1353, 0.5
  %v1418 = vmul.f32 %v1354, 0.5
  %v1419 = vmul.f32 %v1355, 0.5
  %v1420 = vmul.f32 %v1356, 0.5
  %v1421 = vmul.f32 %v1357, 0.5
  %v1422 = vmul.f32 %v1358, 0.5
  %v1423 = vmul.f32 %v1359, 0.5
  %v1424 = vmul.f32 %v1360, 0.5
  %v1425 = vmul.f32 %v1361, 0.5
  %v1426 = vmul.f32 %v1362, 0.5
  %v1427 = vmul.f32 %v1363, 0.5
  %v1428 = vmul.f32 %v1364, 0.5
  %v1429 = vmul.f32 %v1365, 0.5
  %v1430 = vmul.f32 %v1366, 0.5
  %v1431 = vmul.f32 %v1367, 0.5
  %v1432 = vmul.f32 %v1368, 0.5
  %v1433 = vmul.f32 %v1369, 0.5
  %v1434 = vmul.f32 %v1370, 0.5
  %v1435 = vmul.f32 %v1371, 0.5
  %v1436 = vmul.f32 %v1372, 0.5
  %v1437 = vmul.f32 %v1373, 0.5
  %v1438 = vmul.f32 %v1374, 0.5
  %v1439 = vmul.f32 %v1375, 0.5
  %v1440 = vmul.f32 %v1376, 0.5
  %v1441 = vmul.f32 %v1377, 0.5
  %v1442 = vmul.f32 %v1378, 0.5
  %v1443 = vmul.f32 %v1379, 0.5
  %v1444 = vmul.f32 %v1380, 0.5
  %v1445 = vmul.f32 %v1381, 0.5
  %v1446 = vmul.f32 %v1382, 0.5
  %v1447 = vmul.f32 %v1383, 0.5
  %v1448 = vmul.f32 %v1384, 0.5
  %v1449 = vmul.f32 %v1385, 0.5
  %v1450 = vmul.f32 %v1386, 0.5
  %v1451 = vmul.f32 %v1387, 0.5
  %v1452 = vmul.f32 %v1388, 0.5
  %v1453 = vmul.f32 %v1389, 0.5
  %v1454 = vmul.f32 %v1390, 0.5
  %v1455 = vmul.f32 %v1391, 0.5
  %v1456 = vmul.f32 %v1392, 0.5
  %v1457 = vmul.f32 %v1393, 0.5
  %v1458 = vmul.f32 %v1394, 0.5
  %v1459 = vmul.f32 %v1395, 0.5
  %v1460 = vmul.f32 %v1396, 0.5
  %v1461 = vmul.f32 %v1397, 0.5
  %v1462 = vmul.f32 %v1398, 0.5
  %v1463 = vmul.f32 %v1399, 0.5
  %v1464 = vmul.f32 %v1400, 0.5
  %v1465 = vmul.f32 %v1401, 0.5
  %v1466 = vmul.f32 %v1402, 0.5
  %v1467 = vmul.f32 %v1403, 0.5
  %v1468 = vmul.f32 %v1404, 0.5
  %v1469 = vmul.f32 %v1405, 0.5
  %v1470 = vmul.f32 %v1406, 0.5
  %v1471 = vmul.f32 %v1407, 0.5
  %v1472 = vmul.f32 %v1408, 0.5
  %v1473 = vmul.f32 %v1409, 0.5
  %v1474 = vmul.f32 %v1410, 0.5
  %v1475 = vmul.f32 %v1347, 0.70710677
  %v1476 = vmul.f32 %v1348, 0.70710677
  %v1477 = vmul.f32 %v1349, 0.70710677
  %v1478 = vmul.f32 %v1350, 0.70710677
  %v1479 = vmul.f32 %v1351, 0.70710677
  %v1480 = vmul.f32 %v1352, 0.70710677
  %v1481 = vmul.f32 %v1353, 0.70710677
  %v1482 = vmul.f32 %v1354, 0.70710677
  %v1483 = vmul.f32 %v1355, 0.70710677
  %v1484 = vmul.f32 %v1356, 0.70710677
  %v1485 = vmul.f32 %v1357, 0.70710677
  %v1486 = vmul.f32 %v1358, 0.70710677
  %v1487 = vmul.f32 %v1359, 0.70710677
  %v1488 = vmul.f32 %v1360, 0.70710677
  %v1489 = vmul.f32 %v1361, 0.70710677
  %v1490 = vmul.f32 %v1362, 0.70710677
  %v1491 = vmul.f32 %v1363, 0.70710677
  %v1492 = vmul.f32 %v1364, 0.70710677
  %v1493 = vmul.f32 %v1365, 0.70710677
  %v1494 = vmul.f32 %v1366, 0.70710677
  %v1495 = vmul.f32 %v1367, 0.70710677
  %v1496 = vmul.f32 %v1368, 0.70710677
  %v1497 = vmul.f32 %v1369, 0.70710677
  %v1498 = vmul.f32 %v1370, 0.70710677
  %v1499 = vmul.f32 %v1371, 0.70710677
  %v1500 = vmul.f32 %v1372, 0.70710677
  %v1501 = vmul.f32 %v1373, 0.70710677
  %v1502 = vmul.f32 %v1374, 0.70710677
  %v1503 = vmul.f32 %v1375, 0.70710677
  %v1504 = vmul.f32 %v1376, 0.70710677
  %v1505 = vmul.f32 %v1377, 0.70710677
  %v1506 = vmul.f32 %v1378, 0.70710677
  %v1507 = vmul.f32 %v1379, 0.70710677
  %v1508 = vmul.f32 %v1380, 0.70710677
  %v1509 = vmul.f32 %v1381, 0.70710677
  %v1510 = vmul.f32 %v1382, 0.70710677
  %v1511 = vmul.f32 %v1383, 0.70710677
  %v1512 = vmul.f32 %v1384, 0.70710677
  %v1513 = vmul.f32 %v1385, 0.70710677
  %v1514 = vmul.f32 %v1386, 0.70710677
  %v1515 = vmul.f32 %v1387, 0.70710677
  %v1516 = vmul.f32 %v1388, 0.70710677
  %v1517 = vmul.f32 %v1389, 0.70710677
  %v1518 = vmul.f32 %v1390, 0.70710677
  %v1519 = vmul.f32 %v1391, 0.70710677
  %v1520 = vmul.f32 %v1392, 0.70710677
  %v1521 = vmul.f32 %v1393, 0.70710677
  %v1522 = vmul.f32 %v1394, 0.70710677
  %v1523 = vmul.f32 %v1395, 0.70710677
  %v1524 = vmul.f32 %v1396, 0.70710677
  %v1525 = vmul.f32 %v1397, 0.70710677
  %v1526 = vmul.f32 %v1398, 0.70710677
  %v1527 = vmul.f32 %v1399, 0.70710677
  %v1528 = vmul.f32 %v1400, 0.70710677
  %v1529 = vmul.f32 %v1401, 0.70710677
  %v1530 = vmul.f32 %v1402, 0.70710677
  %v1531 = vmul.f32 %v1403, 0.70710677
  %v1532 = vmul.f32 %v1404, 0.70710677
  %v1533 = vmul.f32 %v1405, 0.70710677
  %v1534 = vmul.f32 %v1406, 0.70710677
  %v1535 = vmul.f32 %v1407, 0.70710677
  %v1536 = vmul.f32 %v1408, 0.70710677
  %v1537 = vmul.f32 %v1409, 0.70710677
  %v1538 = vmul.f32 %v1410, 0.70710677
  %v1539 = verf.f32.pop %v1475
  %v1540 = verf.f32.pop %v1476
  %v1541 = verf.f32.pop %v1477
  %v1542 = verf.f32.pop %v1478
  %v1543 = verf.f32.pop %v1479
  %v1544 = verf.f32.pop %v1480
  %v1545 = verf.f32.pop %v1481
  %v1546 = verf.f32.pop %v1482
  %v1547 = verf.f32.pop %v1483
  %v1548 = verf.f32.pop %v1484
  %v1549 = verf.f32.pop %v1485
  %v1550 = verf.f32.pop %v1486
  %v1551 = verf.f32.pop %v1487
  %v1552 = verf.f32.pop %v1488
  %v1553 = verf.f32.pop %v1489
  %v1554 = verf.f32.pop %v1490
  %v1555 = verf.f32.pop %v1491
  %v1556 = verf.f32.pop %v1492
  %v1557 = verf.f32.pop %v1493
  %v1558 = verf.f32.pop %v1494
  %v1559 = verf.f32.pop %v1495
  %v1560 = verf.f32.pop %v1496
  %v1561 = verf.f32.pop %v1497
  %v1562 = verf.f32.pop %v1498
  %v1563 = verf.f32.pop %v1499
  %v1564 = verf.f32.pop %v1500
  %v1565 = verf.f32.pop %v1501
  %v1566 = verf.f32.pop %v1502
  %v1567 = verf.f32.pop %v1503
  %v1568 = verf.f32.pop %v1504
  %v1569 = verf.f32.pop %v1505
  %v1570 = verf.f32.pop %v1506
  %v1571 = verf.f32.pop %v1507
  %v1572 = verf.f32.pop %v1508
  %v1573 = verf.f32.pop %v1509
  %v1574 = verf.f32.pop %v1510
  %v1575 = verf.f32.pop %v1511
  %v1576 = verf.f32.pop %v1512
  %v1577 = verf.f32.pop %v1513
  %v1578 = verf.f32.pop %v1514
  %v1579 = verf.f32.pop %v1515
  %v1580 = verf.f32.pop %v1516
  %v1581 = verf.f32.pop %v1517
  %v1582 = verf.f32.pop %v1518
  %v1583 = verf.f32.pop %v1519
  %v1584 = verf.f32.pop %v1520
  %v1585 = verf.f32.pop %v1521
  %v1586 = verf.f32.pop %v1522
  %v1587 = verf.f32.pop %v1523
  %v1588 = verf.f32.pop %v1524
  %v1589 = verf.f32.pop %v1525
  %v1590 = verf.f32.pop %v1526
  %v1591 = verf.f32.pop %v1527
  %v1592 = verf.f32.pop %v1528
  %v1593 = verf.f32.pop %v1529
  %v1594 = verf.f32.pop %v1530
  %v1595 = verf.f32.pop %v1531
  %v1596 = verf.f32.pop %v1532
  %v1597 = verf.f32.pop %v1533
  %v1598 = verf.f32.pop %v1534
  %v1599 = verf.f32.pop %v1535
  %v1600 = verf.f32.pop %v1536
  %v1601 = verf.f32.pop %v1537
  %v1602 = verf.f32.pop %v1538
  %v1603 = vadd.f32 %v1539, 1.0
  %v1604 = vadd.f32 %v1540, 1.0
  %v1605 = vadd.f32 %v1541, 1.0
  %v1606 = vadd.f32 %v1542, 1.0
  %v1607 = vadd.f32 %v1543, 1.0
  %v1608 = vadd.f32 %v1544, 1.0
  %v1609 = vadd.f32 %v1545, 1.0
  %v1610 = vadd.f32 %v1546, 1.0
  %v1611 = vadd.f32 %v1547, 1.0
  %v1612 = vadd.f32 %v1548, 1.0
  %v1613 = vadd.f32 %v1549, 1.0
  %v1614 = vadd.f32 %v1550, 1.0
  %v1615 = vadd.f32 %v1551, 1.0
  %v1616 = vadd.f32 %v1552, 1.0
  %v1617 = vadd.f32 %v1553, 1.0
  %v1618 = vadd.f32 %v1554, 1.0
  %v1619 = vadd.f32 %v1555, 1.0
  %v1620 = vadd.f32 %v1556, 1.0
  %v1621 = vadd.f32 %v1557, 1.0
  %v1622 = vadd.f32 %v1558, 1.0
  %v1623 = vadd.f32 %v1559, 1.0
  %v1624 = vadd.f32 %v1560, 1.0
  %v1625 = vadd.f32 %v1561, 1.0
  %v1626 = vadd.f32 %v1562, 1.0
  %v1627 = vadd.f32 %v1563, 1.0
  %v1628 = vadd.f32 %v1564, 1.0
  %v1629 = vadd.f32 %v1565, 1.0
  %v1630 = vadd.f32 %v1566, 1.0
  %v1631 = vadd.f32 %v1567, 1.0
  %v1632 = vadd.f32 %v1568, 1.0
  %v1633 = vadd.f32 %v1569, 1.0
  %v1634 = vadd.f32 %v1570, 1.0
  %v1635 = vadd.f32 %v1571, 1.0
  %v1636 = vadd.f32 %v1572, 1.0
  %v1637 = vadd.f32 %v1573, 1.0
  %v1638 = vadd.f32 %v1574, 1.0
  %v1639 = vadd.f32 %v1575, 1.0
  %v1640 = vadd.f32 %v1576, 1.0
  %v1641 = vadd.f32 %v1577, 1.0
  %v1642 = vadd.f32 %v1578, 1.0
  %v1643 = vadd.f32 %v1579, 1.0
  %v1644 = vadd.f32 %v1580, 1.0
  %v1645 = vadd.f32 %v1581, 1.0
  %v1646 = vadd.f32 %v1582, 1.0
  %v1647 = vadd.f32 %v1583, 1.0
  %v1648 = vadd.f32 %v1584, 1.0
  %v1649 = vadd.f32 %v1585, 1.0
  %v1650 = vadd.f32 %v1586, 1.0
  %v1651 = vadd.f32 %v1587, 1.0
  %v1652 = vadd.f32 %v1588, 1.0
  %v1653 = vadd.f32 %v1589, 1.0
  %v1654 = vadd.f32 %v1590, 1.0
  %v1655 = vadd.f32 %v1591, 1.0
  %v1656 = vadd.f32 %v1592, 1.0
  %v1657 = vadd.f32 %v1593, 1.0
  %v1658 = vadd.f32 %v1594, 1.0
  %v1659 = vadd.f32 %v1595, 1.0
  %v1660 = vadd.f32 %v1596, 1.0
  %v1661 = vadd.f32 %v1597, 1.0
  %v1662 = vadd.f32 %v1598, 1.0
  %v1663 = vadd.f32 %v1599, 1.0
  %v1664 = vadd.f32 %v1600, 1.0
  %v1665 = vadd.f32 %v1601, 1.0
  %v1666 = vadd.f32 %v1602, 1.0
  %v1667 = vmul.f32 %v1411, %v1603
  %v1668 = vmul.f32 %v1412, %v1604
  %v1669 = vmul.f32 %v1413, %v1605
  %v1670 = vmul.f32 %v1414, %v1606
  %v1671 = vmul.f32 %v1415, %v1607
  %v1672 = vmul.f32 %v1416, %v1608
  %v1673 = vmul.f32 %v1417, %v1609
  %v1674 = vmul.f32 %v1418, %v1610
  %v1675 = vmul.f32 %v1419, %v1611
  %v1676 = vmul.f32 %v1420, %v1612
  %v1677 = vmul.f32 %v1421, %v1613
  %v1678 = vmul.f32 %v1422, %v1614
  %v1679 = vmul.f32 %v1423, %v1615
  %v1680 = vmul.f32 %v1424, %v1616
  %v1681 = vmul.f32 %v1425, %v1617
  %v1682 = vmul.f32 %v1426, %v1618
  %v1683 = vmul.f32 %v1427, %v1619
  %v1684 = vmul.f32 %v1428, %v1620
  %v1685 = vmul.f32 %v1429, %v1621
  %v1686 = vmul.f32 %v1430, %v1622
  %v1687 = vmul.f32 %v1431, %v1623
  %v1688 = vmul.f32 %v1432, %v1624
  %v1689 = vmul.f32 %v1433, %v1625
  %v1690 = vmul.f32 %v1434, %v1626
  %v1691 = vmul.f32 %v1435, %v1627
  %v1692 = vmul.f32 %v1436, %v1628
  %v1693 = vmul.f32 %v1437, %v1629
  %v1694 = vmul.f32 %v1438, %v1630
  %v1695 = vmul.f32 %v1439, %v1631
  %v1696 = vmul.f32 %v1440, %v1632
  %v1697 = vmul.f32 %v1441, %v1633
  %v1698 = vmul.f32 %v1442, %v1634
  %v1699 = vmul.f32 %v1443, %v1635
  %v1700 = vmul.f32 %v1444, %v1636
  %v1701 = vmul.f32 %v1445, %v1637
  %v1702 = vmul.f32 %v1446, %v1638
  %v1703 = vmul.f32 %v1447, %v1639
  %v1704 = vmul.f32 %v1448, %v1640
  %v1705 = vmul.f32 %v1449, %v1641
  %v1706 = vmul.f32 %v1450, %v1642
  %v1707 = vmul.f32 %v1451, %v1643
  %v1708 = vmul.f32 %v1452, %v1644
  %v1709 = vmul.f32 %v1453, %v1645
  %v1710 = vmul.f32 %v1454, %v1646
  %v1711 = vmul.f32 %v1455, %v1647
  %v1712 = vmul.f32 %v1456, %v1648
  %v1713 = vmul.f32 %v1457, %v1649
  %v1714 = vmul.f32 %v1458, %v1650
  %v1715 = vmul.f32 %v1459, %v1651
  %v1716 = vmul.f32 %v1460, %v1652
  %v1717 = vmul.f32 %v1461, %v1653
  %v1718 = vmul.f32 %v1462, %v1654
  %v1719 = vmul.f32 %v1463, %v1655
  %v1720 = vmul.f32 %v1464, %v1656
  %v1721 = vmul.f32 %v1465, %v1657
  %v1722 = vmul.f32 %v1466, %v1658
  %v1723 = vmul.f32 %v1467, %v1659
  %v1724 = vmul.f32 %v1468, %v1660
  %v1725 = vmul.f32 %v1469, %v1661
  %v1726 = vmul.f32 %v1470, %v1662
  %v1727 = vmul.f32 %v1471, %v1663
  %v1728 = vmul.f32 %v1472, %v1664
  %v1729 = vmul.f32 %v1473, %v1665
  %v1730 = vmul.f32 %v1474, %v1666
  %v1731 = vld [vmem:[%s5] sm:$0xff]
  %v1732 = vld [vmem:[%s5 + $0x8] sm:$0xff]
  %v1733 = vld [vmem:[%s5 + $0x10] sm:$0xff]
  %v1734 = vld [vmem:[%s5 + $0x18] sm:$0xff]
  %v1735 = vld [vmem:[%s5 + $0x20] sm:$0xff]
  %v1736 = vld [vmem:[%s5 + $0x28] sm:$0xff]
  %v1737 = vld [vmem:[%s5 + $0x30] sm:$0xff]
  %v1738 = vld [vmem:[%s5 + $0x38] sm:$0xff]
  %v1739 = vld [vmem:[%s6] sm:$0x1]
  %v1741 = vlaneseq
  %v1742 = vshrl.u32 %v1741, 7
  %v1743 = vsub.s32 0, %v1742
  %v1744 = vrot.slane %v1739, %v1743
  %vm1746 = vcmask 523264
  %v1748 = vsel %vm1746, %v1667, 0
  %v1751 = vsel %vm1746, %v1668, 0
  %v1754 = vsel %vm1746, %v1669, 0
  %v1757 = vsel %vm1746, %v1670, 0
  %v1760 = vsel %vm1746, %v1671, 0
  %v1763 = vsel %vm1746, %v1672, 0
  %v1766 = vsel %vm1746, %v1673, 0
  %v1769 = vsel %vm1746, %v1674, 0
  %v1772 = vsel %vm1746, %v1675, 0
  %v1775 = vsel %vm1746, %v1676, 0
  %v1778 = vsel %vm1746, %v1677, 0
  %v1781 = vsel %vm1746, %v1678, 0
  %v1784 = vsel %vm1746, %v1679, 0
  %v1787 = vsel %vm1746, %v1680, 0
  %v1790 = vsel %vm1746, %v1681, 0
  %v1793 = vsel %vm1746, %v1682, 0
  %v1796 = vsel %vm1746, %v1683, 0
  %v1799 = vsel %vm1746, %v1684, 0
  %v1802 = vsel %vm1746, %v1685, 0
  %v1805 = vsel %vm1746, %v1686, 0
  %v1808 = vsel %vm1746, %v1687, 0
  %v1811 = vsel %vm1746, %v1688, 0
  %v1814 = vsel %vm1746, %v1689, 0
  %v1817 = vsel %vm1746, %v1690, 0
  %v1820 = vsel %vm1746, %v1691, 0
  %v1823 = vsel %vm1746, %v1692, 0
  %v1826 = vsel %vm1746, %v1693, 0
  %v1829 = vsel %vm1746, %v1694, 0
  %v1832 = vsel %vm1746, %v1695, 0
  %v1835 = vsel %vm1746, %v1696, 0
  %v1838 = vsel %vm1746, %v1697, 0
  %v1841 = vsel %vm1746, %v1698, 0
  %v1844 = vsel %vm1746, %v1699, 0
  %v1847 = vsel %vm1746, %v1700, 0
  %v1850 = vsel %vm1746, %v1701, 0
  %v1853 = vsel %vm1746, %v1702, 0
  %v1856 = vsel %vm1746, %v1703, 0
  %v1859 = vsel %vm1746, %v1704, 0
  %v1862 = vsel %vm1746, %v1705, 0
  %v1865 = vsel %vm1746, %v1706, 0
  %v1868 = vsel %vm1746, %v1707, 0
  %v1871 = vsel %vm1746, %v1708, 0
  %v1874 = vsel %vm1746, %v1709, 0
  %v1877 = vsel %vm1746, %v1710, 0
  %v1880 = vsel %vm1746, %v1711, 0
  %v1883 = vsel %vm1746, %v1712, 0
  %v1886 = vsel %vm1746, %v1713, 0
  %v1889 = vsel %vm1746, %v1714, 0
  %v1892 = vsel %vm1746, %v1715, 0
  %v1895 = vsel %vm1746, %v1716, 0
  %v1898 = vsel %vm1746, %v1717, 0
  %v1901 = vsel %vm1746, %v1718, 0
  %v1904 = vsel %vm1746, %v1719, 0
  %v1907 = vsel %vm1746, %v1720, 0
  %v1910 = vsel %vm1746, %v1721, 0
  %v1913 = vsel %vm1746, %v1722, 0
  %v1916 = vsel %vm1746, %v1723, 0
  %v1919 = vsel %vm1746, %v1724, 0
  %v1922 = vsel %vm1746, %v1725, 0
  %v1925 = vsel %vm1746, %v1726, 0
  %v1928 = vsel %vm1746, %v1727, 0
  %v1931 = vsel %vm1746, %v1728, 0
  %v1934 = vsel %vm1746, %v1729, 0
  %v1937 = vsel %vm1746, %v1730, 0
  %1939 = vmatprep.subr.mxu0 0.0
  %1940 = vmatpush1.msra.mxu0 %v1731
  %1941 = vmatprep.subr.mxu0 0.0
  %1942 = vmatpush1.msra.mxu0 %v1732
  %1943 = vmatprep.subr.mxu0 0.0
  %1944 = vmatpush1.msra.mxu0 %v1733
  %1945 = vmatprep.subr.mxu0 0.0
  %1946 = vmatpush1.msra.mxu0 %v1734
  %1947 = vmatprep.subr.mxu0 0.0
  %1948 = vmatpush1.msra.mxu0 %v1735
  %1949 = vmatprep.subr.mxu0 0.0
  %1950 = vmatpush1.msra.mxu0 %v1736
  %1951 = vmatprep.subr.mxu0 0.0
  %1952 = vmatpush1.msra.mxu0 %v1737
  %1953 = vmatprep.subr.mxu0 0.0
  %1954 = vmatpush1.msra.mxu0 %v1738
  %1955 = vmatprep.subr.mxu0 0.0
  %1956 = vmatpush1.msra.mxu0 0.0
  %1957 = vmatprep.subr.mxu0 0.0
  %1958 = vmatpush1.msra.mxu0 0.0
  %1959 = vmatprep.subr.mxu0 0.0
  %1960 = vmatpush1.msra.mxu0 0.0
  %1961 = vmatprep.subr.mxu0 0.0
  %1962 = vmatpush1.msra.mxu0 0.0
  %1963 = vmatprep.subr.mxu0 0.0
  %1964 = vmatpush1.msra.mxu0 0.0
  %1965 = vmatprep.subr.mxu0 0.0
  %1966 = vmatpush1.msra.mxu0 0.0
  %1967 = vmatprep.subr.mxu0 0.0
  %1968 = vmatpush1.msra.mxu0 0.0
  %1969 = vmatprep.subr.mxu0 0.0
  %1970 = vmatpush1.msra.mxu0 0.0
  %1971 = vmatprep.subr.mxu0 0.0
  %1972 = vmatpush1.msra.mxu0 0.0
  %1973 = vmatprep.subr.mxu0 0.0
  %1974 = vmatpush1.msra.mxu0 0.0
  %1975 = vmatprep.subr.mxu0 0.0
  %1976 = vmatpush1.msra.mxu0 0.0
  %1977 = vmatprep.subr.mxu0 0.0
  %1978 = vmatpush1.msra.mxu0 0.0
  %1979 = vmatprep.subr.mxu0 0.0
  %1980 = vmatpush1.msra.mxu0 0.0
  %1981 = vmatprep.subr.mxu0 0.0
  %1982 = vmatpush1.msra.mxu0 0.0
  %1983 = vmatprep.subr.mxu0 0.0
  %1984 = vmatpush1.msra.mxu0 0.0
  %1985 = vmatprep.subr.mxu0 0.0
  %1986 = vmatpush1.msra.mxu0 0.0
  %1987 = vmatprep.subr.mxu0 0.0
  %1988 = vmatpush1.msra.mxu0 0.0
  %1989 = vmatprep.subr.mxu0 0.0
  %1990 = vmatpush1.msra.mxu0 0.0
  %1991 = vmatprep.subr.mxu0 0.0
  %1992 = vmatpush1.msra.mxu0 0.0
  %1993 = vmatprep.subr.mxu0 0.0
  %1994 = vmatpush1.msra.mxu0 0.0
  %1995 = vmatprep.subr.mxu0 0.0
  %1996 = vmatpush1.msra.mxu0 0.0
  %1997 = vmatprep.subr.mxu0 0.0
  %1998 = vmatpush1.msra.mxu0 0.0
  %1999 = vmatprep.subr.mxu0 0.0
  %2000 = vmatpush1.msra.mxu0 0.0
  %2001 = vmatprep.subr.mxu0 0.0
  %2002 = vmatpush1.msra.mxu0 0.0
  %2003 = vmatprep.mubr.f32.mxu0 0.0
  %2004 = vmatmul.mubr.f32.gmra.mrb[0].mxu0 %v1748
  %v2005 = vpop.f32.mrb[0].mxu0
  %v2006 = vadd.f32 %v1744, %v2005
  %v2007 = vpop.f32.mrb[0].mxu0
  %2008 = vmatprep.mubr.f32.mxu0 0.0
  %2009 = vmatmul.mubr.f32.gmra.mrb[0].mxu0 %v1751
  %v2010 = vpop.f32.mrb[0].mxu0
  %v2011 = vadd.f32 %v1744, %v2010
  %v2012 = vpop.f32.mrb[0].mxu0
  %2013 = vmatprep.mubr.f32.mxu0 0.0
  %2014 = vmatmul.mubr.f32.gmra.mrb[0].mxu0 %v1754
  %v2015 = vpop.f32.mrb[0].mxu0
  %v2016 = vadd.f32 %v1744, %v2015
  %v2017 = vpop.f32.mrb[0].mxu0
  %2018 = vmatprep.mubr.f32.mxu0 0.0
  %2019 = vmatmul.mubr.f32.gmra.mrb[0].mxu0 %v1757
  %v2020 = vpop.f32.mrb[0].mxu0
  %v2021 = vadd.f32 %v1744, %v2020
  %v2022 = vpop.f32.mrb[0].mxu0
  %2023 = vmatprep.mubr.f32.mxu0 0.0
  %2024 = vmatmul.mubr.f32.gmra.mrb[0].mxu0 %v1760
  %v2025 = vpop.f32.mrb[0].mxu0
  %v2026 = vadd.f32 %v1744, %v2025
  %v2027 = vpop.f32.mrb[0].mxu0
  %2028 = vmatprep.mubr.f32.mxu0 0.0
  %2029 = vmatmul.mubr.f32.gmra.mrb[0].mxu0 %v1763
  %v2030 = vpop.f32.mrb[0].mxu0
  %v2031 = vadd.f32 %v1744, %v2030
  %v2032 = vpop.f32.mrb[0].mxu0
  %2033 = vmatprep.mubr.f32.mxu0 0.0
  %2034 = vmatmul.mubr.f32.gmra.mrb[0].mxu0 %v1766
  %v2035 = vpop.f32.mrb[0].mxu0
  %v2036 = vadd.f32 %v1744, %v2035
  %v2037 = vpop.f32.mrb[0].mxu0
  %2038 = vmatprep.mubr.f32.mxu0 0.0
  %2039 = vmatmul.mubr.f32.gmra.mrb[0].mxu0 %v1769
  %v2040 = vpop.f32.mrb[0].mxu0
  %v2041 = vadd.f32 %v1744, %v2040
  %v2042 = vpop.f32.mrb[0].mxu0
  %2043 = vmatprep.mubr.f32.mxu0 0.0
  %2044 = vmatmul.mubr.f32.gmra.mrb[0].mxu0 %v1772
  %v2045 = vpop.f32.mrb[0].mxu0
  %v2046 = vadd.f32 %v1744, %v2045
  %v2047 = vpop.f32.mrb[0].mxu0
  %2048 = vmatprep.mubr.f32.mxu0 0.0
  %2049 = vmatmul.mubr.f32.gmra.mrb[0].mxu0 %v1775
  %v2050 = vpop.f32.mrb[0].mxu0
  %v2051 = vadd.f32 %v1744, %v2050
  %v2052 = vpop.f32.mrb[0].mxu0
  %2053 = vmatprep.mubr.f32.mxu0 0.0
  %2054 = vmatmul.mubr.f32.gmra.mrb[0].mxu0 %v1778
  %v2055 = vpop.f32.mrb[0].mxu0
  %v2056 = vadd.f32 %v1744, %v2055
  %v2057 = vpop.f32.mrb[0].mxu0
  %2058 = vmatprep.mubr.f32.mxu0 0.0
  %2059 = vmatmul.mubr.f32.gmra.mrb[0].mxu0 %v1781
  %v2060 = vpop.f32.mrb[0].mxu0
  %v2061 = vadd.f32 %v1744, %v2060
  %v2062 = vpop.f32.mrb[0].mxu0
  %2063 = vmatprep.mubr.f32.mxu0 0.0
  %2064 = vmatmul.mubr.f32.gmra.mrb[0].mxu0 %v1784
  %v2065 = vpop.f32.mrb[0].mxu0
  %v2066 = vadd.f32 %v1744, %v2065
  %v2067 = vpop.f32.mrb[0].mxu0
  %2068 = vmatprep.mubr.f32.mxu0 0.0
  %2069 = vmatmul.mubr.f32.gmra.mrb[0].mxu0 %v1787
  %v2070 = vpop.f32.mrb[0].mxu0
  %v2071 = vadd.f32 %v1744, %v2070
  %v2072 = vpop.f32.mrb[0].mxu0
  %2073 = vmatprep.mubr.f32.mxu0 0.0
  %2074 = vmatmul.mubr.f32.gmra.mrb[0].mxu0 %v1790
  %v2075 = vpop.f32.mrb[0].mxu0
  %v2076 = vadd.f32 %v1744, %v2075
  %v2077 = vpop.f32.mrb[0].mxu0
  %2078 = vmatprep.mubr.f32.mxu0 0.0
  %2079 = vmatmul.mubr.f32.gmra.mrb[0].mxu0 %v1793
  %v2080 = vpop.f32.mrb[0].mxu0
  %v2081 = vadd.f32 %v1744, %v2080
  %v2082 = vpop.f32.mrb[0].mxu0
  %2083 = vmatprep.mubr.f32.mxu0 0.0
  %2084 = vmatmul.mubr.f32.gmra.mrb[0].mxu0 %v1796
  %v2085 = vpop.f32.mrb[0].mxu0
  %v2086 = vadd.f32 %v1744, %v2085
  %v2087 = vpop.f32.mrb[0].mxu0
  %2088 = vmatprep.mubr.f32.mxu0 0.0
  %2089 = vmatmul.mubr.f32.gmra.mrb[0].mxu0 %v1799
  %v2090 = vpop.f32.mrb[0].mxu0
  %v2091 = vadd.f32 %v1744, %v2090
  %v2092 = vpop.f32.mrb[0].mxu0
  %2093 = vmatprep.mubr.f32.mxu0 0.0
  %2094 = vmatmul.mubr.f32.gmra.mrb[0].mxu0 %v1802
  %v2095 = vpop.f32.mrb[0].mxu0
  %v2096 = vadd.f32 %v1744, %v2095
  %v2097 = vpop.f32.mrb[0].mxu0
  %2098 = vmatprep.mubr.f32.mxu0 0.0
  %2099 = vmatmul.mubr.f32.gmra.mrb[0].mxu0 %v1805
  %v2100 = vpop.f32.mrb[0].mxu0
  %v2101 = vadd.f32 %v1744, %v2100
  %v2102 = vpop.f32.mrb[0].mxu0
  %2103 = vmatprep.mubr.f32.mxu0 0.0
  %2104 = vmatmul.mubr.f32.gmra.mrb[0].mxu0 %v1808
  %v2105 = vpop.f32.mrb[0].mxu0
  %v2106 = vadd.f32 %v1744, %v2105
  %v2107 = vpop.f32.mrb[0].mxu0
  %2108 = vmatprep.mubr.f32.mxu0 0.0
  %2109 = vmatmul.mubr.f32.gmra.mrb[0].mxu0 %v1811
  %v2110 = vpop.f32.mrb[0].mxu0
  %v2111 = vadd.f32 %v1744, %v2110
  %v2112 = vpop.f32.mrb[0].mxu0
  %2113 = vmatprep.mubr.f32.mxu0 0.0
  %2114 = vmatmul.mubr.f32.gmra.mrb[0].mxu0 %v1814
  %v2115 = vpop.f32.mrb[0].mxu0
  %v2116 = vadd.f32 %v1744, %v2115
  %v2117 = vpop.f32.mrb[0].mxu0
  %2118 = vmatprep.mubr.f32.mxu0 0.0
  %2119 = vmatmul.mubr.f32.gmra.mrb[0].mxu0 %v1817
  %v2120 = vpop.f32.mrb[0].mxu0
  %v2121 = vadd.f32 %v1744, %v2120
  %v2122 = vpop.f32.mrb[0].mxu0
  %2123 = vmatprep.mubr.f32.mxu0 0.0
  %2124 = vmatmul.mubr.f32.gmra.mrb[0].mxu0 %v1820
  %v2125 = vpop.f32.mrb[0].mxu0
  %v2126 = vadd.f32 %v1744, %v2125
  %v2127 = vpop.f32.mrb[0].mxu0
  %2128 = vmatprep.mubr.f32.mxu0 0.0
  %2129 = vmatmul.mubr.f32.gmra.mrb[0].mxu0 %v1823
  %v2130 = vpop.f32.mrb[0].mxu0
  %v2131 = vadd.f32 %v1744, %v2130
  %v2132 = vpop.f32.mrb[0].mxu0
  %2133 = vmatprep.mubr.f32.mxu0 0.0
  %2134 = vmatmul.mubr.f32.gmra.mrb[0].mxu0 %v1826
  %v2135 = vpop.f32.mrb[0].mxu0
  %v2136 = vadd.f32 %v1744, %v2135
  %v2137 = vpop.f32.mrb[0].mxu0
  %2138 = vmatprep.mubr.f32.mxu0 0.0
  %2139 = vmatmul.mubr.f32.gmra.mrb[0].mxu0 %v1829
  %v2140 = vpop.f32.mrb[0].mxu0
  %v2141 = vadd.f32 %v1744, %v2140
  %v2142 = vpop.f32.mrb[0].mxu0
  %2143 = vmatprep.mubr.f32.mxu0 0.0
  %2144 = vmatmul.mubr.f32.gmra.mrb[0].mxu0 %v1832
  %v2145 = vpop.f32.mrb[0].mxu0
  %v2146 = vadd.f32 %v1744, %v2145
  %v2147 = vpop.f32.mrb[0].mxu0
  %2148 = vmatprep.mubr.f32.mxu0 0.0
  %2149 = vmatmul.mubr.f32.gmra.mrb[0].mxu0 %v1835
  %v2150 = vpop.f32.mrb[0].mxu0
  %v2151 = vadd.f32 %v1744, %v2150
  %v2152 = vpop.f32.mrb[0].mxu0
  %2153 = vmatprep.mubr.f32.mxu0 0.0
  %2154 = vmatmul.mubr.f32.gmra.mrb[0].mxu0 %v1838
  %v2155 = vpop.f32.mrb[0].mxu0
  %v2156 = vadd.f32 %v1744, %v2155
  %v2157 = vpop.f32.mrb[0].mxu0
  %2158 = vmatprep.mubr.f32.mxu0 0.0
  %2159 = vmatmul.mubr.f32.gmra.mrb[0].mxu0 %v1841
  %v2160 = vpop.f32.mrb[0].mxu0
  %v2161 = vadd.f32 %v1744, %v2160
  %v2162 = vpop.f32.mrb[0].mxu0
  %2163 = vmatprep.mubr.f32.mxu0 0.0
  %2164 = vmatmul.mubr.f32.gmra.mrb[0].mxu0 %v1844
  %v2165 = vpop.f32.mrb[0].mxu0
  %v2166 = vadd.f32 %v1744, %v2165
  %v2167 = vpop.f32.mrb[0].mxu0
  %2168 = vmatprep.mubr.f32.mxu0 0.0
  %2169 = vmatmul.mubr.f32.gmra.mrb[0].mxu0 %v1847
  %v2170 = vpop.f32.mrb[0].mxu0
  %v2171 = vadd.f32 %v1744, %v2170
  %v2172 = vpop.f32.mrb[0].mxu0
  %2173 = vmatprep.mubr.f32.mxu0 0.0
  %2174 = vmatmul.mubr.f32.gmra.mrb[0].mxu0 %v1850
  %v2175 = vpop.f32.mrb[0].mxu0
  %v2176 = vadd.f32 %v1744, %v2175
  %v2177 = vpop.f32.mrb[0].mxu0
  %2178 = vmatprep.mubr.f32.mxu0 0.0
  %2179 = vmatmul.mubr.f32.gmra.mrb[0].mxu0 %v1853
  %v2180 = vpop.f32.mrb[0].mxu0
  %v2181 = vadd.f32 %v1744, %v2180
  %v2182 = vpop.f32.mrb[0].mxu0
  %2183 = vmatprep.mubr.f32.mxu0 0.0
  %2184 = vmatmul.mubr.f32.gmra.mrb[0].mxu0 %v1856
  %v2185 = vpop.f32.mrb[0].mxu0
  %v2186 = vadd.f32 %v1744, %v2185
  %v2187 = vpop.f32.mrb[0].mxu0
  %2188 = vmatprep.mubr.f32.mxu0 0.0
  %2189 = vmatmul.mubr.f32.gmra.mrb[0].mxu0 %v1859
  %v2190 = vpop.f32.mrb[0].mxu0
  %v2191 = vadd.f32 %v1744, %v2190
  %v2192 = vpop.f32.mrb[0].mxu0
  %2193 = vmatprep.mubr.f32.mxu0 0.0
  %2194 = vmatmul.mubr.f32.gmra.mrb[0].mxu0 %v1862
  %v2195 = vpop.f32.mrb[0].mxu0
  %v2196 = vadd.f32 %v1744, %v2195
  %v2197 = vpop.f32.mrb[0].mxu0
  %2198 = vmatprep.mubr.f32.mxu0 0.0
  %2199 = vmatmul.mubr.f32.gmra.mrb[0].mxu0 %v1865
  %v2200 = vpop.f32.mrb[0].mxu0
  %v2201 = vadd.f32 %v1744, %v2200
  %v2202 = vpop.f32.mrb[0].mxu0
  %2203 = vmatprep.mubr.f32.mxu0 0.0
  %2204 = vmatmul.mubr.f32.gmra.mrb[0].mxu0 %v1868
  %v2205 = vpop.f32.mrb[0].mxu0
  %v2206 = vadd.f32 %v1744, %v2205
  %v2207 = vpop.f32.mrb[0].mxu0
  %2208 = vmatprep.mubr.f32.mxu0 0.0
  %2209 = vmatmul.mubr.f32.gmra.mrb[0].mxu0 %v1871
  %v2210 = vpop.f32.mrb[0].mxu0
  %v2211 = vadd.f32 %v1744, %v2210
  %v2212 = vpop.f32.mrb[0].mxu0
  %2213 = vmatprep.mubr.f32.mxu0 0.0
  %2214 = vmatmul.mubr.f32.gmra.mrb[0].mxu0 %v1874
  %v2215 = vpop.f32.mrb[0].mxu0
  %v2216 = vadd.f32 %v1744, %v2215
  %v2217 = vpop.f32.mrb[0].mxu0
  %2218 = vmatprep.mubr.f32.mxu0 0.0
  %2219 = vmatmul.mubr.f32.gmra.mrb[0].mxu0 %v1877
  %v2220 = vpop.f32.mrb[0].mxu0
  %v2221 = vadd.f32 %v1744, %v2220
  %v2222 = vpop.f32.mrb[0].mxu0
  %2223 = vmatprep.mubr.f32.mxu0 0.0
  %2224 = vmatmul.mubr.f32.gmra.mrb[0].mxu0 %v1880
  %v2225 = vpop.f32.mrb[0].mxu0
  %v2226 = vadd.f32 %v1744, %v2225
  %v2227 = vpop.f32.mrb[0].mxu0
  %2228 = vmatprep.mubr.f32.mxu0 0.0
  %2229 = vmatmul.mubr.f32.gmra.mrb[0].mxu0 %v1883
  %v2230 = vpop.f32.mrb[0].mxu0
  %v2231 = vadd.f32 %v1744, %v2230
  %v2232 = vpop.f32.mrb[0].mxu0
  %2233 = vmatprep.mubr.f32.mxu0 0.0
  %2234 = vmatmul.mubr.f32.gmra.mrb[0].mxu0 %v1886
  %v2235 = vpop.f32.mrb[0].mxu0
  %v2236 = vadd.f32 %v1744, %v2235
  %v2237 = vpop.f32.mrb[0].mxu0
  %2238 = vmatprep.mubr.f32.mxu0 0.0
  %2239 = vmatmul.mubr.f32.gmra.mrb[0].mxu0 %v1889
  %v2240 = vpop.f32.mrb[0].mxu0
  %v2241 = vadd.f32 %v1744, %v2240
  %v2242 = vpop.f32.mrb[0].mxu0
  %2243 = vmatprep.mubr.f32.mxu0 0.0
  %2244 = vmatmul.mubr.f32.gmra.mrb[0].mxu0 %v1892
  %v2245 = vpop.f32.mrb[0].mxu0
  %v2246 = vadd.f32 %v1744, %v2245
  %v2247 = vpop.f32.mrb[0].mxu0
  %2248 = vmatprep.mubr.f32.mxu0 0.0
  %2249 = vmatmul.mubr.f32.gmra.mrb[0].mxu0 %v1895
  %v2250 = vpop.f32.mrb[0].mxu0
  %v2251 = vadd.f32 %v1744, %v2250
  %v2252 = vpop.f32.mrb[0].mxu0
  %2253 = vmatprep.mubr.f32.mxu0 0.0
  %2254 = vmatmul.mubr.f32.gmra.mrb[0].mxu0 %v1898
  %v2255 = vpop.f32.mrb[0].mxu0
  %v2256 = vadd.f32 %v1744, %v2255
  %v2257 = vpop.f32.mrb[0].mxu0
  %2258 = vmatprep.mubr.f32.mxu0 0.0
  %2259 = vmatmul.mubr.f32.gmra.mrb[0].mxu0 %v1901
  %v2260 = vpop.f32.mrb[0].mxu0
  %v2261 = vadd.f32 %v1744, %v2260
  %v2262 = vpop.f32.mrb[0].mxu0
  %2263 = vmatprep.mubr.f32.mxu0 0.0
  %2264 = vmatmul.mubr.f32.gmra.mrb[0].mxu0 %v1904
  %v2265 = vpop.f32.mrb[0].mxu0
  %v2266 = vadd.f32 %v1744, %v2265
  %v2267 = vpop.f32.mrb[0].mxu0
  %2268 = vmatprep.mubr.f32.mxu0 0.0
  %2269 = vmatmul.mubr.f32.gmra.mrb[0].mxu0 %v1907
  %v2270 = vpop.f32.mrb[0].mxu0
  %v2271 = vadd.f32 %v1744, %v2270
  %v2272 = vpop.f32.mrb[0].mxu0
  %2273 = vmatprep.mubr.f32.mxu0 0.0
  %2274 = vmatmul.mubr.f32.gmra.mrb[0].mxu0 %v1910
  %v2275 = vpop.f32.mrb[0].mxu0
  %v2276 = vadd.f32 %v1744, %v2275
  %v2277 = vpop.f32.mrb[0].mxu0
  %2278 = vmatprep.mubr.f32.mxu0 0.0
  %2279 = vmatmul.mubr.f32.gmra.mrb[0].mxu0 %v1913
  %v2280 = vpop.f32.mrb[0].mxu0
  %v2281 = vadd.f32 %v1744, %v2280
  %v2282 = vpop.f32.mrb[0].mxu0
  %2283 = vmatprep.mubr.f32.mxu0 0.0
  %2284 = vmatmul.mubr.f32.gmra.mrb[0].mxu0 %v1916
  %v2285 = vpop.f32.mrb[0].mxu0
  %v2286 = vadd.f32 %v1744, %v2285
  %v2287 = vpop.f32.mrb[0].mxu0
  %2288 = vmatprep.mubr.f32.mxu0 0.0
  %2289 = vmatmul.mubr.f32.gmra.mrb[0].mxu0 %v1919
  %v2290 = vpop.f32.mrb[0].mxu0
  %v2291 = vadd.f32 %v1744, %v2290
  %v2292 = vpop.f32.mrb[0].mxu0
  %2293 = vmatprep.mubr.f32.mxu0 0.0
  %2294 = vmatmul.mubr.f32.gmra.mrb[0].mxu0 %v1922
  %v2295 = vpop.f32.mrb[0].mxu0
  %v2296 = vadd.f32 %v1744, %v2295
  %v2297 = vpop.f32.mrb[0].mxu0
  %2298 = vmatprep.mubr.f32.mxu0 0.0
  %2299 = vmatmul.mubr.f32.gmra.mrb[0].mxu0 %v1925
  %v2300 = vpop.f32.mrb[0].mxu0
  %v2301 = vadd.f32 %v1744, %v2300
  %v2302 = vpop.f32.mrb[0].mxu0
  %2303 = vmatprep.mubr.f32.mxu0 0.0
  %2304 = vmatmul.mubr.f32.gmra.mrb[0].mxu0 %v1928
  %v2305 = vpop.f32.mrb[0].mxu0
  %v2306 = vadd.f32 %v1744, %v2305
  %v2307 = vpop.f32.mrb[0].mxu0
  %2308 = vmatprep.mubr.f32.mxu0 0.0
  %2309 = vmatmul.mubr.f32.gmra.mrb[0].mxu0 %v1931
  %v2310 = vpop.f32.mrb[0].mxu0
  %v2311 = vadd.f32 %v1744, %v2310
  %v2312 = vpop.f32.mrb[0].mxu0
  %2313 = vmatprep.mubr.f32.mxu0 0.0
  %2314 = vmatmul.mubr.f32.gmra.mrb[0].mxu0 %v1934
  %v2315 = vpop.f32.mrb[0].mxu0
  %v2316 = vadd.f32 %v1744, %v2315
  %v2317 = vpop.f32.mrb[0].mxu0
  %2318 = vmatprep.mubr.f32.mxu0 0.0
  %2319 = vmatmul.mubr.f32.gmra.mrb[0].mxu0 %v1937
  %v2320 = vpop.f32.mrb[0].mxu0
  %v2321 = vadd.f32 %v1744, %v2320
  %v2322 = vpop.f32.mrb[0].mxu0
  %2323 = vdwg.mxu0
  %v2324 = vmul.f32 %v2006, 0.5
  %v2325 = vmul.f32 %v2011, 0.5
  %v2326 = vmul.f32 %v2016, 0.5
  %v2327 = vmul.f32 %v2021, 0.5
  %v2328 = vmul.f32 %v2026, 0.5
  %v2329 = vmul.f32 %v2031, 0.5
  %v2330 = vmul.f32 %v2036, 0.5
  %v2331 = vmul.f32 %v2041, 0.5
  %v2332 = vmul.f32 %v2046, 0.5
  %v2333 = vmul.f32 %v2051, 0.5
  %v2334 = vmul.f32 %v2056, 0.5
  %v2335 = vmul.f32 %v2061, 0.5
  %v2336 = vmul.f32 %v2066, 0.5
  %v2337 = vmul.f32 %v2071, 0.5
  %v2338 = vmul.f32 %v2076, 0.5
  %v2339 = vmul.f32 %v2081, 0.5
  %v2340 = vmul.f32 %v2086, 0.5
  %v2341 = vmul.f32 %v2091, 0.5
  %v2342 = vmul.f32 %v2096, 0.5
  %v2343 = vmul.f32 %v2101, 0.5
  %v2344 = vmul.f32 %v2106, 0.5
  %v2345 = vmul.f32 %v2111, 0.5
  %v2346 = vmul.f32 %v2116, 0.5
  %v2347 = vmul.f32 %v2121, 0.5
  %v2348 = vmul.f32 %v2126, 0.5
  %v2349 = vmul.f32 %v2131, 0.5
  %v2350 = vmul.f32 %v2136, 0.5
  %v2351 = vmul.f32 %v2141, 0.5
  %v2352 = vmul.f32 %v2146, 0.5
  %v2353 = vmul.f32 %v2151, 0.5
  %v2354 = vmul.f32 %v2156, 0.5
  %v2355 = vmul.f32 %v2161, 0.5
  %v2356 = vmul.f32 %v2166, 0.5
  %v2357 = vmul.f32 %v2171, 0.5
  %v2358 = vmul.f32 %v2176, 0.5
  %v2359 = vmul.f32 %v2181, 0.5
  %v2360 = vmul.f32 %v2186, 0.5
  %v2361 = vmul.f32 %v2191, 0.5
  %v2362 = vmul.f32 %v2196, 0.5
  %v2363 = vmul.f32 %v2201, 0.5
  %v2364 = vmul.f32 %v2206, 0.5
  %v2365 = vmul.f32 %v2211, 0.5
  %v2366 = vmul.f32 %v2216, 0.5
  %v2367 = vmul.f32 %v2221, 0.5
  %v2368 = vmul.f32 %v2226, 0.5
  %v2369 = vmul.f32 %v2231, 0.5
  %v2370 = vmul.f32 %v2236, 0.5
  %v2371 = vmul.f32 %v2241, 0.5
  %v2372 = vmul.f32 %v2246, 0.5
  %v2373 = vmul.f32 %v2251, 0.5
  %v2374 = vmul.f32 %v2256, 0.5
  %v2375 = vmul.f32 %v2261, 0.5
  %v2376 = vmul.f32 %v2266, 0.5
  %v2377 = vmul.f32 %v2271, 0.5
  %v2378 = vmul.f32 %v2276, 0.5
  %v2379 = vmul.f32 %v2281, 0.5
  %v2380 = vmul.f32 %v2286, 0.5
  %v2381 = vmul.f32 %v2291, 0.5
  %v2382 = vmul.f32 %v2296, 0.5
  %v2383 = vmul.f32 %v2301, 0.5
  %v2384 = vmul.f32 %v2306, 0.5
  %v2385 = vmul.f32 %v2311, 0.5
  %v2386 = vmul.f32 %v2316, 0.5
  %v2387 = vmul.f32 %v2321, 0.5
  %v2388 = vmul.f32 %v2006, 0.70710677
  %v2389 = vmul.f32 %v2011, 0.70710677
  %v2390 = vmul.f32 %v2016, 0.70710677
  %v2391 = vmul.f32 %v2021, 0.70710677
  %v2392 = vmul.f32 %v2026, 0.70710677
  %v2393 = vmul.f32 %v2031, 0.70710677
  %v2394 = vmul.f32 %v2036, 0.70710677
  %v2395 = vmul.f32 %v2041, 0.70710677
  %v2396 = vmul.f32 %v2046, 0.70710677
  %v2397 = vmul.f32 %v2051, 0.70710677
  %v2398 = vmul.f32 %v2056, 0.70710677
  %v2399 = vmul.f32 %v2061, 0.70710677
  %v2400 = vmul.f32 %v2066, 0.70710677
  %v2401 = vmul.f32 %v2071, 0.70710677
  %v2402 = vmul.f32 %v2076, 0.70710677
  %v2403 = vmul.f32 %v2081, 0.70710677
  %v2404 = vmul.f32 %v2086, 0.70710677
  %v2405 = vmul.f32 %v2091, 0.70710677
  %v2406 = vmul.f32 %v2096, 0.70710677
  %v2407 = vmul.f32 %v2101, 0.70710677
  %v2408 = vmul.f32 %v2106, 0.70710677
  %v2409 = vmul.f32 %v2111, 0.70710677
  %v2410 = vmul.f32 %v2116, 0.70710677
  %v2411 = vmul.f32 %v2121, 0.70710677
  %v2412 = vmul.f32 %v2126, 0.70710677
  %v2413 = vmul.f32 %v2131, 0.70710677
  %v2414 = vmul.f32 %v2136, 0.70710677
  %v2415 = vmul.f32 %v2141, 0.70710677
  %v2416 = vmul.f32 %v2146, 0.70710677
  %v2417 = vmul.f32 %v2151, 0.70710677
  %v2418 = vmul.f32 %v2156, 0.70710677
  %v2419 = vmul.f32 %v2161, 0.70710677
  %v2420 = vmul.f32 %v2166, 0.70710677
  %v2421 = vmul.f32 %v2171, 0.70710677
  %v2422 = vmul.f32 %v2176, 0.70710677
  %v2423 = vmul.f32 %v2181, 0.70710677
  %v2424 = vmul.f32 %v2186, 0.70710677
  %v2425 = vmul.f32 %v2191, 0.70710677
  %v2426 = vmul.f32 %v2196, 0.70710677
  %v2427 = vmul.f32 %v2201, 0.70710677
  %v2428 = vmul.f32 %v2206, 0.70710677
  %v2429 = vmul.f32 %v2211, 0.70710677
  %v2430 = vmul.f32 %v2216, 0.70710677
  %v2431 = vmul.f32 %v2221, 0.70710677
  %v2432 = vmul.f32 %v2226, 0.70710677
  %v2433 = vmul.f32 %v2231, 0.70710677
  %v2434 = vmul.f32 %v2236, 0.70710677
  %v2435 = vmul.f32 %v2241, 0.70710677
  %v2436 = vmul.f32 %v2246, 0.70710677
  %v2437 = vmul.f32 %v2251, 0.70710677
  %v2438 = vmul.f32 %v2256, 0.70710677
  %v2439 = vmul.f32 %v2261, 0.70710677
  %v2440 = vmul.f32 %v2266, 0.70710677
  %v2441 = vmul.f32 %v2271, 0.70710677
  %v2442 = vmul.f32 %v2276, 0.70710677
  %v2443 = vmul.f32 %v2281, 0.70710677
  %v2444 = vmul.f32 %v2286, 0.70710677
  %v2445 = vmul.f32 %v2291, 0.70710677
  %v2446 = vmul.f32 %v2296, 0.70710677
  %v2447 = vmul.f32 %v2301, 0.70710677
  %v2448 = vmul.f32 %v2306, 0.70710677
  %v2449 = vmul.f32 %v2311, 0.70710677
  %v2450 = vmul.f32 %v2316, 0.70710677
  %v2451 = vmul.f32 %v2321, 0.70710677
  %v2452 = verf.f32.pop %v2388
  %v2453 = verf.f32.pop %v2389
  %v2454 = verf.f32.pop %v2390
  %v2455 = verf.f32.pop %v2391
  %v2456 = verf.f32.pop %v2392
  %v2457 = verf.f32.pop %v2393
  %v2458 = verf.f32.pop %v2394
  %v2459 = verf.f32.pop %v2395
  %v2460 = verf.f32.pop %v2396
  %v2461 = verf.f32.pop %v2397
  %v2462 = verf.f32.pop %v2398
  %v2463 = verf.f32.pop %v2399
  %v2464 = verf.f32.pop %v2400
  %v2465 = verf.f32.pop %v2401
  %v2466 = verf.f32.pop %v2402
  %v2467 = verf.f32.pop %v2403
  %v2468 = verf.f32.pop %v2404
  %v2469 = verf.f32.pop %v2405
  %v2470 = verf.f32.pop %v2406
  %v2471 = verf.f32.pop %v2407
  %v2472 = verf.f32.pop %v2408
  %v2473 = verf.f32.pop %v2409
  %v2474 = verf.f32.pop %v2410
  %v2475 = verf.f32.pop %v2411
  %v2476 = verf.f32.pop %v2412
  %v2477 = verf.f32.pop %v2413
  %v2478 = verf.f32.pop %v2414
  %v2479 = verf.f32.pop %v2415
  %v2480 = verf.f32.pop %v2416
  %v2481 = verf.f32.pop %v2417
  %v2482 = verf.f32.pop %v2418
  %v2483 = verf.f32.pop %v2419
  %v2484 = verf.f32.pop %v2420
  %v2485 = verf.f32.pop %v2421
  %v2486 = verf.f32.pop %v2422
  %v2487 = verf.f32.pop %v2423
  %v2488 = verf.f32.pop %v2424
  %v2489 = verf.f32.pop %v2425
  %v2490 = verf.f32.pop %v2426
  %v2491 = verf.f32.pop %v2427
  %v2492 = verf.f32.pop %v2428
  %v2493 = verf.f32.pop %v2429
  %v2494 = verf.f32.pop %v2430
  %v2495 = verf.f32.pop %v2431
  %v2496 = verf.f32.pop %v2432
  %v2497 = verf.f32.pop %v2433
  %v2498 = verf.f32.pop %v2434
  %v2499 = verf.f32.pop %v2435
  %v2500 = verf.f32.pop %v2436
  %v2501 = verf.f32.pop %v2437
  %v2502 = verf.f32.pop %v2438
  %v2503 = verf.f32.pop %v2439
  %v2504 = verf.f32.pop %v2440
  %v2505 = verf.f32.pop %v2441
  %v2506 = verf.f32.pop %v2442
  %v2507 = verf.f32.pop %v2443
  %v2508 = verf.f32.pop %v2444
  %v2509 = verf.f32.pop %v2445
  %v2510 = verf.f32.pop %v2446
  %v2511 = verf.f32.pop %v2447
  %v2512 = verf.f32.pop %v2448
  %v2513 = verf.f32.pop %v2449
  %v2514 = verf.f32.pop %v2450
  %v2515 = verf.f32.pop %v2451
  %v2516 = vadd.f32 %v2452, 1.0
  %v2517 = vadd.f32 %v2453, 1.0
  %v2518 = vadd.f32 %v2454, 1.0
  %v2519 = vadd.f32 %v2455, 1.0
  %v2520 = vadd.f32 %v2456, 1.0
  %v2521 = vadd.f32 %v2457, 1.0
  %v2522 = vadd.f32 %v2458, 1.0
  %v2523 = vadd.f32 %v2459, 1.0
  %v2524 = vadd.f32 %v2460, 1.0
  %v2525 = vadd.f32 %v2461, 1.0
  %v2526 = vadd.f32 %v2462, 1.0
  %v2527 = vadd.f32 %v2463, 1.0
  %v2528 = vadd.f32 %v2464, 1.0
  %v2529 = vadd.f32 %v2465, 1.0
  %v2530 = vadd.f32 %v2466, 1.0
  %v2531 = vadd.f32 %v2467, 1.0
  %v2532 = vadd.f32 %v2468, 1.0
  %v2533 = vadd.f32 %v2469, 1.0
  %v2534 = vadd.f32 %v2470, 1.0
  %v2535 = vadd.f32 %v2471, 1.0
  %v2536 = vadd.f32 %v2472, 1.0
  %v2537 = vadd.f32 %v2473, 1.0
  %v2538 = vadd.f32 %v2474, 1.0
  %v2539 = vadd.f32 %v2475, 1.0
  %v2540 = vadd.f32 %v2476, 1.0
  %v2541 = vadd.f32 %v2477, 1.0
  %v2542 = vadd.f32 %v2478, 1.0
  %v2543 = vadd.f32 %v2479, 1.0
  %v2544 = vadd.f32 %v2480, 1.0
  %v2545 = vadd.f32 %v2481, 1.0
  %v2546 = vadd.f32 %v2482, 1.0
  %v2547 = vadd.f32 %v2483, 1.0
  %v2548 = vadd.f32 %v2484, 1.0
  %v2549 = vadd.f32 %v2485, 1.0
  %v2550 = vadd.f32 %v2486, 1.0
  %v2551 = vadd.f32 %v2487, 1.0
  %v2552 = vadd.f32 %v2488, 1.0
  %v2553 = vadd.f32 %v2489, 1.0
  %v2554 = vadd.f32 %v2490, 1.0
  %v2555 = vadd.f32 %v2491, 1.0
  %v2556 = vadd.f32 %v2492, 1.0
  %v2557 = vadd.f32 %v2493, 1.0
  %v2558 = vadd.f32 %v2494, 1.0
  %v2559 = vadd.f32 %v2495, 1.0
  %v2560 = vadd.f32 %v2496, 1.0
  %v2561 = vadd.f32 %v2497, 1.0
  %v2562 = vadd.f32 %v2498, 1.0
  %v2563 = vadd.f32 %v2499, 1.0
  %v2564 = vadd.f32 %v2500, 1.0
  %v2565 = vadd.f32 %v2501, 1.0
  %v2566 = vadd.f32 %v2502, 1.0
  %v2567 = vadd.f32 %v2503, 1.0
  %v2568 = vadd.f32 %v2504, 1.0
  %v2569 = vadd.f32 %v2505, 1.0
  %v2570 = vadd.f32 %v2506, 1.0
  %v2571 = vadd.f32 %v2507, 1.0
  %v2572 = vadd.f32 %v2508, 1.0
  %v2573 = vadd.f32 %v2509, 1.0
  %v2574 = vadd.f32 %v2510, 1.0
  %v2575 = vadd.f32 %v2511, 1.0
  %v2576 = vadd.f32 %v2512, 1.0
  %v2577 = vadd.f32 %v2513, 1.0
  %v2578 = vadd.f32 %v2514, 1.0
  %v2579 = vadd.f32 %v2515, 1.0
  %v2580 = vmul.f32 %v2324, %v2516
  %v2581 = vmul.f32 %v2325, %v2517
  %v2582 = vmul.f32 %v2326, %v2518
  %v2583 = vmul.f32 %v2327, %v2519
  %v2584 = vmul.f32 %v2328, %v2520
  %v2585 = vmul.f32 %v2329, %v2521
  %v2586 = vmul.f32 %v2330, %v2522
  %v2587 = vmul.f32 %v2331, %v2523
  %v2588 = vmul.f32 %v2332, %v2524
  %v2589 = vmul.f32 %v2333, %v2525
  %v2590 = vmul.f32 %v2334, %v2526
  %v2591 = vmul.f32 %v2335, %v2527
  %v2592 = vmul.f32 %v2336, %v2528
  %v2593 = vmul.f32 %v2337, %v2529
  %v2594 = vmul.f32 %v2338, %v2530
  %v2595 = vmul.f32 %v2339, %v2531
  %v2596 = vmul.f32 %v2340, %v2532
  %v2597 = vmul.f32 %v2341, %v2533
  %v2598 = vmul.f32 %v2342, %v2534
  %v2599 = vmul.f32 %v2343, %v2535
  %v2600 = vmul.f32 %v2344, %v2536
  %v2601 = vmul.f32 %v2345, %v2537
  %v2602 = vmul.f32 %v2346, %v2538
  %v2603 = vmul.f32 %v2347, %v2539
  %v2604 = vmul.f32 %v2348, %v2540
  %v2605 = vmul.f32 %v2349, %v2541
  %v2606 = vmul.f32 %v2350, %v2542
  %v2607 = vmul.f32 %v2351, %v2543
  %v2608 = vmul.f32 %v2352, %v2544
  %v2609 = vmul.f32 %v2353, %v2545
  %v2610 = vmul.f32 %v2354, %v2546
  %v2611 = vmul.f32 %v2355, %v2547
  %v2612 = vmul.f32 %v2356, %v2548
  %v2613 = vmul.f32 %v2357, %v2549
  %v2614 = vmul.f32 %v2358, %v2550
  %v2615 = vmul.f32 %v2359, %v2551
  %v2616 = vmul.f32 %v2360, %v2552
  %v2617 = vmul.f32 %v2361, %v2553
  %v2618 = vmul.f32 %v2362, %v2554
  %v2619 = vmul.f32 %v2363, %v2555
  %v2620 = vmul.f32 %v2364, %v2556
  %v2621 = vmul.f32 %v2365, %v2557
  %v2622 = vmul.f32 %v2366, %v2558
  %v2623 = vmul.f32 %v2367, %v2559
  %v2624 = vmul.f32 %v2368, %v2560
  %v2625 = vmul.f32 %v2369, %v2561
  %v2626 = vmul.f32 %v2370, %v2562
  %v2627 = vmul.f32 %v2371, %v2563
  %v2628 = vmul.f32 %v2372, %v2564
  %v2629 = vmul.f32 %v2373, %v2565
  %v2630 = vmul.f32 %v2374, %v2566
  %v2631 = vmul.f32 %v2375, %v2567
  %v2632 = vmul.f32 %v2376, %v2568
  %v2633 = vmul.f32 %v2377, %v2569
  %v2634 = vmul.f32 %v2378, %v2570
  %v2635 = vmul.f32 %v2379, %v2571
  %v2636 = vmul.f32 %v2380, %v2572
  %v2637 = vmul.f32 %v2381, %v2573
  %v2638 = vmul.f32 %v2382, %v2574
  %v2639 = vmul.f32 %v2383, %v2575
  %v2640 = vmul.f32 %v2384, %v2576
  %v2641 = vmul.f32 %v2385, %v2577
  %v2642 = vmul.f32 %v2386, %v2578
  %v2643 = vmul.f32 %v2387, %v2579
  %v2644 = vld [vmem:[%s7] sm:$0xff]
  %v2645 = vld [vmem:[%s7 + $0x8] sm:$0xff]
  %v2646 = vld [vmem:[%s7 + $0x10] sm:$0xff]
  %v2647 = vld [vmem:[%s7 + $0x18] sm:$0xff]
  %v2648 = vld [vmem:[%s8] sm:$0x1]
  %v2650 = vlaneseq
  %v2651 = vshrl.u32 %v2650, 7
  %v2652 = vsub.s32 0, %v2651
  %v2653 = vrot.slane %v2648, %v2652
  %v2656 = vsel %vm185, %v2580, 0
  %v2659 = vsel %vm185, %v2581, 0
  %v2662 = vsel %vm185, %v2582, 0
  %v2665 = vsel %vm185, %v2583, 0
  %v2668 = vsel %vm185, %v2584, 0
  %v2671 = vsel %vm185, %v2585, 0
  %v2674 = vsel %vm185, %v2586, 0
  %v2677 = vsel %vm185, %v2587, 0
  %v2680 = vsel %vm185, %v2588, 0
  %v2683 = vsel %vm185, %v2589, 0
  %v2686 = vsel %vm185, %v2590, 0
  %v2689 = vsel %vm185, %v2591, 0
  %v2692 = vsel %vm185, %v2592, 0
  %v2695 = vsel %vm185, %v2593, 0
  %v2698 = vsel %vm185, %v2594, 0
  %v2701 = vsel %vm185, %v2595, 0
  %v2704 = vsel %vm185, %v2596, 0
  %v2707 = vsel %vm185, %v2597, 0
  %v2710 = vsel %vm185, %v2598, 0
  %v2713 = vsel %vm185, %v2599, 0
  %v2716 = vsel %vm185, %v2600, 0
  %v2719 = vsel %vm185, %v2601, 0
  %v2722 = vsel %vm185, %v2602, 0
  %v2725 = vsel %vm185, %v2603, 0
  %v2728 = vsel %vm185, %v2604, 0
  %v2731 = vsel %vm185, %v2605, 0
  %v2734 = vsel %vm185, %v2606, 0
  %v2737 = vsel %vm185, %v2607, 0
  %v2740 = vsel %vm185, %v2608, 0
  %v2743 = vsel %vm185, %v2609, 0
  %v2746 = vsel %vm185, %v2610, 0
  %v2749 = vsel %vm185, %v2611, 0
  %v2752 = vsel %vm185, %v2612, 0
  %v2755 = vsel %vm185, %v2613, 0
  %v2758 = vsel %vm185, %v2614, 0
  %v2761 = vsel %vm185, %v2615, 0
  %v2764 = vsel %vm185, %v2616, 0
  %v2767 = vsel %vm185, %v2617, 0
  %v2770 = vsel %vm185, %v2618, 0
  %v2773 = vsel %vm185, %v2619, 0
  %v2776 = vsel %vm185, %v2620, 0
  %v2779 = vsel %vm185, %v2621, 0
  %v2782 = vsel %vm185, %v2622, 0
  %v2785 = vsel %vm185, %v2623, 0
  %v2788 = vsel %vm185, %v2624, 0
  %v2791 = vsel %vm185, %v2625, 0
  %v2794 = vsel %vm185, %v2626, 0
  %v2797 = vsel %vm185, %v2627, 0
  %v2800 = vsel %vm185, %v2628, 0
  %v2803 = vsel %vm185, %v2629, 0
  %v2806 = vsel %vm185, %v2630, 0
  %v2809 = vsel %vm185, %v2631, 0
  %v2812 = vsel %vm185, %v2632, 0
  %v2815 = vsel %vm185, %v2633, 0
  %v2818 = vsel %vm185, %v2634, 0
  %v2821 = vsel %vm185, %v2635, 0
  %v2824 = vsel %vm185, %v2636, 0
  %v2827 = vsel %vm185, %v2637, 0
  %v2830 = vsel %vm185, %v2638, 0
  %v2833 = vsel %vm185, %v2639, 0
  %v2836 = vsel %vm185, %v2640, 0
  %v2839 = vsel %vm185, %v2641, 0
  %v2842 = vsel %vm185, %v2642, 0
  %v2845 = vsel %vm185, %v2643, 0
  %2847 = vmatprep.subr.mxu0 0.0
  %2848 = vmatpush1.msra.mxu0 %v2644
  %2849 = vmatprep.subr.mxu0 0.0
  %2850 = vmatpush1.msra.mxu0 %v2645
  %2851 = vmatprep.subr.mxu0 0.0
  %2852 = vmatpush1.msra.mxu0 %v2646
  %2853 = vmatprep.subr.mxu0 0.0
  %2854 = vmatpush1.msra.mxu0 %v2647
  %2855 = vmatprep.subr.mxu0 0.0
  %2856 = vmatpush1.msra.mxu0 0.0
  %2857 = vmatprep.subr.mxu0 0.0
  %2858 = vmatpush1.msra.mxu0 0.0
  %2859 = vmatprep.subr.mxu0 0.0
  %2860 = vmatpush1.msra.mxu0 0.0
  %2861 = vmatprep.subr.mxu0 0.0
  %2862 = vmatpush1.msra.mxu0 0.0
  %2863 = vmatprep.subr.mxu0 0.0
  %2864 = vmatpush1.msra.mxu0 0.0
  %2865 = vmatprep.subr.mxu0 0.0
  %2866 = vmatpush1.msra.mxu0 0.0
  %2867 = vmatprep.subr.mxu0 0.0
  %2868 = vmatpush1.msra.mxu0 0.0
  %2869 = vmatprep.subr.mxu0 0.0
  %2870 = vmatpush1.msra.mxu0 0.0
  %2871 = vmatprep.subr.mxu0 0.0
  %2872 = vmatpush1.msra.mxu0 0.0
  %2873 = vmatprep.subr.mxu0 0.0
  %2874 = vmatpush1.msra.mxu0 0.0
  %2875 = vmatprep.subr.mxu0 0.0
  %2876 = vmatpush1.msra.mxu0 0.0
  %2877 = vmatprep.subr.mxu0 0.0
  %2878 = vmatpush1.msra.mxu0 0.0
  %2879 = vmatprep.subr.mxu0 0.0
  %2880 = vmatpush1.msra.mxu0 0.0
  %2881 = vmatprep.subr.mxu0 0.0
  %2882 = vmatpush1.msra.mxu0 0.0
  %2883 = vmatprep.subr.mxu0 0.0
  %2884 = vmatpush1.msra.mxu0 0.0
  %2885 = vmatprep.subr.mxu0 0.0
  %2886 = vmatpush1.msra.mxu0 0.0
  %2887 = vmatprep.subr.mxu0 0.0
  %2888 = vmatpush1.msra.mxu0 0.0
  %2889 = vmatprep.subr.mxu0 0.0
  %2890 = vmatpush1.msra.mxu0 0.0
  %2891 = vmatprep.subr.mxu0 0.0
  %2892 = vmatpush1.msra.mxu0 0.0
  %2893 = vmatprep.subr.mxu0 0.0
  %2894 = vmatpush1.msra.mxu0 0.0
  %2895 = vmatprep.subr.mxu0 0.0
  %2896 = vmatpush1.msra.mxu0 0.0
  %2897 = vmatprep.subr.mxu0 0.0
  %2898 = vmatpush1.msra.mxu0 0.0
  %2899 = vmatprep.subr.mxu0 0.0
  %2900 = vmatpush1.msra.mxu0 0.0
  %2901 = vmatprep.subr.mxu0 0.0
  %2902 = vmatpush1.msra.mxu0 0.0
  %2903 = vmatprep.subr.mxu0 0.0
  %2904 = vmatpush1.msra.mxu0 0.0
  %2905 = vmatprep.subr.mxu0 0.0
  %2906 = vmatpush1.msra.mxu0 0.0
  %2907 = vmatprep.subr.mxu0 0.0
  %2908 = vmatpush1.msra.mxu0 0.0
  %2909 = vmatprep.subr.mxu0 0.0
  %2910 = vmatpush1.msra.mxu0 0.0
  %2911 = vmatprep.mubr.f32.mxu0 0.0
  %2912 = vmatmul.mubr.f32.gmra.mrb[0].mxu0 %v2656
  %v2913 = vpop.f32.mrb[0].mxu0
  %v2914 = vadd.f32 %v2653, %v2913
  %v2915 = vpop.f32.mrb[0].mxu0
  %2916 = vmatprep.mubr.f32.mxu0 0.0
  %2917 = vmatmul.mubr.f32.gmra.mrb[0].mxu0 %v2659
  %v2918 = vpop.f32.mrb[0].mxu0
  %v2919 = vadd.f32 %v2653, %v2918
  %v2920 = vpop.f32.mrb[0].mxu0
  %2921 = vmatprep.mubr.f32.mxu0 0.0
  %2922 = vmatmul.mubr.f32.gmra.mrb[0].mxu0 %v2662
  %v2923 = vpop.f32.mrb[0].mxu0
  %v2924 = vadd.f32 %v2653, %v2923
  %v2925 = vpop.f32.mrb[0].mxu0
  %2926 = vmatprep.mubr.f32.mxu0 0.0
  %2927 = vmatmul.mubr.f32.gmra.mrb[0].mxu0 %v2665
  %v2928 = vpop.f32.mrb[0].mxu0
  %v2929 = vadd.f32 %v2653, %v2928
  %v2930 = vpop.f32.mrb[0].mxu0
  %2931 = vmatprep.mubr.f32.mxu0 0.0
  %2932 = vmatmul.mubr.f32.gmra.mrb[0].mxu0 %v2668
  %v2933 = vpop.f32.mrb[0].mxu0
  %v2934 = vadd.f32 %v2653, %v2933
  %v2935 = vpop.f32.mrb[0].mxu0
  %2936 = vmatprep.mubr.f32.mxu0 0.0
  %2937 = vmatmul.mubr.f32.gmra.mrb[0].mxu0 %v2671
  %v2938 = vpop.f32.mrb[0].mxu0
  %v2939 = vadd.f32 %v2653, %v2938
  %v2940 = vpop.f32.mrb[0].mxu0
  %2941 = vmatprep.mubr.f32.mxu0 0.0
  %2942 = vmatmul.mubr.f32.gmra.mrb[0].mxu0 %v2674
  %v2943 = vpop.f32.mrb[0].mxu0
  %v2944 = vadd.f32 %v2653, %v2943
  %v2945 = vpop.f32.mrb[0].mxu0
  %2946 = vmatprep.mubr.f32.mxu0 0.0
  %2947 = vmatmul.mubr.f32.gmra.mrb[0].mxu0 %v2677
  %v2948 = vpop.f32.mrb[0].mxu0
  %v2949 = vadd.f32 %v2653, %v2948
  %v2950 = vpop.f32.mrb[0].mxu0
  %2951 = vmatprep.mubr.f32.mxu0 0.0
  %2952 = vmatmul.mubr.f32.gmra.mrb[0].mxu0 %v2680
  %v2953 = vpop.f32.mrb[0].mxu0
  %v2954 = vadd.f32 %v2653, %v2953
  %v2955 = vpop.f32.mrb[0].mxu0
  %2956 = vmatprep.mubr.f32.mxu0 0.0
  %2957 = vmatmul.mubr.f32.gmra.mrb[0].mxu0 %v2683
  %v2958 = vpop.f32.mrb[0].mxu0
  %v2959 = vadd.f32 %v2653, %v2958
  %v2960 = vpop.f32.mrb[0].mxu0
  %2961 = vmatprep.mubr.f32.mxu0 0.0
  %2962 = vmatmul.mubr.f32.gmra.mrb[0].mxu0 %v2686
  %v2963 = vpop.f32.mrb[0].mxu0
  %v2964 = vadd.f32 %v2653, %v2963
  %v2965 = vpop.f32.mrb[0].mxu0
  %2966 = vmatprep.mubr.f32.mxu0 0.0
  %2967 = vmatmul.mubr.f32.gmra.mrb[0].mxu0 %v2689
  %v2968 = vpop.f32.mrb[0].mxu0
  %v2969 = vadd.f32 %v2653, %v2968
  %v2970 = vpop.f32.mrb[0].mxu0
  %2971 = vmatprep.mubr.f32.mxu0 0.0
  %2972 = vmatmul.mubr.f32.gmra.mrb[0].mxu0 %v2692
  %v2973 = vpop.f32.mrb[0].mxu0
  %v2974 = vadd.f32 %v2653, %v2973
  %v2975 = vpop.f32.mrb[0].mxu0
  %2976 = vmatprep.mubr.f32.mxu0 0.0
  %2977 = vmatmul.mubr.f32.gmra.mrb[0].mxu0 %v2695
  %v2978 = vpop.f32.mrb[0].mxu0
  %v2979 = vadd.f32 %v2653, %v2978
  %v2980 = vpop.f32.mrb[0].mxu0
  %2981 = vmatprep.mubr.f32.mxu0 0.0
  %2982 = vmatmul.mubr.f32.gmra.mrb[0].mxu0 %v2698
  %v2983 = vpop.f32.mrb[0].mxu0
  %v2984 = vadd.f32 %v2653, %v2983
  %v2985 = vpop.f32.mrb[0].mxu0
  %2986 = vmatprep.mubr.f32.mxu0 0.0
  %2987 = vmatmul.mubr.f32.gmra.mrb[0].mxu0 %v2701
  %v2988 = vpop.f32.mrb[0].mxu0
  %v2989 = vadd.f32 %v2653, %v2988
  %v2990 = vpop.f32.mrb[0].mxu0
  %2991 = vmatprep.mubr.f32.mxu0 0.0
  %2992 = vmatmul.mubr.f32.gmra.mrb[0].mxu0 %v2704
  %v2993 = vpop.f32.mrb[0].mxu0
  %v2994 = vadd.f32 %v2653, %v2993
  %v2995 = vpop.f32.mrb[0].mxu0
  %2996 = vmatprep.mubr.f32.mxu0 0.0
  %2997 = vmatmul.mubr.f32.gmra.mrb[0].mxu0 %v2707
  %v2998 = vpop.f32.mrb[0].mxu0
  %v2999 = vadd.f32 %v2653, %v2998
  %v3000 = vpop.f32.mrb[0].mxu0
  %3001 = vmatprep.mubr.f32.mxu0 0.0
  %3002 = vmatmul.mubr.f32.gmra.mrb[0].mxu0 %v2710
  %v3003 = vpop.f32.mrb[0].mxu0
  %v3004 = vadd.f32 %v2653, %v3003
  %v3005 = vpop.f32.mrb[0].mxu0
  %3006 = vmatprep.mubr.f32.mxu0 0.0
  %3007 = vmatmul.mubr.f32.gmra.mrb[0].mxu0 %v2713
  %v3008 = vpop.f32.mrb[0].mxu0
  %v3009 = vadd.f32 %v2653, %v3008
  %v3010 = vpop.f32.mrb[0].mxu0
  %3011 = vmatprep.mubr.f32.mxu0 0.0
  %3012 = vmatmul.mubr.f32.gmra.mrb[0].mxu0 %v2716
  %v3013 = vpop.f32.mrb[0].mxu0
  %v3014 = vadd.f32 %v2653, %v3013
  %v3015 = vpop.f32.mrb[0].mxu0
  %3016 = vmatprep.mubr.f32.mxu0 0.0
  %3017 = vmatmul.mubr.f32.gmra.mrb[0].mxu0 %v2719
  %v3018 = vpop.f32.mrb[0].mxu0
  %v3019 = vadd.f32 %v2653, %v3018
  %v3020 = vpop.f32.mrb[0].mxu0
  %3021 = vmatprep.mubr.f32.mxu0 0.0
  %3022 = vmatmul.mubr.f32.gmra.mrb[0].mxu0 %v2722
  %v3023 = vpop.f32.mrb[0].mxu0
  %v3024 = vadd.f32 %v2653, %v3023
  %v3025 = vpop.f32.mrb[0].mxu0
  %3026 = vmatprep.mubr.f32.mxu0 0.0
  %3027 = vmatmul.mubr.f32.gmra.mrb[0].mxu0 %v2725
  %v3028 = vpop.f32.mrb[0].mxu0
  %v3029 = vadd.f32 %v2653, %v3028
  %v3030 = vpop.f32.mrb[0].mxu0
  %3031 = vmatprep.mubr.f32.mxu0 0.0
  %3032 = vmatmul.mubr.f32.gmra.mrb[0].mxu0 %v2728
  %v3033 = vpop.f32.mrb[0].mxu0
  %v3034 = vadd.f32 %v2653, %v3033
  %v3035 = vpop.f32.mrb[0].mxu0
  %3036 = vmatprep.mubr.f32.mxu0 0.0
  %3037 = vmatmul.mubr.f32.gmra.mrb[0].mxu0 %v2731
  %v3038 = vpop.f32.mrb[0].mxu0
  %v3039 = vadd.f32 %v2653, %v3038
  %v3040 = vpop.f32.mrb[0].mxu0
  %3041 = vmatprep.mubr.f32.mxu0 0.0
  %3042 = vmatmul.mubr.f32.gmra.mrb[0].mxu0 %v2734
  %v3043 = vpop.f32.mrb[0].mxu0
  %v3044 = vadd.f32 %v2653, %v3043
  %v3045 = vpop.f32.mrb[0].mxu0
  %3046 = vmatprep.mubr.f32.mxu0 0.0
  %3047 = vmatmul.mubr.f32.gmra.mrb[0].mxu0 %v2737
  %v3048 = vpop.f32.mrb[0].mxu0
  %v3049 = vadd.f32 %v2653, %v3048
  %v3050 = vpop.f32.mrb[0].mxu0
  %3051 = vmatprep.mubr.f32.mxu0 0.0
  %3052 = vmatmul.mubr.f32.gmra.mrb[0].mxu0 %v2740
  %v3053 = vpop.f32.mrb[0].mxu0
  %v3054 = vadd.f32 %v2653, %v3053
  %v3055 = vpop.f32.mrb[0].mxu0
  %3056 = vmatprep.mubr.f32.mxu0 0.0
  %3057 = vmatmul.mubr.f32.gmra.mrb[0].mxu0 %v2743
  %v3058 = vpop.f32.mrb[0].mxu0
  %v3059 = vadd.f32 %v2653, %v3058
  %v3060 = vpop.f32.mrb[0].mxu0
  %3061 = vmatprep.mubr.f32.mxu0 0.0
  %3062 = vmatmul.mubr.f32.gmra.mrb[0].mxu0 %v2746
  %v3063 = vpop.f32.mrb[0].mxu0
  %v3064 = vadd.f32 %v2653, %v3063
  %v3065 = vpop.f32.mrb[0].mxu0
  %3066 = vmatprep.mubr.f32.mxu0 0.0
  %3067 = vmatmul.mubr.f32.gmra.mrb[0].mxu0 %v2749
  %v3068 = vpop.f32.mrb[0].mxu0
  %v3069 = vadd.f32 %v2653, %v3068
  %v3070 = vpop.f32.mrb[0].mxu0
  %3071 = vmatprep.mubr.f32.mxu0 0.0
  %3072 = vmatmul.mubr.f32.gmra.mrb[0].mxu0 %v2752
  %v3073 = vpop.f32.mrb[0].mxu0
  %v3074 = vadd.f32 %v2653, %v3073
  %v3075 = vpop.f32.mrb[0].mxu0
  %3076 = vmatprep.mubr.f32.mxu0 0.0
  %3077 = vmatmul.mubr.f32.gmra.mrb[0].mxu0 %v2755
  %v3078 = vpop.f32.mrb[0].mxu0
  %v3079 = vadd.f32 %v2653, %v3078
  %v3080 = vpop.f32.mrb[0].mxu0
  %3081 = vmatprep.mubr.f32.mxu0 0.0
  %3082 = vmatmul.mubr.f32.gmra.mrb[0].mxu0 %v2758
  %v3083 = vpop.f32.mrb[0].mxu0
  %v3084 = vadd.f32 %v2653, %v3083
  %v3085 = vpop.f32.mrb[0].mxu0
  %3086 = vmatprep.mubr.f32.mxu0 0.0
  %3087 = vmatmul.mubr.f32.gmra.mrb[0].mxu0 %v2761
  %v3088 = vpop.f32.mrb[0].mxu0
  %v3089 = vadd.f32 %v2653, %v3088
  %v3090 = vpop.f32.mrb[0].mxu0
  %3091 = vmatprep.mubr.f32.mxu0 0.0
  %3092 = vmatmul.mubr.f32.gmra.mrb[0].mxu0 %v2764
  %v3093 = vpop.f32.mrb[0].mxu0
  %v3094 = vadd.f32 %v2653, %v3093
  %v3095 = vpop.f32.mrb[0].mxu0
  %3096 = vmatprep.mubr.f32.mxu0 0.0
  %3097 = vmatmul.mubr.f32.gmra.mrb[0].mxu0 %v2767
  %v3098 = vpop.f32.mrb[0].mxu0
  %v3099 = vadd.f32 %v2653, %v3098
  %v3100 = vpop.f32.mrb[0].mxu0
  %3101 = vmatprep.mubr.f32.mxu0 0.0
  %3102 = vmatmul.mubr.f32.gmra.mrb[0].mxu0 %v2770
  %v3103 = vpop.f32.mrb[0].mxu0
  %v3104 = vadd.f32 %v2653, %v3103
  %v3105 = vpop.f32.mrb[0].mxu0
  %3106 = vmatprep.mubr.f32.mxu0 0.0
  %3107 = vmatmul.mubr.f32.gmra.mrb[0].mxu0 %v2773
  %v3108 = vpop.f32.mrb[0].mxu0
  %v3109 = vadd.f32 %v2653, %v3108
  %v3110 = vpop.f32.mrb[0].mxu0
  %3111 = vmatprep.mubr.f32.mxu0 0.0
  %3112 = vmatmul.mubr.f32.gmra.mrb[0].mxu0 %v2776
  %v3113 = vpop.f32.mrb[0].mxu0
  %v3114 = vadd.f32 %v2653, %v3113
  %v3115 = vpop.f32.mrb[0].mxu0
  %3116 = vmatprep.mubr.f32.mxu0 0.0
  %3117 = vmatmul.mubr.f32.gmra.mrb[0].mxu0 %v2779
  %v3118 = vpop.f32.mrb[0].mxu0
  %v3119 = vadd.f32 %v2653, %v3118
  %v3120 = vpop.f32.mrb[0].mxu0
  %3121 = vmatprep.mubr.f32.mxu0 0.0
  %3122 = vmatmul.mubr.f32.gmra.mrb[0].mxu0 %v2782
  %v3123 = vpop.f32.mrb[0].mxu0
  %v3124 = vadd.f32 %v2653, %v3123
  %v3125 = vpop.f32.mrb[0].mxu0
  %3126 = vmatprep.mubr.f32.mxu0 0.0
  %3127 = vmatmul.mubr.f32.gmra.mrb[0].mxu0 %v2785
  %v3128 = vpop.f32.mrb[0].mxu0
  %v3129 = vadd.f32 %v2653, %v3128
  %v3130 = vpop.f32.mrb[0].mxu0
  %3131 = vmatprep.mubr.f32.mxu0 0.0
  %3132 = vmatmul.mubr.f32.gmra.mrb[0].mxu0 %v2788
  %v3133 = vpop.f32.mrb[0].mxu0
  %v3134 = vadd.f32 %v2653, %v3133
  %v3135 = vpop.f32.mrb[0].mxu0
  %3136 = vmatprep.mubr.f32.mxu0 0.0
  %3137 = vmatmul.mubr.f32.gmra.mrb[0].mxu0 %v2791
  %v3138 = vpop.f32.mrb[0].mxu0
  %v3139 = vadd.f32 %v2653, %v3138
  %v3140 = vpop.f32.mrb[0].mxu0
  %3141 = vmatprep.mubr.f32.mxu0 0.0
  %3142 = vmatmul.mubr.f32.gmra.mrb[0].mxu0 %v2794
  %v3143 = vpop.f32.mrb[0].mxu0
  %v3144 = vadd.f32 %v2653, %v3143
  %v3145 = vpop.f32.mrb[0].mxu0
  %3146 = vmatprep.mubr.f32.mxu0 0.0
  %3147 = vmatmul.mubr.f32.gmra.mrb[0].mxu0 %v2797
  %v3148 = vpop.f32.mrb[0].mxu0
  %v3149 = vadd.f32 %v2653, %v3148
  %v3150 = vpop.f32.mrb[0].mxu0
  %3151 = vmatprep.mubr.f32.mxu0 0.0
  %3152 = vmatmul.mubr.f32.gmra.mrb[0].mxu0 %v2800
  %v3153 = vpop.f32.mrb[0].mxu0
  %v3154 = vadd.f32 %v2653, %v3153
  %v3155 = vpop.f32.mrb[0].mxu0
  %3156 = vmatprep.mubr.f32.mxu0 0.0
  %3157 = vmatmul.mubr.f32.gmra.mrb[0].mxu0 %v2803
  %v3158 = vpop.f32.mrb[0].mxu0
  %v3159 = vadd.f32 %v2653, %v3158
  %v3160 = vpop.f32.mrb[0].mxu0
  %3161 = vmatprep.mubr.f32.mxu0 0.0
  %3162 = vmatmul.mubr.f32.gmra.mrb[0].mxu0 %v2806
  %v3163 = vpop.f32.mrb[0].mxu0
  %v3164 = vadd.f32 %v2653, %v3163
  %v3165 = vpop.f32.mrb[0].mxu0
  %3166 = vmatprep.mubr.f32.mxu0 0.0
  %3167 = vmatmul.mubr.f32.gmra.mrb[0].mxu0 %v2809
  %v3168 = vpop.f32.mrb[0].mxu0
  %v3169 = vadd.f32 %v2653, %v3168
  %v3170 = vpop.f32.mrb[0].mxu0
  %3171 = vmatprep.mubr.f32.mxu0 0.0
  %3172 = vmatmul.mubr.f32.gmra.mrb[0].mxu0 %v2812
  %v3173 = vpop.f32.mrb[0].mxu0
  %v3174 = vadd.f32 %v2653, %v3173
  %v3175 = vpop.f32.mrb[0].mxu0
  %3176 = vmatprep.mubr.f32.mxu0 0.0
  %3177 = vmatmul.mubr.f32.gmra.mrb[0].mxu0 %v2815
  %v3178 = vpop.f32.mrb[0].mxu0
  %v3179 = vadd.f32 %v2653, %v3178
  %v3180 = vpop.f32.mrb[0].mxu0
  %3181 = vmatprep.mubr.f32.mxu0 0.0
  %3182 = vmatmul.mubr.f32.gmra.mrb[0].mxu0 %v2818
  %v3183 = vpop.f32.mrb[0].mxu0
  %v3184 = vadd.f32 %v2653, %v3183
  %v3185 = vpop.f32.mrb[0].mxu0
  %3186 = vmatprep.mubr.f32.mxu0 0.0
  %3187 = vmatmul.mubr.f32.gmra.mrb[0].mxu0 %v2821
  %v3188 = vpop.f32.mrb[0].mxu0
  %v3189 = vadd.f32 %v2653, %v3188
  %v3190 = vpop.f32.mrb[0].mxu0
  %3191 = vmatprep.mubr.f32.mxu0 0.0
  %3192 = vmatmul.mubr.f32.gmra.mrb[0].mxu0 %v2824
  %v3193 = vpop.f32.mrb[0].mxu0
  %v3194 = vadd.f32 %v2653, %v3193
  %v3195 = vpop.f32.mrb[0].mxu0
  %3196 = vmatprep.mubr.f32.mxu0 0.0
  %3197 = vmatmul.mubr.f32.gmra.mrb[0].mxu0 %v2827
  %v3198 = vpop.f32.mrb[0].mxu0
  %v3199 = vadd.f32 %v2653, %v3198
  %v3200 = vpop.f32.mrb[0].mxu0
  %3201 = vmatprep.mubr.f32.mxu0 0.0
  %3202 = vmatmul.mubr.f32.gmra.mrb[0].mxu0 %v2830
  %v3203 = vpop.f32.mrb[0].mxu0
  %v3204 = vadd.f32 %v2653, %v3203
  %v3205 = vpop.f32.mrb[0].mxu0
  %3206 = vmatprep.mubr.f32.mxu0 0.0
  %3207 = vmatmul.mubr.f32.gmra.mrb[0].mxu0 %v2833
  %v3208 = vpop.f32.mrb[0].mxu0
  %v3209 = vadd.f32 %v2653, %v3208
  %v3210 = vpop.f32.mrb[0].mxu0
  %3211 = vmatprep.mubr.f32.mxu0 0.0
  %3212 = vmatmul.mubr.f32.gmra.mrb[0].mxu0 %v2836
  %v3213 = vpop.f32.mrb[0].mxu0
  %v3214 = vadd.f32 %v2653, %v3213
  %v3215 = vpop.f32.mrb[0].mxu0
  %3216 = vmatprep.mubr.f32.mxu0 0.0
  %3217 = vmatmul.mubr.f32.gmra.mrb[0].mxu0 %v2839
  %v3218 = vpop.f32.mrb[0].mxu0
  %v3219 = vadd.f32 %v2653, %v3218
  %v3220 = vpop.f32.mrb[0].mxu0
  %3221 = vmatprep.mubr.f32.mxu0 0.0
  %3222 = vmatmul.mubr.f32.gmra.mrb[0].mxu0 %v2842
  %v3223 = vpop.f32.mrb[0].mxu0
  %v3224 = vadd.f32 %v2653, %v3223
  %v3225 = vpop.f32.mrb[0].mxu0
  %3226 = vmatprep.mubr.f32.mxu0 0.0
  %3227 = vmatmul.mubr.f32.gmra.mrb[0].mxu0 %v2845
  %v3228 = vpop.f32.mrb[0].mxu0
  %v3229 = vadd.f32 %v2653, %v3228
  %v3230 = vpop.f32.mrb[0].mxu0
  %3231 = vdwg.mxu0
  %v3232 = vmul.f32 %v2914, 0.5
  %v3233 = vmul.f32 %v2919, 0.5
  %v3234 = vmul.f32 %v2924, 0.5
  %v3235 = vmul.f32 %v2929, 0.5
  %v3236 = vmul.f32 %v2934, 0.5
  %v3237 = vmul.f32 %v2939, 0.5
  %v3238 = vmul.f32 %v2944, 0.5
  %v3239 = vmul.f32 %v2949, 0.5
  %v3240 = vmul.f32 %v2954, 0.5
  %v3241 = vmul.f32 %v2959, 0.5
  %v3242 = vmul.f32 %v2964, 0.5
  %v3243 = vmul.f32 %v2969, 0.5
  %v3244 = vmul.f32 %v2974, 0.5
  %v3245 = vmul.f32 %v2979, 0.5
  %v3246 = vmul.f32 %v2984, 0.5
  %v3247 = vmul.f32 %v2989, 0.5
  %v3248 = vmul.f32 %v2994, 0.5
  %v3249 = vmul.f32 %v2999, 0.5
  %v3250 = vmul.f32 %v3004, 0.5
  %v3251 = vmul.f32 %v3009, 0.5
  %v3252 = vmul.f32 %v3014, 0.5
  %v3253 = vmul.f32 %v3019, 0.5
  %v3254 = vmul.f32 %v3024, 0.5
  %v3255 = vmul.f32 %v3029, 0.5
  %v3256 = vmul.f32 %v3034, 0.5
  %v3257 = vmul.f32 %v3039, 0.5
  %v3258 = vmul.f32 %v3044, 0.5
  %v3259 = vmul.f32 %v3049, 0.5
  %v3260 = vmul.f32 %v3054, 0.5
  %v3261 = vmul.f32 %v3059, 0.5
  %v3262 = vmul.f32 %v3064, 0.5
  %v3263 = vmul.f32 %v3069, 0.5
  %v3264 = vmul.f32 %v3074, 0.5
  %v3265 = vmul.f32 %v3079, 0.5
  %v3266 = vmul.f32 %v3084, 0.5
  %v3267 = vmul.f32 %v3089, 0.5
  %v3268 = vmul.f32 %v3094, 0.5
  %v3269 = vmul.f32 %v3099, 0.5
  %v3270 = vmul.f32 %v3104, 0.5
  %v3271 = vmul.f32 %v3109, 0.5
  %v3272 = vmul.f32 %v3114, 0.5
  %v3273 = vmul.f32 %v3119, 0.5
  %v3274 = vmul.f32 %v3124, 0.5
  %v3275 = vmul.f32 %v3129, 0.5
  %v3276 = vmul.f32 %v3134, 0.5
  %v3277 = vmul.f32 %v3139, 0.5
  %v3278 = vmul.f32 %v3144, 0.5
  %v3279 = vmul.f32 %v3149, 0.5
  %v3280 = vmul.f32 %v3154, 0.5
  %v3281 = vmul.f32 %v3159, 0.5
  %v3282 = vmul.f32 %v3164, 0.5
  %v3283 = vmul.f32 %v3169, 0.5
  %v3284 = vmul.f32 %v3174, 0.5
  %v3285 = vmul.f32 %v3179, 0.5
  %v3286 = vmul.f32 %v3184, 0.5
  %v3287 = vmul.f32 %v3189, 0.5
  %v3288 = vmul.f32 %v3194, 0.5
  %v3289 = vmul.f32 %v3199, 0.5
  %v3290 = vmul.f32 %v3204, 0.5
  %v3291 = vmul.f32 %v3209, 0.5
  %v3292 = vmul.f32 %v3214, 0.5
  %v3293 = vmul.f32 %v3219, 0.5
  %v3294 = vmul.f32 %v3224, 0.5
  %v3295 = vmul.f32 %v3229, 0.5
  %v3296 = vmul.f32 %v2914, 0.70710677
  %v3297 = vmul.f32 %v2919, 0.70710677
  %v3298 = vmul.f32 %v2924, 0.70710677
  %v3299 = vmul.f32 %v2929, 0.70710677
  %v3300 = vmul.f32 %v2934, 0.70710677
  %v3301 = vmul.f32 %v2939, 0.70710677
  %v3302 = vmul.f32 %v2944, 0.70710677
  %v3303 = vmul.f32 %v2949, 0.70710677
  %v3304 = vmul.f32 %v2954, 0.70710677
  %v3305 = vmul.f32 %v2959, 0.70710677
  %v3306 = vmul.f32 %v2964, 0.70710677
  %v3307 = vmul.f32 %v2969, 0.70710677
  %v3308 = vmul.f32 %v2974, 0.70710677
  %v3309 = vmul.f32 %v2979, 0.70710677
  %v3310 = vmul.f32 %v2984, 0.70710677
  %v3311 = vmul.f32 %v2989, 0.70710677
  %v3312 = vmul.f32 %v2994, 0.70710677
  %v3313 = vmul.f32 %v2999, 0.70710677
  %v3314 = vmul.f32 %v3004, 0.70710677
  %v3315 = vmul.f32 %v3009, 0.70710677
  %v3316 = vmul.f32 %v3014, 0.70710677
  %v3317 = vmul.f32 %v3019, 0.70710677
  %v3318 = vmul.f32 %v3024, 0.70710677
  %v3319 = vmul.f32 %v3029, 0.70710677
  %v3320 = vmul.f32 %v3034, 0.70710677
  %v3321 = vmul.f32 %v3039, 0.70710677
  %v3322 = vmul.f32 %v3044, 0.70710677
  %v3323 = vmul.f32 %v3049, 0.70710677
  %v3324 = vmul.f32 %v3054, 0.70710677
  %v3325 = vmul.f32 %v3059, 0.70710677
  %v3326 = vmul.f32 %v3064, 0.70710677
  %v3327 = vmul.f32 %v3069, 0.70710677
  %v3328 = vmul.f32 %v3074, 0.70710677
  %v3329 = vmul.f32 %v3079, 0.70710677
  %v3330 = vmul.f32 %v3084, 0.70710677
  %v3331 = vmul.f32 %v3089, 0.70710677
  %v3332 = vmul.f32 %v3094, 0.70710677
  %v3333 = vmul.f32 %v3099, 0.70710677
  %v3334 = vmul.f32 %v3104, 0.70710677
  %v3335 = vmul.f32 %v3109, 0.70710677
  %v3336 = vmul.f32 %v3114, 0.70710677
  %v3337 = vmul.f32 %v3119, 0.70710677
  %v3338 = vmul.f32 %v3124, 0.70710677
  %v3339 = vmul.f32 %v3129, 0.70710677
  %v3340 = vmul.f32 %v3134, 0.70710677
  %v3341 = vmul.f32 %v3139, 0.70710677
  %v3342 = vmul.f32 %v3144, 0.70710677
  %v3343 = vmul.f32 %v3149, 0.70710677
  %v3344 = vmul.f32 %v3154, 0.70710677
  %v3345 = vmul.f32 %v3159, 0.70710677
  %v3346 = vmul.f32 %v3164, 0.70710677
  %v3347 = vmul.f32 %v3169, 0.70710677
  %v3348 = vmul.f32 %v3174, 0.70710677
  %v3349 = vmul.f32 %v3179, 0.70710677
  %v3350 = vmul.f32 %v3184, 0.70710677
  %v3351 = vmul.f32 %v3189, 0.70710677
  %v3352 = vmul.f32 %v3194, 0.70710677
  %v3353 = vmul.f32 %v3199, 0.70710677
  %v3354 = vmul.f32 %v3204, 0.70710677
  %v3355 = vmul.f32 %v3209, 0.70710677
  %v3356 = vmul.f32 %v3214, 0.70710677
  %v3357 = vmul.f32 %v3219, 0.70710677
  %v3358 = vmul.f32 %v3224, 0.70710677
  %v3359 = vmul.f32 %v3229, 0.70710677
  %v3360 = verf.f32.pop %v3296
  %v3361 = verf.f32.pop %v3297
  %v3362 = verf.f32.pop %v3298
  %v3363 = verf.f32.pop %v3299
  %v3364 = verf.f32.pop %v3300
  %v3365 = verf.f32.pop %v3301
  %v3366 = verf.f32.pop %v3302
  %v3367 = verf.f32.pop %v3303
  %v3368 = verf.f32.pop %v3304
  %v3369 = verf.f32.pop %v3305
  %v3370 = verf.f32.pop %v3306
  %v3371 = verf.f32.pop %v3307
  %v3372 = verf.f32.pop %v3308
  %v3373 = verf.f32.pop %v3309
  %v3374 = verf.f32.pop %v3310
  %v3375 = verf.f32.pop %v3311
  %v3376 = verf.f32.pop %v3312
  %v3377 = verf.f32.pop %v3313
  %v3378 = verf.f32.pop %v3314
  %v3379 = verf.f32.pop %v3315
  %v3380 = verf.f32.pop %v3316
  %v3381 = verf.f32.pop %v3317
  %v3382 = verf.f32.pop %v3318
  %v3383 = verf.f32.pop %v3319
  %v3384 = verf.f32.pop %v3320
  %v3385 = verf.f32.pop %v3321
  %v3386 = verf.f32.pop %v3322
  %v3387 = verf.f32.pop %v3323
  %v3388 = verf.f32.pop %v3324
  %v3389 = verf.f32.pop %v3325
  %v3390 = verf.f32.pop %v3326
  %v3391 = verf.f32.pop %v3327
  %v3392 = verf.f32.pop %v3328
  %v3393 = verf.f32.pop %v3329
  %v3394 = verf.f32.pop %v3330
  %v3395 = verf.f32.pop %v3331
  %v3396 = verf.f32.pop %v3332
  %v3397 = verf.f32.pop %v3333
  %v3398 = verf.f32.pop %v3334
  %v3399 = verf.f32.pop %v3335
  %v3400 = verf.f32.pop %v3336
  %v3401 = verf.f32.pop %v3337
  %v3402 = verf.f32.pop %v3338
  %v3403 = verf.f32.pop %v3339
  %v3404 = verf.f32.pop %v3340
  %v3405 = verf.f32.pop %v3341
  %v3406 = verf.f32.pop %v3342
  %v3407 = verf.f32.pop %v3343
  %v3408 = verf.f32.pop %v3344
  %v3409 = verf.f32.pop %v3345
  %v3410 = verf.f32.pop %v3346
  %v3411 = verf.f32.pop %v3347
  %v3412 = verf.f32.pop %v3348
  %v3413 = verf.f32.pop %v3349
  %v3414 = verf.f32.pop %v3350
  %v3415 = verf.f32.pop %v3351
  %v3416 = verf.f32.pop %v3352
  %v3417 = verf.f32.pop %v3353
  %v3418 = verf.f32.pop %v3354
  %v3419 = verf.f32.pop %v3355
  %v3420 = verf.f32.pop %v3356
  %v3421 = verf.f32.pop %v3357
  %v3422 = verf.f32.pop %v3358
  %v3423 = verf.f32.pop %v3359
  %v3424 = vadd.f32 %v3360, 1.0
  %v3425 = vadd.f32 %v3361, 1.0
  %v3426 = vadd.f32 %v3362, 1.0
  %v3427 = vadd.f32 %v3363, 1.0
  %v3428 = vadd.f32 %v3364, 1.0
  %v3429 = vadd.f32 %v3365, 1.0
  %v3430 = vadd.f32 %v3366, 1.0
  %v3431 = vadd.f32 %v3367, 1.0
  %v3432 = vadd.f32 %v3368, 1.0
  %v3433 = vadd.f32 %v3369, 1.0
  %v3434 = vadd.f32 %v3370, 1.0
  %v3435 = vadd.f32 %v3371, 1.0
  %v3436 = vadd.f32 %v3372, 1.0
  %v3437 = vadd.f32 %v3373, 1.0
  %v3438 = vadd.f32 %v3374, 1.0
  %v3439 = vadd.f32 %v3375, 1.0
  %v3440 = vadd.f32 %v3376, 1.0
  %v3441 = vadd.f32 %v3377, 1.0
  %v3442 = vadd.f32 %v3378, 1.0
  %v3443 = vadd.f32 %v3379, 1.0
  %v3444 = vadd.f32 %v3380, 1.0
  %v3445 = vadd.f32 %v3381, 1.0
  %v3446 = vadd.f32 %v3382, 1.0
  %v3447 = vadd.f32 %v3383, 1.0
  %v3448 = vadd.f32 %v3384, 1.0
  %v3449 = vadd.f32 %v3385, 1.0
  %v3450 = vadd.f32 %v3386, 1.0
  %v3451 = vadd.f32 %v3387, 1.0
  %v3452 = vadd.f32 %v3388, 1.0
  %v3453 = vadd.f32 %v3389, 1.0
  %v3454 = vadd.f32 %v3390, 1.0
  %v3455 = vadd.f32 %v3391, 1.0
  %v3456 = vadd.f32 %v3392, 1.0
  %v3457 = vadd.f32 %v3393, 1.0
  %v3458 = vadd.f32 %v3394, 1.0
  %v3459 = vadd.f32 %v3395, 1.0
  %v3460 = vadd.f32 %v3396, 1.0
  %v3461 = vadd.f32 %v3397, 1.0
  %v3462 = vadd.f32 %v3398, 1.0
  %v3463 = vadd.f32 %v3399, 1.0
  %v3464 = vadd.f32 %v3400, 1.0
  %v3465 = vadd.f32 %v3401, 1.0
  %v3466 = vadd.f32 %v3402, 1.0
  %v3467 = vadd.f32 %v3403, 1.0
  %v3468 = vadd.f32 %v3404, 1.0
  %v3469 = vadd.f32 %v3405, 1.0
  %v3470 = vadd.f32 %v3406, 1.0
  %v3471 = vadd.f32 %v3407, 1.0
  %v3472 = vadd.f32 %v3408, 1.0
  %v3473 = vadd.f32 %v3409, 1.0
  %v3474 = vadd.f32 %v3410, 1.0
  %v3475 = vadd.f32 %v3411, 1.0
  %v3476 = vadd.f32 %v3412, 1.0
  %v3477 = vadd.f32 %v3413, 1.0
  %v3478 = vadd.f32 %v3414, 1.0
  %v3479 = vadd.f32 %v3415, 1.0
  %v3480 = vadd.f32 %v3416, 1.0
  %v3481 = vadd.f32 %v3417, 1.0
  %v3482 = vadd.f32 %v3418, 1.0
  %v3483 = vadd.f32 %v3419, 1.0
  %v3484 = vadd.f32 %v3420, 1.0
  %v3485 = vadd.f32 %v3421, 1.0
  %v3486 = vadd.f32 %v3422, 1.0
  %v3487 = vadd.f32 %v3423, 1.0
  %v3488 = vmul.f32 %v3232, %v3424
  %v3489 = vmul.f32 %v3233, %v3425
  %v3490 = vmul.f32 %v3234, %v3426
  %v3491 = vmul.f32 %v3235, %v3427
  %v3492 = vmul.f32 %v3236, %v3428
  %v3493 = vmul.f32 %v3237, %v3429
  %v3494 = vmul.f32 %v3238, %v3430
  %v3495 = vmul.f32 %v3239, %v3431
  %v3496 = vmul.f32 %v3240, %v3432
  %v3497 = vmul.f32 %v3241, %v3433
  %v3498 = vmul.f32 %v3242, %v3434
  %v3499 = vmul.f32 %v3243, %v3435
  %v3500 = vmul.f32 %v3244, %v3436
  %v3501 = vmul.f32 %v3245, %v3437
  %v3502 = vmul.f32 %v3246, %v3438
  %v3503 = vmul.f32 %v3247, %v3439
  %v3504 = vmul.f32 %v3248, %v3440
  %v3505 = vmul.f32 %v3249, %v3441
  %v3506 = vmul.f32 %v3250, %v3442
  %v3507 = vmul.f32 %v3251, %v3443
  %v3508 = vmul.f32 %v3252, %v3444
  %v3509 = vmul.f32 %v3253, %v3445
  %v3510 = vmul.f32 %v3254, %v3446
  %v3511 = vmul.f32 %v3255, %v3447
  %v3512 = vmul.f32 %v3256, %v3448
  %v3513 = vmul.f32 %v3257, %v3449
  %v3514 = vmul.f32 %v3258, %v3450
  %v3515 = vmul.f32 %v3259, %v3451
  %v3516 = vmul.f32 %v3260, %v3452
  %v3517 = vmul.f32 %v3261, %v3453
  %v3518 = vmul.f32 %v3262, %v3454
  %v3519 = vmul.f32 %v3263, %v3455
  %v3520 = vmul.f32 %v3264, %v3456
  %v3521 = vmul.f32 %v3265, %v3457
  %v3522 = vmul.f32 %v3266, %v3458
  %v3523 = vmul.f32 %v3267, %v3459
  %v3524 = vmul.f32 %v3268, %v3460
  %v3525 = vmul.f32 %v3269, %v3461
  %v3526 = vmul.f32 %v3270, %v3462
  %v3527 = vmul.f32 %v3271, %v3463
  %v3528 = vmul.f32 %v3272, %v3464
  %v3529 = vmul.f32 %v3273, %v3465
  %v3530 = vmul.f32 %v3274, %v3466
  %v3531 = vmul.f32 %v3275, %v3467
  %v3532 = vmul.f32 %v3276, %v3468
  %v3533 = vmul.f32 %v3277, %v3469
  %v3534 = vmul.f32 %v3278, %v3470
  %v3535 = vmul.f32 %v3279, %v3471
  %v3536 = vmul.f32 %v3280, %v3472
  %v3537 = vmul.f32 %v3281, %v3473
  %v3538 = vmul.f32 %v3282, %v3474
  %v3539 = vmul.f32 %v3283, %v3475
  %v3540 = vmul.f32 %v3284, %v3476
  %v3541 = vmul.f32 %v3285, %v3477
  %v3542 = vmul.f32 %v3286, %v3478
  %v3543 = vmul.f32 %v3287, %v3479
  %v3544 = vmul.f32 %v3288, %v3480
  %v3545 = vmul.f32 %v3289, %v3481
  %v3546 = vmul.f32 %v3290, %v3482
  %v3547 = vmul.f32 %v3291, %v3483
  %v3548 = vmul.f32 %v3292, %v3484
  %v3549 = vmul.f32 %v3293, %v3485
  %v3550 = vmul.f32 %v3294, %v3486
  %v3551 = vmul.f32 %v3295, %v3487
  %v3552 = vld [vmem:[%s9] sm:$0xff]
  %v3553 = vld [vmem:[%s9 + $0x8] sm:$0xff]
  %v3554 = vld [vmem:[%s10] sm:$0x1]
  %v3556 = vlaneseq
  %v3557 = vshrl.u32 %v3556, 7
  %v3558 = vsub.s32 0, %v3557
  %v3559 = vrot.slane %v3554, %v3558
  %vm3561 = vcmask 130048
  %v3563 = vsel %vm3561, %v3488, 0
  %v3566 = vsel %vm3561, %v3489, 0
  %v3569 = vsel %vm3561, %v3490, 0
  %v3572 = vsel %vm3561, %v3491, 0
  %v3575 = vsel %vm3561, %v3492, 0
  %v3578 = vsel %vm3561, %v3493, 0
  %v3581 = vsel %vm3561, %v3494, 0
  %v3584 = vsel %vm3561, %v3495, 0
  %v3587 = vsel %vm3561, %v3496, 0
  %v3590 = vsel %vm3561, %v3497, 0
  %v3593 = vsel %vm3561, %v3498, 0
  %v3596 = vsel %vm3561, %v3499, 0
  %v3599 = vsel %vm3561, %v3500, 0
  %v3602 = vsel %vm3561, %v3501, 0
  %v3605 = vsel %vm3561, %v3502, 0
  %v3608 = vsel %vm3561, %v3503, 0
  %v3611 = vsel %vm3561, %v3504, 0
  %v3614 = vsel %vm3561, %v3505, 0
  %v3617 = vsel %vm3561, %v3506, 0
  %v3620 = vsel %vm3561, %v3507, 0
  %v3623 = vsel %vm3561, %v3508, 0
  %v3626 = vsel %vm3561, %v3509, 0
  %v3629 = vsel %vm3561, %v3510, 0
  %v3632 = vsel %vm3561, %v3511, 0
  %v3635 = vsel %vm3561, %v3512, 0
  %v3638 = vsel %vm3561, %v3513, 0
  %v3641 = vsel %vm3561, %v3514, 0
  %v3644 = vsel %vm3561, %v3515, 0
  %v3647 = vsel %vm3561, %v3516, 0
  %v3650 = vsel %vm3561, %v3517, 0
  %v3653 = vsel %vm3561, %v3518, 0
  %v3656 = vsel %vm3561, %v3519, 0
  %v3659 = vsel %vm3561, %v3520, 0
  %v3662 = vsel %vm3561, %v3521, 0
  %v3665 = vsel %vm3561, %v3522, 0
  %v3668 = vsel %vm3561, %v3523, 0
  %v3671 = vsel %vm3561, %v3524, 0
  %v3674 = vsel %vm3561, %v3525, 0
  %v3677 = vsel %vm3561, %v3526, 0
  %v3680 = vsel %vm3561, %v3527, 0
  %v3683 = vsel %vm3561, %v3528, 0
  %v3686 = vsel %vm3561, %v3529, 0
  %v3689 = vsel %vm3561, %v3530, 0
  %v3692 = vsel %vm3561, %v3531, 0
  %v3695 = vsel %vm3561, %v3532, 0
  %v3698 = vsel %vm3561, %v3533, 0
  %v3701 = vsel %vm3561, %v3534, 0
  %v3704 = vsel %vm3561, %v3535, 0
  %v3707 = vsel %vm3561, %v3536, 0
  %v3710 = vsel %vm3561, %v3537, 0
  %v3713 = vsel %vm3561, %v3538, 0
  %v3716 = vsel %vm3561, %v3539, 0
  %v3719 = vsel %vm3561, %v3540, 0
  %v3722 = vsel %vm3561, %v3541, 0
  %v3725 = vsel %vm3561, %v3542, 0
  %v3728 = vsel %vm3561, %v3543, 0
  %v3731 = vsel %vm3561, %v3544, 0
  %v3734 = vsel %vm3561, %v3545, 0
  %v3737 = vsel %vm3561, %v3546, 0
  %v3740 = vsel %vm3561, %v3547, 0
  %v3743 = vsel %vm3561, %v3548, 0
  %v3746 = vsel %vm3561, %v3549, 0
  %v3749 = vsel %vm3561, %v3550, 0
  %v3752 = vsel %vm3561, %v3551, 0
  %3754 = vmatprep.subr.mxu0 0.0
  %3755 = vmatpush1.msra.mxu0 %v3552
  %3756 = vmatprep.subr.mxu0 0.0
  %3757 = vmatpush1.msra.mxu0 %v3553
  %3758 = vmatprep.subr.mxu0 0.0
  %3759 = vmatpush1.msra.mxu0 0.0
  %3760 = vmatprep.subr.mxu0 0.0
  %3761 = vmatpush1.msra.mxu0 0.0
  %3762 = vmatprep.subr.mxu0 0.0
  %3763 = vmatpush1.msra.mxu0 0.0
  %3764 = vmatprep.subr.mxu0 0.0
  %3765 = vmatpush1.msra.mxu0 0.0
  %3766 = vmatprep.subr.mxu0 0.0
  %3767 = vmatpush1.msra.mxu0 0.0
  %3768 = vmatprep.subr.mxu0 0.0
  %3769 = vmatpush1.msra.mxu0 0.0
  %3770 = vmatprep.subr.mxu0 0.0
  %3771 = vmatpush1.msra.mxu0 0.0
  %3772 = vmatprep.subr.mxu0 0.0
  %3773 = vmatpush1.msra.mxu0 0.0
  %3774 = vmatprep.subr.mxu0 0.0
  %3775 = vmatpush1.msra.mxu0 0.0
  %3776 = vmatprep.subr.mxu0 0.0
  %3777 = vmatpush1.msra.mxu0 0.0
  %3778 = vmatprep.subr.mxu0 0.0
  %3779 = vmatpush1.msra.mxu0 0.0
  %3780 = vmatprep.subr.mxu0 0.0
  %3781 = vmatpush1.msra.mxu0 0.0
  %3782 = vmatprep.subr.mxu0 0.0
  %3783 = vmatpush1.msra.mxu0 0.0
  %3784 = vmatprep.subr.mxu0 0.0
  %3785 = vmatpush1.msra.mxu0 0.0
  %3786 = vmatprep.subr.mxu0 0.0
  %3787 = vmatpush1.msra.mxu0 0.0
  %3788 = vmatprep.subr.mxu0 0.0
  %3789 = vmatpush1.msra.mxu0 0.0
  %3790 = vmatprep.subr.mxu0 0.0
  %3791 = vmatpush1.msra.mxu0 0.0
  %3792 = vmatprep.subr.mxu0 0.0
  %3793 = vmatpush1.msra.mxu0 0.0
  %3794 = vmatprep.subr.mxu0 0.0
  %3795 = vmatpush1.msra.mxu0 0.0
  %3796 = vmatprep.subr.mxu0 0.0
  %3797 = vmatpush1.msra.mxu0 0.0
  %3798 = vmatprep.subr.mxu0 0.0
  %3799 = vmatpush1.msra.mxu0 0.0
  %3800 = vmatprep.subr.mxu0 0.0
  %3801 = vmatpush1.msra.mxu0 0.0
  %3802 = vmatprep.subr.mxu0 0.0
  %3803 = vmatpush1.msra.mxu0 0.0
  %3804 = vmatprep.subr.mxu0 0.0
  %3805 = vmatpush1.msra.mxu0 0.0
  %3806 = vmatprep.subr.mxu0 0.0
  %3807 = vmatpush1.msra.mxu0 0.0
  %3808 = vmatprep.subr.mxu0 0.0
  %3809 = vmatpush1.msra.mxu0 0.0
  %3810 = vmatprep.subr.mxu0 0.0
  %3811 = vmatpush1.msra.mxu0 0.0
  %3812 = vmatprep.subr.mxu0 0.0
  %3813 = vmatpush1.msra.mxu0 0.0
  %3814 = vmatprep.subr.mxu0 0.0
  %3815 = vmatpush1.msra.mxu0 0.0
  %3816 = vmatprep.subr.mxu0 0.0
  %3817 = vmatpush1.msra.mxu0 0.0
  %3818 = vmatprep.mubr.f32.mxu0 0.0
  %3819 = vmatmul.mubr.f32.gmra.mrb[0].mxu0 %v3563
  %v3820 = vpop.f32.mrb[0].mxu0
  %v3821 = vadd.f32 %v3559, %v3820
  %v3822 = vpop.f32.mrb[0].mxu0
  %3823 = vmatprep.mubr.f32.mxu0 0.0
  %3824 = vmatmul.mubr.f32.gmra.mrb[0].mxu0 %v3566
  %v3825 = vpop.f32.mrb[0].mxu0
  %v3826 = vadd.f32 %v3559, %v3825
  %v3827 = vpop.f32.mrb[0].mxu0
  %3828 = vmatprep.mubr.f32.mxu0 0.0
  %3829 = vmatmul.mubr.f32.gmra.mrb[0].mxu0 %v3569
  %v3830 = vpop.f32.mrb[0].mxu0
  %v3831 = vadd.f32 %v3559, %v3830
  %v3832 = vpop.f32.mrb[0].mxu0
  %3833 = vmatprep.mubr.f32.mxu0 0.0
  %3834 = vmatmul.mubr.f32.gmra.mrb[0].mxu0 %v3572
  %v3835 = vpop.f32.mrb[0].mxu0
  %v3836 = vadd.f32 %v3559, %v3835
  %v3837 = vpop.f32.mrb[0].mxu0
  %3838 = vmatprep.mubr.f32.mxu0 0.0
  %3839 = vmatmul.mubr.f32.gmra.mrb[0].mxu0 %v3575
  %v3840 = vpop.f32.mrb[0].mxu0
  %v3841 = vadd.f32 %v3559, %v3840
  %v3842 = vpop.f32.mrb[0].mxu0
  %3843 = vmatprep.mubr.f32.mxu0 0.0
  %3844 = vmatmul.mubr.f32.gmra.mrb[0].mxu0 %v3578
  %v3845 = vpop.f32.mrb[0].mxu0
  %v3846 = vadd.f32 %v3559, %v3845
  %v3847 = vpop.f32.mrb[0].mxu0
  %3848 = vmatprep.mubr.f32.mxu0 0.0
  %3849 = vmatmul.mubr.f32.gmra.mrb[0].mxu0 %v3581
  %v3850 = vpop.f32.mrb[0].mxu0
  %v3851 = vadd.f32 %v3559, %v3850
  %v3852 = vpop.f32.mrb[0].mxu0
  %3853 = vmatprep.mubr.f32.mxu0 0.0
  %3854 = vmatmul.mubr.f32.gmra.mrb[0].mxu0 %v3584
  %v3855 = vpop.f32.mrb[0].mxu0
  %v3856 = vadd.f32 %v3559, %v3855
  %v3857 = vpop.f32.mrb[0].mxu0
  %3858 = vmatprep.mubr.f32.mxu0 0.0
  %3859 = vmatmul.mubr.f32.gmra.mrb[0].mxu0 %v3587
  %v3860 = vpop.f32.mrb[0].mxu0
  %v3861 = vadd.f32 %v3559, %v3860
  %v3862 = vpop.f32.mrb[0].mxu0
  %3863 = vmatprep.mubr.f32.mxu0 0.0
  %3864 = vmatmul.mubr.f32.gmra.mrb[0].mxu0 %v3590
  %v3865 = vpop.f32.mrb[0].mxu0
  %v3866 = vadd.f32 %v3559, %v3865
  %v3867 = vpop.f32.mrb[0].mxu0
  %3868 = vmatprep.mubr.f32.mxu0 0.0
  %3869 = vmatmul.mubr.f32.gmra.mrb[0].mxu0 %v3593
  %v3870 = vpop.f32.mrb[0].mxu0
  %v3871 = vadd.f32 %v3559, %v3870
  %v3872 = vpop.f32.mrb[0].mxu0
  %3873 = vmatprep.mubr.f32.mxu0 0.0
  %3874 = vmatmul.mubr.f32.gmra.mrb[0].mxu0 %v3596
  %v3875 = vpop.f32.mrb[0].mxu0
  %v3876 = vadd.f32 %v3559, %v3875
  %v3877 = vpop.f32.mrb[0].mxu0
  %3878 = vmatprep.mubr.f32.mxu0 0.0
  %3879 = vmatmul.mubr.f32.gmra.mrb[0].mxu0 %v3599
  %v3880 = vpop.f32.mrb[0].mxu0
  %v3881 = vadd.f32 %v3559, %v3880
  %v3882 = vpop.f32.mrb[0].mxu0
  %3883 = vmatprep.mubr.f32.mxu0 0.0
  %3884 = vmatmul.mubr.f32.gmra.mrb[0].mxu0 %v3602
  %v3885 = vpop.f32.mrb[0].mxu0
  %v3886 = vadd.f32 %v3559, %v3885
  %v3887 = vpop.f32.mrb[0].mxu0
  %3888 = vmatprep.mubr.f32.mxu0 0.0
  %3889 = vmatmul.mubr.f32.gmra.mrb[0].mxu0 %v3605
  %v3890 = vpop.f32.mrb[0].mxu0
  %v3891 = vadd.f32 %v3559, %v3890
  %v3892 = vpop.f32.mrb[0].mxu0
  %3893 = vmatprep.mubr.f32.mxu0 0.0
  %3894 = vmatmul.mubr.f32.gmra.mrb[0].mxu0 %v3608
  %v3895 = vpop.f32.mrb[0].mxu0
  %v3896 = vadd.f32 %v3559, %v3895
  %v3897 = vpop.f32.mrb[0].mxu0
  %3898 = vmatprep.mubr.f32.mxu0 0.0
  %3899 = vmatmul.mubr.f32.gmra.mrb[0].mxu0 %v3611
  %v3900 = vpop.f32.mrb[0].mxu0
  %v3901 = vadd.f32 %v3559, %v3900
  %v3902 = vpop.f32.mrb[0].mxu0
  %3903 = vmatprep.mubr.f32.mxu0 0.0
  %3904 = vmatmul.mubr.f32.gmra.mrb[0].mxu0 %v3614
  %v3905 = vpop.f32.mrb[0].mxu0
  %v3906 = vadd.f32 %v3559, %v3905
  %v3907 = vpop.f32.mrb[0].mxu0
  %3908 = vmatprep.mubr.f32.mxu0 0.0
  %3909 = vmatmul.mubr.f32.gmra.mrb[0].mxu0 %v3617
  %v3910 = vpop.f32.mrb[0].mxu0
  %v3911 = vadd.f32 %v3559, %v3910
  %v3912 = vpop.f32.mrb[0].mxu0
  %3913 = vmatprep.mubr.f32.mxu0 0.0
  %3914 = vmatmul.mubr.f32.gmra.mrb[0].mxu0 %v3620
  %v3915 = vpop.f32.mrb[0].mxu0
  %v3916 = vadd.f32 %v3559, %v3915
  %v3917 = vpop.f32.mrb[0].mxu0
  %3918 = vmatprep.mubr.f32.mxu0 0.0
  %3919 = vmatmul.mubr.f32.gmra.mrb[0].mxu0 %v3623
  %v3920 = vpop.f32.mrb[0].mxu0
  %v3921 = vadd.f32 %v3559, %v3920
  %v3922 = vpop.f32.mrb[0].mxu0
  %3923 = vmatprep.mubr.f32.mxu0 0.0
  %3924 = vmatmul.mubr.f32.gmra.mrb[0].mxu0 %v3626
  %v3925 = vpop.f32.mrb[0].mxu0
  %v3926 = vadd.f32 %v3559, %v3925
  %v3927 = vpop.f32.mrb[0].mxu0
  %3928 = vmatprep.mubr.f32.mxu0 0.0
  %3929 = vmatmul.mubr.f32.gmra.mrb[0].mxu0 %v3629
  %v3930 = vpop.f32.mrb[0].mxu0
  %v3931 = vadd.f32 %v3559, %v3930
  %v3932 = vpop.f32.mrb[0].mxu0
  %3933 = vmatprep.mubr.f32.mxu0 0.0
  %3934 = vmatmul.mubr.f32.gmra.mrb[0].mxu0 %v3632
  %v3935 = vpop.f32.mrb[0].mxu0
  %v3936 = vadd.f32 %v3559, %v3935
  %v3937 = vpop.f32.mrb[0].mxu0
  %3938 = vmatprep.mubr.f32.mxu0 0.0
  %3939 = vmatmul.mubr.f32.gmra.mrb[0].mxu0 %v3635
  %v3940 = vpop.f32.mrb[0].mxu0
  %v3941 = vadd.f32 %v3559, %v3940
  %v3942 = vpop.f32.mrb[0].mxu0
  %3943 = vmatprep.mubr.f32.mxu0 0.0
  %3944 = vmatmul.mubr.f32.gmra.mrb[0].mxu0 %v3638
  %v3945 = vpop.f32.mrb[0].mxu0
  %v3946 = vadd.f32 %v3559, %v3945
  %v3947 = vpop.f32.mrb[0].mxu0
  %3948 = vmatprep.mubr.f32.mxu0 0.0
  %3949 = vmatmul.mubr.f32.gmra.mrb[0].mxu0 %v3641
  %v3950 = vpop.f32.mrb[0].mxu0
  %v3951 = vadd.f32 %v3559, %v3950
  %v3952 = vpop.f32.mrb[0].mxu0
  %3953 = vmatprep.mubr.f32.mxu0 0.0
  %3954 = vmatmul.mubr.f32.gmra.mrb[0].mxu0 %v3644
  %v3955 = vpop.f32.mrb[0].mxu0
  %v3956 = vadd.f32 %v3559, %v3955
  %v3957 = vpop.f32.mrb[0].mxu0
  %3958 = vmatprep.mubr.f32.mxu0 0.0
  %3959 = vmatmul.mubr.f32.gmra.mrb[0].mxu0 %v3647
  %v3960 = vpop.f32.mrb[0].mxu0
  %v3961 = vadd.f32 %v3559, %v3960
  %v3962 = vpop.f32.mrb[0].mxu0
  %3963 = vmatprep.mubr.f32.mxu0 0.0
  %3964 = vmatmul.mubr.f32.gmra.mrb[0].mxu0 %v3650
  %v3965 = vpop.f32.mrb[0].mxu0
  %v3966 = vadd.f32 %v3559, %v3965
  %v3967 = vpop.f32.mrb[0].mxu0
  %3968 = vmatprep.mubr.f32.mxu0 0.0
  %3969 = vmatmul.mubr.f32.gmra.mrb[0].mxu0 %v3653
  %v3970 = vpop.f32.mrb[0].mxu0
  %v3971 = vadd.f32 %v3559, %v3970
  %v3972 = vpop.f32.mrb[0].mxu0
  %3973 = vmatprep.mubr.f32.mxu0 0.0
  %3974 = vmatmul.mubr.f32.gmra.mrb[0].mxu0 %v3656
  %v3975 = vpop.f32.mrb[0].mxu0
  %v3976 = vadd.f32 %v3559, %v3975
  %v3977 = vpop.f32.mrb[0].mxu0
  %3978 = vmatprep.mubr.f32.mxu0 0.0
  %3979 = vmatmul.mubr.f32.gmra.mrb[0].mxu0 %v3659
  %v3980 = vpop.f32.mrb[0].mxu0
  %v3981 = vadd.f32 %v3559, %v3980
  %v3982 = vpop.f32.mrb[0].mxu0
  %3983 = vmatprep.mubr.f32.mxu0 0.0
  %3984 = vmatmul.mubr.f32.gmra.mrb[0].mxu0 %v3662
  %v3985 = vpop.f32.mrb[0].mxu0
  %v3986 = vadd.f32 %v3559, %v3985
  %v3987 = vpop.f32.mrb[0].mxu0
  %3988 = vmatprep.mubr.f32.mxu0 0.0
  %3989 = vmatmul.mubr.f32.gmra.mrb[0].mxu0 %v3665
  %v3990 = vpop.f32.mrb[0].mxu0
  %v3991 = vadd.f32 %v3559, %v3990
  %v3992 = vpop.f32.mrb[0].mxu0
  %3993 = vmatprep.mubr.f32.mxu0 0.0
  %3994 = vmatmul.mubr.f32.gmra.mrb[0].mxu0 %v3668
  %v3995 = vpop.f32.mrb[0].mxu0
  %v3996 = vadd.f32 %v3559, %v3995
  %v3997 = vpop.f32.mrb[0].mxu0
  %3998 = vmatprep.mubr.f32.mxu0 0.0
  %3999 = vmatmul.mubr.f32.gmra.mrb[0].mxu0 %v3671
  %v4000 = vpop.f32.mrb[0].mxu0
  %v4001 = vadd.f32 %v3559, %v4000
  %v4002 = vpop.f32.mrb[0].mxu0
  %4003 = vmatprep.mubr.f32.mxu0 0.0
  %4004 = vmatmul.mubr.f32.gmra.mrb[0].mxu0 %v3674
  %v4005 = vpop.f32.mrb[0].mxu0
  %v4006 = vadd.f32 %v3559, %v4005
  %v4007 = vpop.f32.mrb[0].mxu0
  %4008 = vmatprep.mubr.f32.mxu0 0.0
  %4009 = vmatmul.mubr.f32.gmra.mrb[0].mxu0 %v3677
  %v4010 = vpop.f32.mrb[0].mxu0
  %v4011 = vadd.f32 %v3559, %v4010
  %v4012 = vpop.f32.mrb[0].mxu0
  %4013 = vmatprep.mubr.f32.mxu0 0.0
  %4014 = vmatmul.mubr.f32.gmra.mrb[0].mxu0 %v3680
  %v4015 = vpop.f32.mrb[0].mxu0
  %v4016 = vadd.f32 %v3559, %v4015
  %v4017 = vpop.f32.mrb[0].mxu0
  %4018 = vmatprep.mubr.f32.mxu0 0.0
  %4019 = vmatmul.mubr.f32.gmra.mrb[0].mxu0 %v3683
  %v4020 = vpop.f32.mrb[0].mxu0
  %v4021 = vadd.f32 %v3559, %v4020
  %v4022 = vpop.f32.mrb[0].mxu0
  %4023 = vmatprep.mubr.f32.mxu0 0.0
  %4024 = vmatmul.mubr.f32.gmra.mrb[0].mxu0 %v3686
  %v4025 = vpop.f32.mrb[0].mxu0
  %v4026 = vadd.f32 %v3559, %v4025
  %v4027 = vpop.f32.mrb[0].mxu0
  %4028 = vmatprep.mubr.f32.mxu0 0.0
  %4029 = vmatmul.mubr.f32.gmra.mrb[0].mxu0 %v3689
  %v4030 = vpop.f32.mrb[0].mxu0
  %v4031 = vadd.f32 %v3559, %v4030
  %v4032 = vpop.f32.mrb[0].mxu0
  %4033 = vmatprep.mubr.f32.mxu0 0.0
  %4034 = vmatmul.mubr.f32.gmra.mrb[0].mxu0 %v3692
  %v4035 = vpop.f32.mrb[0].mxu0
  %v4036 = vadd.f32 %v3559, %v4035
  %v4037 = vpop.f32.mrb[0].mxu0
  %4038 = vmatprep.mubr.f32.mxu0 0.0
  %4039 = vmatmul.mubr.f32.gmra.mrb[0].mxu0 %v3695
  %v4040 = vpop.f32.mrb[0].mxu0
  %v4041 = vadd.f32 %v3559, %v4040
  %v4042 = vpop.f32.mrb[0].mxu0
  %4043 = vmatprep.mubr.f32.mxu0 0.0
  %4044 = vmatmul.mubr.f32.gmra.mrb[0].mxu0 %v3698
  %v4045 = vpop.f32.mrb[0].mxu0
  %v4046 = vadd.f32 %v3559, %v4045
  %v4047 = vpop.f32.mrb[0].mxu0
  %4048 = vmatprep.mubr.f32.mxu0 0.0
  %4049 = vmatmul.mubr.f32.gmra.mrb[0].mxu0 %v3701
  %v4050 = vpop.f32.mrb[0].mxu0
  %v4051 = vadd.f32 %v3559, %v4050
  %v4052 = vpop.f32.mrb[0].mxu0
  %4053 = vmatprep.mubr.f32.mxu0 0.0
  %4054 = vmatmul.mubr.f32.gmra.mrb[0].mxu0 %v3704
  %v4055 = vpop.f32.mrb[0].mxu0
  %v4056 = vadd.f32 %v3559, %v4055
  %v4057 = vpop.f32.mrb[0].mxu0
  %4058 = vmatprep.mubr.f32.mxu0 0.0
  %4059 = vmatmul.mubr.f32.gmra.mrb[0].mxu0 %v3707
  %v4060 = vpop.f32.mrb[0].mxu0
  %v4061 = vadd.f32 %v3559, %v4060
  %v4062 = vpop.f32.mrb[0].mxu0
  %4063 = vmatprep.mubr.f32.mxu0 0.0
  %4064 = vmatmul.mubr.f32.gmra.mrb[0].mxu0 %v3710
  %v4065 = vpop.f32.mrb[0].mxu0
  %v4066 = vadd.f32 %v3559, %v4065
  %v4067 = vpop.f32.mrb[0].mxu0
  %4068 = vmatprep.mubr.f32.mxu0 0.0
  %4069 = vmatmul.mubr.f32.gmra.mrb[0].mxu0 %v3713
  %v4070 = vpop.f32.mrb[0].mxu0
  %v4071 = vadd.f32 %v3559, %v4070
  %v4072 = vpop.f32.mrb[0].mxu0
  %4073 = vmatprep.mubr.f32.mxu0 0.0
  %4074 = vmatmul.mubr.f32.gmra.mrb[0].mxu0 %v3716
  %v4075 = vpop.f32.mrb[0].mxu0
  %v4076 = vadd.f32 %v3559, %v4075
  %v4077 = vpop.f32.mrb[0].mxu0
  %4078 = vmatprep.mubr.f32.mxu0 0.0
  %4079 = vmatmul.mubr.f32.gmra.mrb[0].mxu0 %v3719
  %v4080 = vpop.f32.mrb[0].mxu0
  %v4081 = vadd.f32 %v3559, %v4080
  %v4082 = vpop.f32.mrb[0].mxu0
  %4083 = vmatprep.mubr.f32.mxu0 0.0
  %4084 = vmatmul.mubr.f32.gmra.mrb[0].mxu0 %v3722
  %v4085 = vpop.f32.mrb[0].mxu0
  %v4086 = vadd.f32 %v3559, %v4085
  %v4087 = vpop.f32.mrb[0].mxu0
  %4088 = vmatprep.mubr.f32.mxu0 0.0
  %4089 = vmatmul.mubr.f32.gmra.mrb[0].mxu0 %v3725
  %v4090 = vpop.f32.mrb[0].mxu0
  %v4091 = vadd.f32 %v3559, %v4090
  %v4092 = vpop.f32.mrb[0].mxu0
  %4093 = vmatprep.mubr.f32.mxu0 0.0
  %4094 = vmatmul.mubr.f32.gmra.mrb[0].mxu0 %v3728
  %v4095 = vpop.f32.mrb[0].mxu0
  %v4096 = vadd.f32 %v3559, %v4095
  %v4097 = vpop.f32.mrb[0].mxu0
  %4098 = vmatprep.mubr.f32.mxu0 0.0
  %4099 = vmatmul.mubr.f32.gmra.mrb[0].mxu0 %v3731
  %v4100 = vpop.f32.mrb[0].mxu0
  %v4101 = vadd.f32 %v3559, %v4100
  %v4102 = vpop.f32.mrb[0].mxu0
  %4103 = vmatprep.mubr.f32.mxu0 0.0
  %4104 = vmatmul.mubr.f32.gmra.mrb[0].mxu0 %v3734
  %v4105 = vpop.f32.mrb[0].mxu0
  %v4106 = vadd.f32 %v3559, %v4105
  %v4107 = vpop.f32.mrb[0].mxu0
  %4108 = vmatprep.mubr.f32.mxu0 0.0
  %4109 = vmatmul.mubr.f32.gmra.mrb[0].mxu0 %v3737
  %v4110 = vpop.f32.mrb[0].mxu0
  %v4111 = vadd.f32 %v3559, %v4110
  %v4112 = vpop.f32.mrb[0].mxu0
  %4113 = vmatprep.mubr.f32.mxu0 0.0
  %4114 = vmatmul.mubr.f32.gmra.mrb[0].mxu0 %v3740
  %v4115 = vpop.f32.mrb[0].mxu0
  %v4116 = vadd.f32 %v3559, %v4115
  %v4117 = vpop.f32.mrb[0].mxu0
  %4118 = vmatprep.mubr.f32.mxu0 0.0
  %4119 = vmatmul.mubr.f32.gmra.mrb[0].mxu0 %v3743
  %v4120 = vpop.f32.mrb[0].mxu0
  %v4121 = vadd.f32 %v3559, %v4120
  %v4122 = vpop.f32.mrb[0].mxu0
  %4123 = vmatprep.mubr.f32.mxu0 0.0
  %4124 = vmatmul.mubr.f32.gmra.mrb[0].mxu0 %v3746
  %v4125 = vpop.f32.mrb[0].mxu0
  %v4126 = vadd.f32 %v3559, %v4125
  %v4127 = vpop.f32.mrb[0].mxu0
  %4128 = vmatprep.mubr.f32.mxu0 0.0
  %4129 = vmatmul.mubr.f32.gmra.mrb[0].mxu0 %v3749
  %v4130 = vpop.f32.mrb[0].mxu0
  %v4131 = vadd.f32 %v3559, %v4130
  %v4132 = vpop.f32.mrb[0].mxu0
  %4133 = vmatprep.mubr.f32.mxu0 0.0
  %4134 = vmatmul.mubr.f32.gmra.mrb[0].mxu0 %v3752
  %v4135 = vpop.f32.mrb[0].mxu0
  %v4136 = vadd.f32 %v3559, %v4135
  %v4137 = vpop.f32.mrb[0].mxu0
  %4138 = vdwg.mxu0
  %v4139 = vmul.f32 %v3821, 0.5
  %v4140 = vmul.f32 %v3826, 0.5
  %v4141 = vmul.f32 %v3831, 0.5
  %v4142 = vmul.f32 %v3836, 0.5
  %v4143 = vmul.f32 %v3841, 0.5
  %v4144 = vmul.f32 %v3846, 0.5
  %v4145 = vmul.f32 %v3851, 0.5
  %v4146 = vmul.f32 %v3856, 0.5
  %v4147 = vmul.f32 %v3861, 0.5
  %v4148 = vmul.f32 %v3866, 0.5
  %v4149 = vmul.f32 %v3871, 0.5
  %v4150 = vmul.f32 %v3876, 0.5
  %v4151 = vmul.f32 %v3881, 0.5
  %v4152 = vmul.f32 %v3886, 0.5
  %v4153 = vmul.f32 %v3891, 0.5
  %v4154 = vmul.f32 %v3896, 0.5
  %v4155 = vmul.f32 %v3901, 0.5
  %v4156 = vmul.f32 %v3906, 0.5
  %v4157 = vmul.f32 %v3911, 0.5
  %v4158 = vmul.f32 %v3916, 0.5
  %v4159 = vmul.f32 %v3921, 0.5
  %v4160 = vmul.f32 %v3926, 0.5
  %v4161 = vmul.f32 %v3931, 0.5
  %v4162 = vmul.f32 %v3936, 0.5
  %v4163 = vmul.f32 %v3941, 0.5
  %v4164 = vmul.f32 %v3946, 0.5
  %v4165 = vmul.f32 %v3951, 0.5
  %v4166 = vmul.f32 %v3956, 0.5
  %v4167 = vmul.f32 %v3961, 0.5
  %v4168 = vmul.f32 %v3966, 0.5
  %v4169 = vmul.f32 %v3971, 0.5
  %v4170 = vmul.f32 %v3976, 0.5
  %v4171 = vmul.f32 %v3981, 0.5
  %v4172 = vmul.f32 %v3986, 0.5
  %v4173 = vmul.f32 %v3991, 0.5
  %v4174 = vmul.f32 %v3996, 0.5
  %v4175 = vmul.f32 %v4001, 0.5
  %v4176 = vmul.f32 %v4006, 0.5
  %v4177 = vmul.f32 %v4011, 0.5
  %v4178 = vmul.f32 %v4016, 0.5
  %v4179 = vmul.f32 %v4021, 0.5
  %v4180 = vmul.f32 %v4026, 0.5
  %v4181 = vmul.f32 %v4031, 0.5
  %v4182 = vmul.f32 %v4036, 0.5
  %v4183 = vmul.f32 %v4041, 0.5
  %v4184 = vmul.f32 %v4046, 0.5
  %v4185 = vmul.f32 %v4051, 0.5
  %v4186 = vmul.f32 %v4056, 0.5
  %v4187 = vmul.f32 %v4061, 0.5
  %v4188 = vmul.f32 %v4066, 0.5
  %v4189 = vmul.f32 %v4071, 0.5
  %v4190 = vmul.f32 %v4076, 0.5
  %v4191 = vmul.f32 %v4081, 0.5
  %v4192 = vmul.f32 %v4086, 0.5
  %v4193 = vmul.f32 %v4091, 0.5
  %v4194 = vmul.f32 %v4096, 0.5
  %v4195 = vmul.f32 %v4101, 0.5
  %v4196 = vmul.f32 %v4106, 0.5
  %v4197 = vmul.f32 %v4111, 0.5
  %v4198 = vmul.f32 %v4116, 0.5
  %v4199 = vmul.f32 %v4121, 0.5
  %v4200 = vmul.f32 %v4126, 0.5
  %v4201 = vmul.f32 %v4131, 0.5
  %v4202 = vmul.f32 %v4136, 0.5
  %v4203 = vmul.f32 %v3821, 0.70710677
  %v4204 = vmul.f32 %v3826, 0.70710677
  %v4205 = vmul.f32 %v3831, 0.70710677
  %v4206 = vmul.f32 %v3836, 0.70710677
  %v4207 = vmul.f32 %v3841, 0.70710677
  %v4208 = vmul.f32 %v3846, 0.70710677
  %v4209 = vmul.f32 %v3851, 0.70710677
  %v4210 = vmul.f32 %v3856, 0.70710677
  %v4211 = vmul.f32 %v3861, 0.70710677
  %v4212 = vmul.f32 %v3866, 0.70710677
  %v4213 = vmul.f32 %v3871, 0.70710677
  %v4214 = vmul.f32 %v3876, 0.70710677
  %v4215 = vmul.f32 %v3881, 0.70710677
  %v4216 = vmul.f32 %v3886, 0.70710677
  %v4217 = vmul.f32 %v3891, 0.70710677
  %v4218 = vmul.f32 %v3896, 0.70710677
  %v4219 = vmul.f32 %v3901, 0.70710677
  %v4220 = vmul.f32 %v3906, 0.70710677
  %v4221 = vmul.f32 %v3911, 0.70710677
  %v4222 = vmul.f32 %v3916, 0.70710677
  %v4223 = vmul.f32 %v3921, 0.70710677
  %v4224 = vmul.f32 %v3926, 0.70710677
  %v4225 = vmul.f32 %v3931, 0.70710677
  %v4226 = vmul.f32 %v3936, 0.70710677
  %v4227 = vmul.f32 %v3941, 0.70710677
  %v4228 = vmul.f32 %v3946, 0.70710677
  %v4229 = vmul.f32 %v3951, 0.70710677
  %v4230 = vmul.f32 %v3956, 0.70710677
  %v4231 = vmul.f32 %v3961, 0.70710677
  %v4232 = vmul.f32 %v3966, 0.70710677
  %v4233 = vmul.f32 %v3971, 0.70710677
  %v4234 = vmul.f32 %v3976, 0.70710677
  %v4235 = vmul.f32 %v3981, 0.70710677
  %v4236 = vmul.f32 %v3986, 0.70710677
  %v4237 = vmul.f32 %v3991, 0.70710677
  %v4238 = vmul.f32 %v3996, 0.70710677
  %v4239 = vmul.f32 %v4001, 0.70710677
  %v4240 = vmul.f32 %v4006, 0.70710677
  %v4241 = vmul.f32 %v4011, 0.70710677
  %v4242 = vmul.f32 %v4016, 0.70710677
  %v4243 = vmul.f32 %v4021, 0.70710677
  %v4244 = vmul.f32 %v4026, 0.70710677
  %v4245 = vmul.f32 %v4031, 0.70710677
  %v4246 = vmul.f32 %v4036, 0.70710677
  %v4247 = vmul.f32 %v4041, 0.70710677
  %v4248 = vmul.f32 %v4046, 0.70710677
  %v4249 = vmul.f32 %v4051, 0.70710677
  %v4250 = vmul.f32 %v4056, 0.70710677
  %v4251 = vmul.f32 %v4061, 0.70710677
  %v4252 = vmul.f32 %v4066, 0.70710677
  %v4253 = vmul.f32 %v4071, 0.70710677
  %v4254 = vmul.f32 %v4076, 0.70710677
  %v4255 = vmul.f32 %v4081, 0.70710677
  %v4256 = vmul.f32 %v4086, 0.70710677
  %v4257 = vmul.f32 %v4091, 0.70710677
  %v4258 = vmul.f32 %v4096, 0.70710677
  %v4259 = vmul.f32 %v4101, 0.70710677
  %v4260 = vmul.f32 %v4106, 0.70710677
  %v4261 = vmul.f32 %v4111, 0.70710677
  %v4262 = vmul.f32 %v4116, 0.70710677
  %v4263 = vmul.f32 %v4121, 0.70710677
  %v4264 = vmul.f32 %v4126, 0.70710677
  %v4265 = vmul.f32 %v4131, 0.70710677
  %v4266 = vmul.f32 %v4136, 0.70710677
  %v4267 = verf.f32.pop %v4203
  %v4268 = verf.f32.pop %v4204
  %v4269 = verf.f32.pop %v4205
  %v4270 = verf.f32.pop %v4206
  %v4271 = verf.f32.pop %v4207
  %v4272 = verf.f32.pop %v4208
  %v4273 = verf.f32.pop %v4209
  %v4274 = verf.f32.pop %v4210
  %v4275 = verf.f32.pop %v4211
  %v4276 = verf.f32.pop %v4212
  %v4277 = verf.f32.pop %v4213
  %v4278 = verf.f32.pop %v4214
  %v4279 = verf.f32.pop %v4215
  %v4280 = verf.f32.pop %v4216
  %v4281 = verf.f32.pop %v4217
  %v4282 = verf.f32.pop %v4218
  %v4283 = verf.f32.pop %v4219
  %v4284 = verf.f32.pop %v4220
  %v4285 = verf.f32.pop %v4221
  %v4286 = verf.f32.pop %v4222
  %v4287 = verf.f32.pop %v4223
  %v4288 = verf.f32.pop %v4224
  %v4289 = verf.f32.pop %v4225
  %v4290 = verf.f32.pop %v4226
  %v4291 = verf.f32.pop %v4227
  %v4292 = verf.f32.pop %v4228
  %v4293 = verf.f32.pop %v4229
  %v4294 = verf.f32.pop %v4230
  %v4295 = verf.f32.pop %v4231
  %v4296 = verf.f32.pop %v4232
  %v4297 = verf.f32.pop %v4233
  %v4298 = verf.f32.pop %v4234
  %v4299 = verf.f32.pop %v4235
  %v4300 = verf.f32.pop %v4236
  %v4301 = verf.f32.pop %v4237
  %v4302 = verf.f32.pop %v4238
  %v4303 = verf.f32.pop %v4239
  %v4304 = verf.f32.pop %v4240
  %v4305 = verf.f32.pop %v4241
  %v4306 = verf.f32.pop %v4242
  %v4307 = verf.f32.pop %v4243
  %v4308 = verf.f32.pop %v4244
  %v4309 = verf.f32.pop %v4245
  %v4310 = verf.f32.pop %v4246
  %v4311 = verf.f32.pop %v4247
  %v4312 = verf.f32.pop %v4248
  %v4313 = verf.f32.pop %v4249
  %v4314 = verf.f32.pop %v4250
  %v4315 = verf.f32.pop %v4251
  %v4316 = verf.f32.pop %v4252
  %v4317 = verf.f32.pop %v4253
  %v4318 = verf.f32.pop %v4254
  %v4319 = verf.f32.pop %v4255
  %v4320 = verf.f32.pop %v4256
  %v4321 = verf.f32.pop %v4257
  %v4322 = verf.f32.pop %v4258
  %v4323 = verf.f32.pop %v4259
  %v4324 = verf.f32.pop %v4260
  %v4325 = verf.f32.pop %v4261
  %v4326 = verf.f32.pop %v4262
  %v4327 = verf.f32.pop %v4263
  %v4328 = verf.f32.pop %v4264
  %v4329 = verf.f32.pop %v4265
  %v4330 = verf.f32.pop %v4266
  %v4331 = vadd.f32 %v4267, 1.0
  %v4332 = vadd.f32 %v4268, 1.0
  %v4333 = vadd.f32 %v4269, 1.0
  %v4334 = vadd.f32 %v4270, 1.0
  %v4335 = vadd.f32 %v4271, 1.0
  %v4336 = vadd.f32 %v4272, 1.0
  %v4337 = vadd.f32 %v4273, 1.0
  %v4338 = vadd.f32 %v4274, 1.0
  %v4339 = vadd.f32 %v4275, 1.0
  %v4340 = vadd.f32 %v4276, 1.0
  %v4341 = vadd.f32 %v4277, 1.0
  %v4342 = vadd.f32 %v4278, 1.0
  %v4343 = vadd.f32 %v4279, 1.0
  %v4344 = vadd.f32 %v4280, 1.0
  %v4345 = vadd.f32 %v4281, 1.0
  %v4346 = vadd.f32 %v4282, 1.0
  %v4347 = vadd.f32 %v4283, 1.0
  %v4348 = vadd.f32 %v4284, 1.0
  %v4349 = vadd.f32 %v4285, 1.0
  %v4350 = vadd.f32 %v4286, 1.0
  %v4351 = vadd.f32 %v4287, 1.0
  %v4352 = vadd.f32 %v4288, 1.0
  %v4353 = vadd.f32 %v4289, 1.0
  %v4354 = vadd.f32 %v4290, 1.0
  %v4355 = vadd.f32 %v4291, 1.0
  %v4356 = vadd.f32 %v4292, 1.0
  %v4357 = vadd.f32 %v4293, 1.0
  %v4358 = vadd.f32 %v4294, 1.0
  %v4359 = vadd.f32 %v4295, 1.0
  %v4360 = vadd.f32 %v4296, 1.0
  %v4361 = vadd.f32 %v4297, 1.0
  %v4362 = vadd.f32 %v4298, 1.0
  %v4363 = vadd.f32 %v4299, 1.0
  %v4364 = vadd.f32 %v4300, 1.0
  %v4365 = vadd.f32 %v4301, 1.0
  %v4366 = vadd.f32 %v4302, 1.0
  %v4367 = vadd.f32 %v4303, 1.0
  %v4368 = vadd.f32 %v4304, 1.0
  %v4369 = vadd.f32 %v4305, 1.0
  %v4370 = vadd.f32 %v4306, 1.0
  %v4371 = vadd.f32 %v4307, 1.0
  %v4372 = vadd.f32 %v4308, 1.0
  %v4373 = vadd.f32 %v4309, 1.0
  %v4374 = vadd.f32 %v4310, 1.0
  %v4375 = vadd.f32 %v4311, 1.0
  %v4376 = vadd.f32 %v4312, 1.0
  %v4377 = vadd.f32 %v4313, 1.0
  %v4378 = vadd.f32 %v4314, 1.0
  %v4379 = vadd.f32 %v4315, 1.0
  %v4380 = vadd.f32 %v4316, 1.0
  %v4381 = vadd.f32 %v4317, 1.0
  %v4382 = vadd.f32 %v4318, 1.0
  %v4383 = vadd.f32 %v4319, 1.0
  %v4384 = vadd.f32 %v4320, 1.0
  %v4385 = vadd.f32 %v4321, 1.0
  %v4386 = vadd.f32 %v4322, 1.0
  %v4387 = vadd.f32 %v4323, 1.0
  %v4388 = vadd.f32 %v4324, 1.0
  %v4389 = vadd.f32 %v4325, 1.0
  %v4390 = vadd.f32 %v4326, 1.0
  %v4391 = vadd.f32 %v4327, 1.0
  %v4392 = vadd.f32 %v4328, 1.0
  %v4393 = vadd.f32 %v4329, 1.0
  %v4394 = vadd.f32 %v4330, 1.0
  %v4395 = vmul.f32 %v4139, %v4331
  %v4396 = vmul.f32 %v4140, %v4332
  %v4397 = vmul.f32 %v4141, %v4333
  %v4398 = vmul.f32 %v4142, %v4334
  %v4399 = vmul.f32 %v4143, %v4335
  %v4400 = vmul.f32 %v4144, %v4336
  %v4401 = vmul.f32 %v4145, %v4337
  %v4402 = vmul.f32 %v4146, %v4338
  %v4403 = vmul.f32 %v4147, %v4339
  %v4404 = vmul.f32 %v4148, %v4340
  %v4405 = vmul.f32 %v4149, %v4341
  %v4406 = vmul.f32 %v4150, %v4342
  %v4407 = vmul.f32 %v4151, %v4343
  %v4408 = vmul.f32 %v4152, %v4344
  %v4409 = vmul.f32 %v4153, %v4345
  %v4410 = vmul.f32 %v4154, %v4346
  %v4411 = vmul.f32 %v4155, %v4347
  %v4412 = vmul.f32 %v4156, %v4348
  %v4413 = vmul.f32 %v4157, %v4349
  %v4414 = vmul.f32 %v4158, %v4350
  %v4415 = vmul.f32 %v4159, %v4351
  %v4416 = vmul.f32 %v4160, %v4352
  %v4417 = vmul.f32 %v4161, %v4353
  %v4418 = vmul.f32 %v4162, %v4354
  %v4419 = vmul.f32 %v4163, %v4355
  %v4420 = vmul.f32 %v4164, %v4356
  %v4421 = vmul.f32 %v4165, %v4357
  %v4422 = vmul.f32 %v4166, %v4358
  %v4423 = vmul.f32 %v4167, %v4359
  %v4424 = vmul.f32 %v4168, %v4360
  %v4425 = vmul.f32 %v4169, %v4361
  %v4426 = vmul.f32 %v4170, %v4362
  %v4427 = vmul.f32 %v4171, %v4363
  %v4428 = vmul.f32 %v4172, %v4364
  %v4429 = vmul.f32 %v4173, %v4365
  %v4430 = vmul.f32 %v4174, %v4366
  %v4431 = vmul.f32 %v4175, %v4367
  %v4432 = vmul.f32 %v4176, %v4368
  %v4433 = vmul.f32 %v4177, %v4369
  %v4434 = vmul.f32 %v4178, %v4370
  %v4435 = vmul.f32 %v4179, %v4371
  %v4436 = vmul.f32 %v4180, %v4372
  %v4437 = vmul.f32 %v4181, %v4373
  %v4438 = vmul.f32 %v4182, %v4374
  %v4439 = vmul.f32 %v4183, %v4375
  %v4440 = vmul.f32 %v4184, %v4376
  %v4441 = vmul.f32 %v4185, %v4377
  %v4442 = vmul.f32 %v4186, %v4378
  %v4443 = vmul.f32 %v4187, %v4379
  %v4444 = vmul.f32 %v4188, %v4380
  %v4445 = vmul.f32 %v4189, %v4381
  %v4446 = vmul.f32 %v4190, %v4382
  %v4447 = vmul.f32 %v4191, %v4383
  %v4448 = vmul.f32 %v4192, %v4384
  %v4449 = vmul.f32 %v4193, %v4385
  %v4450 = vmul.f32 %v4194, %v4386
  %v4451 = vmul.f32 %v4195, %v4387
  %v4452 = vmul.f32 %v4196, %v4388
  %v4453 = vmul.f32 %v4197, %v4389
  %v4454 = vmul.f32 %v4198, %v4390
  %v4455 = vmul.f32 %v4199, %v4391
  %v4456 = vmul.f32 %v4200, %v4392
  %v4457 = vmul.f32 %v4201, %v4393
  %v4458 = vmul.f32 %v4202, %v4394
  %v4459 = vmul.f32 %v49, %v113
  %v4460 = vmul.f32 %v50, %v114
  %v4461 = vmul.f32 %v51, %v115
  %v4462 = vmul.f32 %v52, %v116
  %v4463 = vmul.f32 %v53, %v117
  %v4464 = vmul.f32 %v54, %v118
  %v4465 = vmul.f32 %v55, %v119
  %v4466 = vmul.f32 %v56, %v120
  %v4467 = vmul.f32 %v57, %v121
  %v4468 = vmul.f32 %v58, %v122
  %v4469 = vmul.f32 %v59, %v123
  %v4470 = vmul.f32 %v60, %v124
  %v4471 = vmul.f32 %v61, %v125
  %v4472 = vmul.f32 %v62, %v126
  %v4473 = vmul.f32 %v63, %v127
  %v4474 = vmul.f32 %v64, %v128
  %v4475 = vmul.f32 %v65, %v129
  %v4476 = vmul.f32 %v66, %v130
  %v4477 = vmul.f32 %v67, %v131
  %v4478 = vmul.f32 %v68, %v132
  %v4479 = vmul.f32 %v69, %v133
  %v4480 = vmul.f32 %v70, %v134
  %v4481 = vmul.f32 %v71, %v135
  %v4482 = vmul.f32 %v72, %v136
  %v4483 = vmul.f32 %v73, %v137
  %v4484 = vmul.f32 %v74, %v138
  %v4485 = vmul.f32 %v75, %v139
  %v4486 = vmul.f32 %v76, %v140
  %v4487 = vmul.f32 %v77, %v141
  %v4488 = vmul.f32 %v78, %v142
  %v4489 = vmul.f32 %v79, %v143
  %v4490 = vmul.f32 %v80, %v144
  %v4491 = vmul.f32 %v81, %v145
  %v4492 = vmul.f32 %v82, %v146
  %v4493 = vmul.f32 %v83, %v147
  %v4494 = vmul.f32 %v84, %v148
  %v4495 = vmul.f32 %v85, %v149
  %v4496 = vmul.f32 %v86, %v150
  %v4497 = vmul.f32 %v87, %v151
  %v4498 = vmul.f32 %v88, %v152
  %v4499 = vmul.f32 %v89, %v153
  %v4500 = vmul.f32 %v90, %v154
  %v4501 = vmul.f32 %v91, %v155
  %v4502 = vmul.f32 %v92, %v156
  %v4503 = vmul.f32 %v93, %v157
  %v4504 = vmul.f32 %v94, %v158
  %v4505 = vmul.f32 %v95, %v159
  %v4506 = vmul.f32 %v96, %v160
  %v4507 = vmul.f32 %v97, %v161
  %v4508 = vmul.f32 %v98, %v162
  %v4509 = vmul.f32 %v99, %v163
  %v4510 = vmul.f32 %v100, %v164
  %v4511 = vmul.f32 %v101, %v165
  %v4512 = vmul.f32 %v102, %v166
  %v4513 = vmul.f32 %v103, %v167
  %v4514 = vmul.f32 %v104, %v168
  %v4515 = vmul.f32 %v105, %v169
  %v4516 = vmul.f32 %v106, %v170
  %v4517 = vmul.f32 %v107, %v171
  %v4518 = vmul.f32 %v108, %v172
  %v4519 = vmul.f32 %v109, %v173
  %v4520 = vmul.f32 %v110, %v174
  %v4521 = vmul.f32 %v111, %v175
  %v4522 = vmul.f32 %v112, %v176
  %v4523 = vld [vmem:[%s11] sm:$0x1]
  %v4525 = vlaneseq
  %v4526 = vshrl.u32 %v4525, 7
  %v4527 = vsub.s32 0, %v4526
  %v4528 = vrot.slane %v4523, %v4527
  %v4530 = vmul.f32 %v4395, %v4528
  %v4531 = vmul.f32 %v4396, %v4528
  %v4532 = vmul.f32 %v4397, %v4528
  %v4533 = vmul.f32 %v4398, %v4528
  %v4534 = vmul.f32 %v4399, %v4528
  %v4535 = vmul.f32 %v4400, %v4528
  %v4536 = vmul.f32 %v4401, %v4528
  %v4537 = vmul.f32 %v4402, %v4528
  %v4538 = vmul.f32 %v4403, %v4528
  %v4539 = vmul.f32 %v4404, %v4528
  %v4540 = vmul.f32 %v4405, %v4528
  %v4541 = vmul.f32 %v4406, %v4528
  %v4542 = vmul.f32 %v4407, %v4528
  %v4543 = vmul.f32 %v4408, %v4528
  %v4544 = vmul.f32 %v4409, %v4528
  %v4545 = vmul.f32 %v4410, %v4528
  %v4546 = vmul.f32 %v4411, %v4528
  %v4547 = vmul.f32 %v4412, %v4528
  %v4548 = vmul.f32 %v4413, %v4528
  %v4549 = vmul.f32 %v4414, %v4528
  %v4550 = vmul.f32 %v4415, %v4528
  %v4551 = vmul.f32 %v4416, %v4528
  %v4552 = vmul.f32 %v4417, %v4528
  %v4553 = vmul.f32 %v4418, %v4528
  %v4554 = vmul.f32 %v4419, %v4528
  %v4555 = vmul.f32 %v4420, %v4528
  %v4556 = vmul.f32 %v4421, %v4528
  %v4557 = vmul.f32 %v4422, %v4528
  %v4558 = vmul.f32 %v4423, %v4528
  %v4559 = vmul.f32 %v4424, %v4528
  %v4560 = vmul.f32 %v4425, %v4528
  %v4561 = vmul.f32 %v4426, %v4528
  %v4562 = vmul.f32 %v4427, %v4528
  %v4563 = vmul.f32 %v4428, %v4528
  %v4564 = vmul.f32 %v4429, %v4528
  %v4565 = vmul.f32 %v4430, %v4528
  %v4566 = vmul.f32 %v4431, %v4528
  %v4567 = vmul.f32 %v4432, %v4528
  %v4568 = vmul.f32 %v4433, %v4528
  %v4569 = vmul.f32 %v4434, %v4528
  %v4570 = vmul.f32 %v4435, %v4528
  %v4571 = vmul.f32 %v4436, %v4528
  %v4572 = vmul.f32 %v4437, %v4528
  %v4573 = vmul.f32 %v4438, %v4528
  %v4574 = vmul.f32 %v4439, %v4528
  %v4575 = vmul.f32 %v4440, %v4528
  %v4576 = vmul.f32 %v4441, %v4528
  %v4577 = vmul.f32 %v4442, %v4528
  %v4578 = vmul.f32 %v4443, %v4528
  %v4579 = vmul.f32 %v4444, %v4528
  %v4580 = vmul.f32 %v4445, %v4528
  %v4581 = vmul.f32 %v4446, %v4528
  %v4582 = vmul.f32 %v4447, %v4528
  %v4583 = vmul.f32 %v4448, %v4528
  %v4584 = vmul.f32 %v4449, %v4528
  %v4585 = vmul.f32 %v4450, %v4528
  %v4586 = vmul.f32 %v4451, %v4528
  %v4587 = vmul.f32 %v4452, %v4528
  %v4588 = vmul.f32 %v4453, %v4528
  %v4589 = vmul.f32 %v4454, %v4528
  %v4590 = vmul.f32 %v4455, %v4528
  %v4591 = vmul.f32 %v4456, %v4528
  %v4592 = vmul.f32 %v4457, %v4528
  %v4593 = vmul.f32 %v4458, %v4528
  %vm4594 = vcmask 64512
  %v4595 = vsel %vm4594, %v4530, 0.0
  %4596 = vadd.xlane.f32.xlu0 %v4595
  %v4597 = vpop.xlane.xlu0 %4596
  %v4598 = vsel %vm4594, %v4531, 0.0
  %4599 = vadd.xlane.f32.xlu0 %v4598
  %v4600 = vpop.xlane.xlu0 %4599
  %v4601 = vsel %vm4594, %v4532, 0.0
  %4602 = vadd.xlane.f32.xlu0 %v4601
  %v4603 = vpop.xlane.xlu0 %4602
  %v4604 = vsel %vm4594, %v4533, 0.0
  %4605 = vadd.xlane.f32.xlu0 %v4604
  %v4606 = vpop.xlane.xlu0 %4605
  %v4607 = vsel %vm4594, %v4534, 0.0
  %4608 = vadd.xlane.f32.xlu0 %v4607
  %v4609 = vpop.xlane.xlu0 %4608
  %v4610 = vsel %vm4594, %v4535, 0.0
  %4611 = vadd.xlane.f32.xlu0 %v4610
  %v4612 = vpop.xlane.xlu0 %4611
  %v4613 = vsel %vm4594, %v4536, 0.0
  %4614 = vadd.xlane.f32.xlu0 %v4613
  %v4615 = vpop.xlane.xlu0 %4614
  %v4616 = vsel %vm4594, %v4537, 0.0
  %4617 = vadd.xlane.f32.xlu0 %v4616
  %v4618 = vpop.xlane.xlu0 %4617
  %v4619 = vsel %vm4594, %v4538, 0.0
  %4620 = vadd.xlane.f32.xlu0 %v4619
  %v4621 = vpop.xlane.xlu0 %4620
  %v4622 = vsel %vm4594, %v4539, 0.0
  %4623 = vadd.xlane.f32.xlu0 %v4622
  %v4624 = vpop.xlane.xlu0 %4623
  %v4625 = vsel %vm4594, %v4540, 0.0
  %4626 = vadd.xlane.f32.xlu0 %v4625
  %v4627 = vpop.xlane.xlu0 %4626
  %v4628 = vsel %vm4594, %v4541, 0.0
  %4629 = vadd.xlane.f32.xlu0 %v4628
  %v4630 = vpop.xlane.xlu0 %4629
  %v4631 = vsel %vm4594, %v4542, 0.0
  %4632 = vadd.xlane.f32.xlu0 %v4631
  %v4633 = vpop.xlane.xlu0 %4632
  %v4634 = vsel %vm4594, %v4543, 0.0
  %4635 = vadd.xlane.f32.xlu0 %v4634
  %v4636 = vpop.xlane.xlu0 %4635
  %v4637 = vsel %vm4594, %v4544, 0.0
  %4638 = vadd.xlane.f32.xlu0 %v4637
  %v4639 = vpop.xlane.xlu0 %4638
  %v4640 = vsel %vm4594, %v4545, 0.0
  %4641 = vadd.xlane.f32.xlu0 %v4640
  %v4642 = vpop.xlane.xlu0 %4641
  %v4643 = vsel %vm4594, %v4546, 0.0
  %4644 = vadd.xlane.f32.xlu0 %v4643
  %v4645 = vpop.xlane.xlu0 %4644
  %v4646 = vsel %vm4594, %v4547, 0.0
  %4647 = vadd.xlane.f32.xlu0 %v4646
  %v4648 = vpop.xlane.xlu0 %4647
  %v4649 = vsel %vm4594, %v4548, 0.0
  %4650 = vadd.xlane.f32.xlu0 %v4649
  %v4651 = vpop.xlane.xlu0 %4650
  %v4652 = vsel %vm4594, %v4549, 0.0
  %4653 = vadd.xlane.f32.xlu0 %v4652
  %v4654 = vpop.xlane.xlu0 %4653
  %v4655 = vsel %vm4594, %v4550, 0.0
  %4656 = vadd.xlane.f32.xlu0 %v4655
  %v4657 = vpop.xlane.xlu0 %4656
  %v4658 = vsel %vm4594, %v4551, 0.0
  %4659 = vadd.xlane.f32.xlu0 %v4658
  %v4660 = vpop.xlane.xlu0 %4659
  %v4661 = vsel %vm4594, %v4552, 0.0
  %4662 = vadd.xlane.f32.xlu0 %v4661
  %v4663 = vpop.xlane.xlu0 %4662
  %v4664 = vsel %vm4594, %v4553, 0.0
  %4665 = vadd.xlane.f32.xlu0 %v4664
  %v4666 = vpop.xlane.xlu0 %4665
  %v4667 = vsel %vm4594, %v4554, 0.0
  %4668 = vadd.xlane.f32.xlu0 %v4667
  %v4669 = vpop.xlane.xlu0 %4668
  %v4670 = vsel %vm4594, %v4555, 0.0
  %4671 = vadd.xlane.f32.xlu0 %v4670
  %v4672 = vpop.xlane.xlu0 %4671
  %v4673 = vsel %vm4594, %v4556, 0.0
  %4674 = vadd.xlane.f32.xlu0 %v4673
  %v4675 = vpop.xlane.xlu0 %4674
  %v4676 = vsel %vm4594, %v4557, 0.0
  %4677 = vadd.xlane.f32.xlu0 %v4676
  %v4678 = vpop.xlane.xlu0 %4677
  %v4679 = vsel %vm4594, %v4558, 0.0
  %4680 = vadd.xlane.f32.xlu0 %v4679
  %v4681 = vpop.xlane.xlu0 %4680
  %v4682 = vsel %vm4594, %v4559, 0.0
  %4683 = vadd.xlane.f32.xlu0 %v4682
  %v4684 = vpop.xlane.xlu0 %4683
  %v4685 = vsel %vm4594, %v4560, 0.0
  %4686 = vadd.xlane.f32.xlu0 %v4685
  %v4687 = vpop.xlane.xlu0 %4686
  %v4688 = vsel %vm4594, %v4561, 0.0
  %4689 = vadd.xlane.f32.xlu0 %v4688
  %v4690 = vpop.xlane.xlu0 %4689
  %v4691 = vsel %vm4594, %v4562, 0.0
  %4692 = vadd.xlane.f32.xlu0 %v4691
  %v4693 = vpop.xlane.xlu0 %4692
  %v4694 = vsel %vm4594, %v4563, 0.0
  %4695 = vadd.xlane.f32.xlu0 %v4694
  %v4696 = vpop.xlane.xlu0 %4695
  %v4697 = vsel %vm4594, %v4564, 0.0
  %4698 = vadd.xlane.f32.xlu0 %v4697
  %v4699 = vpop.xlane.xlu0 %4698
  %v4700 = vsel %vm4594, %v4565, 0.0
  %4701 = vadd.xlane.f32.xlu0 %v4700
  %v4702 = vpop.xlane.xlu0 %4701
  %v4703 = vsel %vm4594, %v4566, 0.0
  %4704 = vadd.xlane.f32.xlu0 %v4703
  %v4705 = vpop.xlane.xlu0 %4704
  %v4706 = vsel %vm4594, %v4567, 0.0
  %4707 = vadd.xlane.f32.xlu0 %v4706
  %v4708 = vpop.xlane.xlu0 %4707
  %v4709 = vsel %vm4594, %v4568, 0.0
  %4710 = vadd.xlane.f32.xlu0 %v4709
  %v4711 = vpop.xlane.xlu0 %4710
  %v4712 = vsel %vm4594, %v4569, 0.0
  %4713 = vadd.xlane.f32.xlu0 %v4712
  %v4714 = vpop.xlane.xlu0 %4713
  %v4715 = vsel %vm4594, %v4570, 0.0
  %4716 = vadd.xlane.f32.xlu0 %v4715
  %v4717 = vpop.xlane.xlu0 %4716
  %v4718 = vsel %vm4594, %v4571, 0.0
  %4719 = vadd.xlane.f32.xlu0 %v4718
  %v4720 = vpop.xlane.xlu0 %4719
  %v4721 = vsel %vm4594, %v4572, 0.0
  %4722 = vadd.xlane.f32.xlu0 %v4721
  %v4723 = vpop.xlane.xlu0 %4722
  %v4724 = vsel %vm4594, %v4573, 0.0
  %4725 = vadd.xlane.f32.xlu0 %v4724
  %v4726 = vpop.xlane.xlu0 %4725
  %v4727 = vsel %vm4594, %v4574, 0.0
  %4728 = vadd.xlane.f32.xlu0 %v4727
  %v4729 = vpop.xlane.xlu0 %4728
  %v4730 = vsel %vm4594, %v4575, 0.0
  %4731 = vadd.xlane.f32.xlu0 %v4730
  %v4732 = vpop.xlane.xlu0 %4731
  %v4733 = vsel %vm4594, %v4576, 0.0
  %4734 = vadd.xlane.f32.xlu0 %v4733
  %v4735 = vpop.xlane.xlu0 %4734
  %v4736 = vsel %vm4594, %v4577, 0.0
  %4737 = vadd.xlane.f32.xlu0 %v4736
  %v4738 = vpop.xlane.xlu0 %4737
  %v4739 = vsel %vm4594, %v4578, 0.0
  %4740 = vadd.xlane.f32.xlu0 %v4739
  %v4741 = vpop.xlane.xlu0 %4740
  %v4742 = vsel %vm4594, %v4579, 0.0
  %4743 = vadd.xlane.f32.xlu0 %v4742
  %v4744 = vpop.xlane.xlu0 %4743
  %v4745 = vsel %vm4594, %v4580, 0.0
  %4746 = vadd.xlane.f32.xlu0 %v4745
  %v4747 = vpop.xlane.xlu0 %4746
  %v4748 = vsel %vm4594, %v4581, 0.0
  %4749 = vadd.xlane.f32.xlu0 %v4748
  %v4750 = vpop.xlane.xlu0 %4749
  %v4751 = vsel %vm4594, %v4582, 0.0
  %4752 = vadd.xlane.f32.xlu0 %v4751
  %v4753 = vpop.xlane.xlu0 %4752
  %v4754 = vsel %vm4594, %v4583, 0.0
  %4755 = vadd.xlane.f32.xlu0 %v4754
  %v4756 = vpop.xlane.xlu0 %4755
  %v4757 = vsel %vm4594, %v4584, 0.0
  %4758 = vadd.xlane.f32.xlu0 %v4757
  %v4759 = vpop.xlane.xlu0 %4758
  %v4760 = vsel %vm4594, %v4585, 0.0
  %4761 = vadd.xlane.f32.xlu0 %v4760
  %v4762 = vpop.xlane.xlu0 %4761
  %v4763 = vsel %vm4594, %v4586, 0.0
  %4764 = vadd.xlane.f32.xlu0 %v4763
  %v4765 = vpop.xlane.xlu0 %4764
  %v4766 = vsel %vm4594, %v4587, 0.0
  %4767 = vadd.xlane.f32.xlu0 %v4766
  %v4768 = vpop.xlane.xlu0 %4767
  %v4769 = vsel %vm4594, %v4588, 0.0
  %4770 = vadd.xlane.f32.xlu0 %v4769
  %v4771 = vpop.xlane.xlu0 %4770
  %v4772 = vsel %vm4594, %v4589, 0.0
  %4773 = vadd.xlane.f32.xlu0 %v4772
  %v4774 = vpop.xlane.xlu0 %4773
  %v4775 = vsel %vm4594, %v4590, 0.0
  %4776 = vadd.xlane.f32.xlu0 %v4775
  %v4777 = vpop.xlane.xlu0 %4776
  %v4778 = vsel %vm4594, %v4591, 0.0
  %4779 = vadd.xlane.f32.xlu0 %v4778
  %v4780 = vpop.xlane.xlu0 %4779
  %v4781 = vsel %vm4594, %v4592, 0.0
  %4782 = vadd.xlane.f32.xlu0 %v4781
  %v4783 = vpop.xlane.xlu0 %4782
  %v4784 = vsel %vm4594, %v4593, 0.0
  %4785 = vadd.xlane.f32.xlu0 %v4784
  %v4786 = vpop.xlane.xlu0 %4785
  %v4787 = vld [vmem:[%s12] sm:$0x1]
  %v4789 = vlaneseq
  %v4790 = vshrl.u32 %v4789, 7
  %v4791 = vsub.s32 0, %v4790
  %v4792 = vrot.slane %v4787, %v4791
  %4793 = vrot.lane.b32.xlu0 %v4792, 32
  %v4794 = vpop.permute.xlu0 %4793
  %v4796 = vmul.f32 %v4459, %v4794
  %v4797 = vmul.f32 %v4460, %v4794
  %v4798 = vmul.f32 %v4461, %v4794
  %v4799 = vmul.f32 %v4462, %v4794
  %v4800 = vmul.f32 %v4463, %v4794
  %v4801 = vmul.f32 %v4464, %v4794
  %v4802 = vmul.f32 %v4465, %v4794
  %v4803 = vmul.f32 %v4466, %v4794
  %v4804 = vmul.f32 %v4467, %v4794
  %v4805 = vmul.f32 %v4468, %v4794
  %v4806 = vmul.f32 %v4469, %v4794
  %v4807 = vmul.f32 %v4470, %v4794
  %v4808 = vmul.f32 %v4471, %v4794
  %v4809 = vmul.f32 %v4472, %v4794
  %v4810 = vmul.f32 %v4473, %v4794
  %v4811 = vmul.f32 %v4474, %v4794
  %v4812 = vmul.f32 %v4475, %v4794
  %v4813 = vmul.f32 %v4476, %v4794
  %v4814 = vmul.f32 %v4477, %v4794
  %v4815 = vmul.f32 %v4478, %v4794
  %v4816 = vmul.f32 %v4479, %v4794
  %v4817 = vmul.f32 %v4480, %v4794
  %v4818 = vmul.f32 %v4481, %v4794
  %v4819 = vmul.f32 %v4482, %v4794
  %v4820 = vmul.f32 %v4483, %v4794
  %v4821 = vmul.f32 %v4484, %v4794
  %v4822 = vmul.f32 %v4485, %v4794
  %v4823 = vmul.f32 %v4486, %v4794
  %v4824 = vmul.f32 %v4487, %v4794
  %v4825 = vmul.f32 %v4488, %v4794
  %v4826 = vmul.f32 %v4489, %v4794
  %v4827 = vmul.f32 %v4490, %v4794
  %v4828 = vmul.f32 %v4491, %v4794
  %v4829 = vmul.f32 %v4492, %v4794
  %v4830 = vmul.f32 %v4493, %v4794
  %v4831 = vmul.f32 %v4494, %v4794
  %v4832 = vmul.f32 %v4495, %v4794
  %v4833 = vmul.f32 %v4496, %v4794
  %v4834 = vmul.f32 %v4497, %v4794
  %v4835 = vmul.f32 %v4498, %v4794
  %v4836 = vmul.f32 %v4499, %v4794
  %v4837 = vmul.f32 %v4500, %v4794
  %v4838 = vmul.f32 %v4501, %v4794
  %v4839 = vmul.f32 %v4502, %v4794
  %v4840 = vmul.f32 %v4503, %v4794
  %v4841 = vmul.f32 %v4504, %v4794
  %v4842 = vmul.f32 %v4505, %v4794
  %v4843 = vmul.f32 %v4506, %v4794
  %v4844 = vmul.f32 %v4507, %v4794
  %v4845 = vmul.f32 %v4508, %v4794
  %v4846 = vmul.f32 %v4509, %v4794
  %v4847 = vmul.f32 %v4510, %v4794
  %v4848 = vmul.f32 %v4511, %v4794
  %v4849 = vmul.f32 %v4512, %v4794
  %v4850 = vmul.f32 %v4513, %v4794
  %v4851 = vmul.f32 %v4514, %v4794
  %v4852 = vmul.f32 %v4515, %v4794
  %v4853 = vmul.f32 %v4516, %v4794
  %v4854 = vmul.f32 %v4517, %v4794
  %v4855 = vmul.f32 %v4518, %v4794
  %v4856 = vmul.f32 %v4519, %v4794
  %v4857 = vmul.f32 %v4520, %v4794
  %v4858 = vmul.f32 %v4521, %v4794
  %v4859 = vmul.f32 %v4522, %v4794
  %4924 = vrot.lane.b32.xlu0 %v4796, 96
  %v4925 = vpop.permute.xlu0 %4924
  %4926 = vrot.lane.b32.xlu0 %v4797, 96
  %v4927 = vpop.permute.xlu0 %4926
  %4928 = vrot.lane.b32.xlu0 %v4798, 96
  %v4929 = vpop.permute.xlu0 %4928
  %4930 = vrot.lane.b32.xlu0 %v4799, 96
  %v4931 = vpop.permute.xlu0 %4930
  %4932 = vrot.lane.b32.xlu0 %v4800, 96
  %v4933 = vpop.permute.xlu0 %4932
  %4934 = vrot.lane.b32.xlu0 %v4801, 96
  %v4935 = vpop.permute.xlu0 %4934
  %4936 = vrot.lane.b32.xlu0 %v4802, 96
  %v4937 = vpop.permute.xlu0 %4936
  %4938 = vrot.lane.b32.xlu0 %v4803, 96
  %v4939 = vpop.permute.xlu0 %4938
  %4940 = vrot.lane.b32.xlu0 %v4804, 96
  %v4941 = vpop.permute.xlu0 %4940
  %4942 = vrot.lane.b32.xlu0 %v4805, 96
  %v4943 = vpop.permute.xlu0 %4942
  %4944 = vrot.lane.b32.xlu0 %v4806, 96
  %v4945 = vpop.permute.xlu0 %4944
  %4946 = vrot.lane.b32.xlu0 %v4807, 96
  %v4947 = vpop.permute.xlu0 %4946
  %4948 = vrot.lane.b32.xlu0 %v4808, 96
  %v4949 = vpop.permute.xlu0 %4948
  %4950 = vrot.lane.b32.xlu0 %v4809, 96
  %v4951 = vpop.permute.xlu0 %4950
  %4952 = vrot.lane.b32.xlu0 %v4810, 96
  %v4953 = vpop.permute.xlu0 %4952
  %4954 = vrot.lane.b32.xlu0 %v4811, 96
  %v4955 = vpop.permute.xlu0 %4954
  %4956 = vrot.lane.b32.xlu0 %v4812, 96
  %v4957 = vpop.permute.xlu0 %4956
  %4958 = vrot.lane.b32.xlu0 %v4813, 96
  %v4959 = vpop.permute.xlu0 %4958
  %4960 = vrot.lane.b32.xlu0 %v4814, 96
  %v4961 = vpop.permute.xlu0 %4960
  %4962 = vrot.lane.b32.xlu0 %v4815, 96
  %v4963 = vpop.permute.xlu0 %4962
  %4964 = vrot.lane.b32.xlu0 %v4816, 96
  %v4965 = vpop.permute.xlu0 %4964
  %4966 = vrot.lane.b32.xlu0 %v4817, 96
  %v4967 = vpop.permute.xlu0 %4966
  %4968 = vrot.lane.b32.xlu0 %v4818, 96
  %v4969 = vpop.permute.xlu0 %4968
  %4970 = vrot.lane.b32.xlu0 %v4819, 96
  %v4971 = vpop.permute.xlu0 %4970
  %4972 = vrot.lane.b32.xlu0 %v4820, 96
  %v4973 = vpop.permute.xlu0 %4972
  %4974 = vrot.lane.b32.xlu0 %v4821, 96
  %v4975 = vpop.permute.xlu0 %4974
  %4976 = vrot.lane.b32.xlu0 %v4822, 96
  %v4977 = vpop.permute.xlu0 %4976
  %4978 = vrot.lane.b32.xlu0 %v4823, 96
  %v4979 = vpop.permute.xlu0 %4978
  %4980 = vrot.lane.b32.xlu0 %v4824, 96
  %v4981 = vpop.permute.xlu0 %4980
  %4982 = vrot.lane.b32.xlu0 %v4825, 96
  %v4983 = vpop.permute.xlu0 %4982
  %4984 = vrot.lane.b32.xlu0 %v4826, 96
  %v4985 = vpop.permute.xlu0 %4984
  %4986 = vrot.lane.b32.xlu0 %v4827, 96
  %v4987 = vpop.permute.xlu0 %4986
  %4988 = vrot.lane.b32.xlu0 %v4828, 96
  %v4989 = vpop.permute.xlu0 %4988
  %4990 = vrot.lane.b32.xlu0 %v4829, 96
  %v4991 = vpop.permute.xlu0 %4990
  %4992 = vrot.lane.b32.xlu0 %v4830, 96
  %v4993 = vpop.permute.xlu0 %4992
  %4994 = vrot.lane.b32.xlu0 %v4831, 96
  %v4995 = vpop.permute.xlu0 %4994
  %4996 = vrot.lane.b32.xlu0 %v4832, 96
  %v4997 = vpop.permute.xlu0 %4996
  %4998 = vrot.lane.b32.xlu0 %v4833, 96
  %v4999 = vpop.permute.xlu0 %4998
  %5000 = vrot.lane.b32.xlu0 %v4834, 96
  %v5001 = vpop.permute.xlu0 %5000
  %5002 = vrot.lane.b32.xlu0 %v4835, 96
  %v5003 = vpop.permute.xlu0 %5002
  %5004 = vrot.lane.b32.xlu0 %v4836, 96
  %v5005 = vpop.permute.xlu0 %5004
  %5006 = vrot.lane.b32.xlu0 %v4837, 96
  %v5007 = vpop.permute.xlu0 %5006
  %5008 = vrot.lane.b32.xlu0 %v4838, 96
  %v5009 = vpop.permute.xlu0 %5008
  %5010 = vrot.lane.b32.xlu0 %v4839, 96
  %v5011 = vpop.permute.xlu0 %5010
  %5012 = vrot.lane.b32.xlu0 %v4840, 96
  %v5013 = vpop.permute.xlu0 %5012
  %5014 = vrot.lane.b32.xlu0 %v4841, 96
  %v5015 = vpop.permute.xlu0 %5014
  %5016 = vrot.lane.b32.xlu0 %v4842, 96
  %v5017 = vpop.permute.xlu0 %5016
  %5018 = vrot.lane.b32.xlu0 %v4843, 96
  %v5019 = vpop.permute.xlu0 %5018
  %5020 = vrot.lane.b32.xlu0 %v4844, 96
  %v5021 = vpop.permute.xlu0 %5020
  %5022 = vrot.lane.b32.xlu0 %v4845, 96
  %v5023 = vpop.permute.xlu0 %5022
  %5024 = vrot.lane.b32.xlu0 %v4846, 96
  %v5025 = vpop.permute.xlu0 %5024
  %5026 = vrot.lane.b32.xlu0 %v4847, 96
  %v5027 = vpop.permute.xlu0 %5026
  %5028 = vrot.lane.b32.xlu0 %v4848, 96
  %v5029 = vpop.permute.xlu0 %5028
  %5030 = vrot.lane.b32.xlu0 %v4849, 96
  %v5031 = vpop.permute.xlu0 %5030
  %5032 = vrot.lane.b32.xlu0 %v4850, 96
  %v5033 = vpop.permute.xlu0 %5032
  %5034 = vrot.lane.b32.xlu0 %v4851, 96
  %v5035 = vpop.permute.xlu0 %5034
  %5036 = vrot.lane.b32.xlu0 %v4852, 96
  %v5037 = vpop.permute.xlu0 %5036
  %5038 = vrot.lane.b32.xlu0 %v4853, 96
  %v5039 = vpop.permute.xlu0 %5038
  %5040 = vrot.lane.b32.xlu0 %v4854, 96
  %v5041 = vpop.permute.xlu0 %5040
  %5042 = vrot.lane.b32.xlu0 %v4855, 96
  %v5043 = vpop.permute.xlu0 %5042
  %5044 = vrot.lane.b32.xlu0 %v4856, 96
  %v5045 = vpop.permute.xlu0 %5044
  %5046 = vrot.lane.b32.xlu0 %v4857, 96
  %v5047 = vpop.permute.xlu0 %5046
  %5048 = vrot.lane.b32.xlu0 %v4858, 96
  %v5049 = vpop.permute.xlu0 %5048
  %5050 = vrot.lane.b32.xlu0 %v4859, 96
  %v5051 = vpop.permute.xlu0 %5050
  %v5116 = vsel %vm185, %v4925, 0.0
  %5117 = vadd.xlane.f32.xlu0 %v5116
  %v5118 = vpop.xlane.xlu0 %5117
  %v5119 = vsel %vm185, %v4927, 0.0
  %5120 = vadd.xlane.f32.xlu0 %v5119
  %v5121 = vpop.xlane.xlu0 %5120
  %v5122 = vsel %vm185, %v4929, 0.0
  %5123 = vadd.xlane.f32.xlu0 %v5122
  %v5124 = vpop.xlane.xlu0 %5123
  %v5125 = vsel %vm185, %v4931, 0.0
  %5126 = vadd.xlane.f32.xlu0 %v5125
  %v5127 = vpop.xlane.xlu0 %5126
  %v5128 = vsel %vm185, %v4933, 0.0
  %5129 = vadd.xlane.f32.xlu0 %v5128
  %v5130 = vpop.xlane.xlu0 %5129
  %v5131 = vsel %vm185, %v4935, 0.0
  %5132 = vadd.xlane.f32.xlu0 %v5131
  %v5133 = vpop.xlane.xlu0 %5132
  %v5134 = vsel %vm185, %v4937, 0.0
  %5135 = vadd.xlane.f32.xlu0 %v5134
  %v5136 = vpop.xlane.xlu0 %5135
  %v5137 = vsel %vm185, %v4939, 0.0
  %5138 = vadd.xlane.f32.xlu0 %v5137
  %v5139 = vpop.xlane.xlu0 %5138
  %v5140 = vsel %vm185, %v4941, 0.0
  %5141 = vadd.xlane.f32.xlu0 %v5140
  %v5142 = vpop.xlane.xlu0 %5141
  %v5143 = vsel %vm185, %v4943, 0.0
  %5144 = vadd.xlane.f32.xlu0 %v5143
  %v5145 = vpop.xlane.xlu0 %5144
  %v5146 = vsel %vm185, %v4945, 0.0
  %5147 = vadd.xlane.f32.xlu0 %v5146
  %v5148 = vpop.xlane.xlu0 %5147
  %v5149 = vsel %vm185, %v4947, 0.0
  %5150 = vadd.xlane.f32.xlu0 %v5149
  %v5151 = vpop.xlane.xlu0 %5150
  %v5152 = vsel %vm185, %v4949, 0.0
  %5153 = vadd.xlane.f32.xlu0 %v5152
  %v5154 = vpop.xlane.xlu0 %5153
  %v5155 = vsel %vm185, %v4951, 0.0
  %5156 = vadd.xlane.f32.xlu0 %v5155
  %v5157 = vpop.xlane.xlu0 %5156
  %v5158 = vsel %vm185, %v4953, 0.0
  %5159 = vadd.xlane.f32.xlu0 %v5158
  %v5160 = vpop.xlane.xlu0 %5159
  %v5161 = vsel %vm185, %v4955, 0.0
  %5162 = vadd.xlane.f32.xlu0 %v5161
  %v5163 = vpop.xlane.xlu0 %5162
  %v5164 = vsel %vm185, %v4957, 0.0
  %5165 = vadd.xlane.f32.xlu0 %v5164
  %v5166 = vpop.xlane.xlu0 %5165
  %v5167 = vsel %vm185, %v4959, 0.0
  %5168 = vadd.xlane.f32.xlu0 %v5167
  %v5169 = vpop.xlane.xlu0 %5168
  %v5170 = vsel %vm185, %v4961, 0.0
  %5171 = vadd.xlane.f32.xlu0 %v5170
  %v5172 = vpop.xlane.xlu0 %5171
  %v5173 = vsel %vm185, %v4963, 0.0
  %5174 = vadd.xlane.f32.xlu0 %v5173
  %v5175 = vpop.xlane.xlu0 %5174
  %v5176 = vsel %vm185, %v4965, 0.0
  %5177 = vadd.xlane.f32.xlu0 %v5176
  %v5178 = vpop.xlane.xlu0 %5177
  %v5179 = vsel %vm185, %v4967, 0.0
  %5180 = vadd.xlane.f32.xlu0 %v5179
  %v5181 = vpop.xlane.xlu0 %5180
  %v5182 = vsel %vm185, %v4969, 0.0
  %5183 = vadd.xlane.f32.xlu0 %v5182
  %v5184 = vpop.xlane.xlu0 %5183
  %v5185 = vsel %vm185, %v4971, 0.0
  %5186 = vadd.xlane.f32.xlu0 %v5185
  %v5187 = vpop.xlane.xlu0 %5186
  %v5188 = vsel %vm185, %v4973, 0.0
  %5189 = vadd.xlane.f32.xlu0 %v5188
  %v5190 = vpop.xlane.xlu0 %5189
  %v5191 = vsel %vm185, %v4975, 0.0
  %5192 = vadd.xlane.f32.xlu0 %v5191
  %v5193 = vpop.xlane.xlu0 %5192
  %v5194 = vsel %vm185, %v4977, 0.0
  %5195 = vadd.xlane.f32.xlu0 %v5194
  %v5196 = vpop.xlane.xlu0 %5195
  %v5197 = vsel %vm185, %v4979, 0.0
  %5198 = vadd.xlane.f32.xlu0 %v5197
  %v5199 = vpop.xlane.xlu0 %5198
  %v5200 = vsel %vm185, %v4981, 0.0
  %5201 = vadd.xlane.f32.xlu0 %v5200
  %v5202 = vpop.xlane.xlu0 %5201
  %v5203 = vsel %vm185, %v4983, 0.0
  %5204 = vadd.xlane.f32.xlu0 %v5203
  %v5205 = vpop.xlane.xlu0 %5204
  %v5206 = vsel %vm185, %v4985, 0.0
  %5207 = vadd.xlane.f32.xlu0 %v5206
  %v5208 = vpop.xlane.xlu0 %5207
  %v5209 = vsel %vm185, %v4987, 0.0
  %5210 = vadd.xlane.f32.xlu0 %v5209
  %v5211 = vpop.xlane.xlu0 %5210
  %v5212 = vsel %vm185, %v4989, 0.0
  %5213 = vadd.xlane.f32.xlu0 %v5212
  %v5214 = vpop.xlane.xlu0 %5213
  %v5215 = vsel %vm185, %v4991, 0.0
  %5216 = vadd.xlane.f32.xlu0 %v5215
  %v5217 = vpop.xlane.xlu0 %5216
  %v5218 = vsel %vm185, %v4993, 0.0
  %5219 = vadd.xlane.f32.xlu0 %v5218
  %v5220 = vpop.xlane.xlu0 %5219
  %v5221 = vsel %vm185, %v4995, 0.0
  %5222 = vadd.xlane.f32.xlu0 %v5221
  %v5223 = vpop.xlane.xlu0 %5222
  %v5224 = vsel %vm185, %v4997, 0.0
  %5225 = vadd.xlane.f32.xlu0 %v5224
  %v5226 = vpop.xlane.xlu0 %5225
  %v5227 = vsel %vm185, %v4999, 0.0
  %5228 = vadd.xlane.f32.xlu0 %v5227
  %v5229 = vpop.xlane.xlu0 %5228
  %v5230 = vsel %vm185, %v5001, 0.0
  %5231 = vadd.xlane.f32.xlu0 %v5230
  %v5232 = vpop.xlane.xlu0 %5231
  %v5233 = vsel %vm185, %v5003, 0.0
  %5234 = vadd.xlane.f32.xlu0 %v5233
  %v5235 = vpop.xlane.xlu0 %5234
  %v5236 = vsel %vm185, %v5005, 0.0
  %5237 = vadd.xlane.f32.xlu0 %v5236
  %v5238 = vpop.xlane.xlu0 %5237
  %v5239 = vsel %vm185, %v5007, 0.0
  %5240 = vadd.xlane.f32.xlu0 %v5239
  %v5241 = vpop.xlane.xlu0 %5240
  %v5242 = vsel %vm185, %v5009, 0.0
  %5243 = vadd.xlane.f32.xlu0 %v5242
  %v5244 = vpop.xlane.xlu0 %5243
  %v5245 = vsel %vm185, %v5011, 0.0
  %5246 = vadd.xlane.f32.xlu0 %v5245
  %v5247 = vpop.xlane.xlu0 %5246
  %v5248 = vsel %vm185, %v5013, 0.0
  %5249 = vadd.xlane.f32.xlu0 %v5248
  %v5250 = vpop.xlane.xlu0 %5249
  %v5251 = vsel %vm185, %v5015, 0.0
  %5252 = vadd.xlane.f32.xlu0 %v5251
  %v5253 = vpop.xlane.xlu0 %5252
  %v5254 = vsel %vm185, %v5017, 0.0
  %5255 = vadd.xlane.f32.xlu0 %v5254
  %v5256 = vpop.xlane.xlu0 %5255
  %v5257 = vsel %vm185, %v5019, 0.0
  %5258 = vadd.xlane.f32.xlu0 %v5257
  %v5259 = vpop.xlane.xlu0 %5258
  %v5260 = vsel %vm185, %v5021, 0.0
  %5261 = vadd.xlane.f32.xlu0 %v5260
  %v5262 = vpop.xlane.xlu0 %5261
  %v5263 = vsel %vm185, %v5023, 0.0
  %5264 = vadd.xlane.f32.xlu0 %v5263
  %v5265 = vpop.xlane.xlu0 %5264
  %v5266 = vsel %vm185, %v5025, 0.0
  %5267 = vadd.xlane.f32.xlu0 %v5266
  %v5268 = vpop.xlane.xlu0 %5267
  %v5269 = vsel %vm185, %v5027, 0.0
  %5270 = vadd.xlane.f32.xlu0 %v5269
  %v5271 = vpop.xlane.xlu0 %5270
  %v5272 = vsel %vm185, %v5029, 0.0
  %5273 = vadd.xlane.f32.xlu0 %v5272
  %v5274 = vpop.xlane.xlu0 %5273
  %v5275 = vsel %vm185, %v5031, 0.0
  %5276 = vadd.xlane.f32.xlu0 %v5275
  %v5277 = vpop.xlane.xlu0 %5276
  %v5278 = vsel %vm185, %v5033, 0.0
  %5279 = vadd.xlane.f32.xlu0 %v5278
  %v5280 = vpop.xlane.xlu0 %5279
  %v5281 = vsel %vm185, %v5035, 0.0
  %5282 = vadd.xlane.f32.xlu0 %v5281
  %v5283 = vpop.xlane.xlu0 %5282
  %v5284 = vsel %vm185, %v5037, 0.0
  %5285 = vadd.xlane.f32.xlu0 %v5284
  %v5286 = vpop.xlane.xlu0 %5285
  %v5287 = vsel %vm185, %v5039, 0.0
  %5288 = vadd.xlane.f32.xlu0 %v5287
  %v5289 = vpop.xlane.xlu0 %5288
  %v5290 = vsel %vm185, %v5041, 0.0
  %5291 = vadd.xlane.f32.xlu0 %v5290
  %v5292 = vpop.xlane.xlu0 %5291
  %v5293 = vsel %vm185, %v5043, 0.0
  %5294 = vadd.xlane.f32.xlu0 %v5293
  %v5295 = vpop.xlane.xlu0 %5294
  %v5296 = vsel %vm185, %v5045, 0.0
  %5297 = vadd.xlane.f32.xlu0 %v5296
  %v5298 = vpop.xlane.xlu0 %5297
  %v5299 = vsel %vm185, %v5047, 0.0
  %5300 = vadd.xlane.f32.xlu0 %v5299
  %v5301 = vpop.xlane.xlu0 %5300
  %v5302 = vsel %vm185, %v5049, 0.0
  %5303 = vadd.xlane.f32.xlu0 %v5302
  %v5304 = vpop.xlane.xlu0 %5303
  %v5305 = vsel %vm185, %v5051, 0.0
  %5306 = vadd.xlane.f32.xlu0 %v5305
  %v5307 = vpop.xlane.xlu0 %5306
  %v5308 = vadd.f32 %v4597, %v5118
  %v5309 = vadd.f32 %v4600, %v5121
  %v5310 = vadd.f32 %v4603, %v5124
  %v5311 = vadd.f32 %v4606, %v5127
  %v5312 = vadd.f32 %v4609, %v5130
  %v5313 = vadd.f32 %v4612, %v5133
  %v5314 = vadd.f32 %v4615, %v5136
  %v5315 = vadd.f32 %v4618, %v5139
  %v5316 = vadd.f32 %v4621, %v5142
  %v5317 = vadd.f32 %v4624, %v5145
  %v5318 = vadd.f32 %v4627, %v5148
  %v5319 = vadd.f32 %v4630, %v5151
  %v5320 = vadd.f32 %v4633, %v5154
  %v5321 = vadd.f32 %v4636, %v5157
  %v5322 = vadd.f32 %v4639, %v5160
  %v5323 = vadd.f32 %v4642, %v5163
  %v5324 = vadd.f32 %v4645, %v5166
  %v5325 = vadd.f32 %v4648, %v5169
  %v5326 = vadd.f32 %v4651, %v5172
  %v5327 = vadd.f32 %v4654, %v5175
  %v5328 = vadd.f32 %v4657, %v5178
  %v5329 = vadd.f32 %v4660, %v5181
  %v5330 = vadd.f32 %v4663, %v5184
  %v5331 = vadd.f32 %v4666, %v5187
  %v5332 = vadd.f32 %v4669, %v5190
  %v5333 = vadd.f32 %v4672, %v5193
  %v5334 = vadd.f32 %v4675, %v5196
  %v5335 = vadd.f32 %v4678, %v5199
  %v5336 = vadd.f32 %v4681, %v5202
  %v5337 = vadd.f32 %v4684, %v5205
  %v5338 = vadd.f32 %v4687, %v5208
  %v5339 = vadd.f32 %v4690, %v5211
  %v5340 = vadd.f32 %v4693, %v5214
  %v5341 = vadd.f32 %v4696, %v5217
  %v5342 = vadd.f32 %v4699, %v5220
  %v5343 = vadd.f32 %v4702, %v5223
  %v5344 = vadd.f32 %v4705, %v5226
  %v5345 = vadd.f32 %v4708, %v5229
  %v5346 = vadd.f32 %v4711, %v5232
  %v5347 = vadd.f32 %v4714, %v5235
  %v5348 = vadd.f32 %v4717, %v5238
  %v5349 = vadd.f32 %v4720, %v5241
  %v5350 = vadd.f32 %v4723, %v5244
  %v5351 = vadd.f32 %v4726, %v5247
  %v5352 = vadd.f32 %v4729, %v5250
  %v5353 = vadd.f32 %v4732, %v5253
  %v5354 = vadd.f32 %v4735, %v5256
  %v5355 = vadd.f32 %v4738, %v5259
  %v5356 = vadd.f32 %v4741, %v5262
  %v5357 = vadd.f32 %v4744, %v5265
  %v5358 = vadd.f32 %v4747, %v5268
  %v5359 = vadd.f32 %v4750, %v5271
  %v5360 = vadd.f32 %v4753, %v5274
  %v5361 = vadd.f32 %v4756, %v5277
  %v5362 = vadd.f32 %v4759, %v5280
  %v5363 = vadd.f32 %v4762, %v5283
  %v5364 = vadd.f32 %v4765, %v5286
  %v5365 = vadd.f32 %v4768, %v5289
  %v5366 = vadd.f32 %v4771, %v5292
  %v5367 = vadd.f32 %v4774, %v5295
  %v5368 = vadd.f32 %v4777, %v5298
  %v5369 = vadd.f32 %v4780, %v5301
  %v5370 = vadd.f32 %v4783, %v5304
  %v5371 = vadd.f32 %v4786, %v5307
  %v5372 = vld [vmem:[#allocation2] sm:$0x1]
  %v5374 = vlaneseq
  %v5375 = vshrl.u32 %v5374, 7
  %v5376 = vsub.s32 0, %v5375
  %v5377 = vrot.slane %v5372, %v5376
  %v5379 = vadd.f32 %v5308, %v5377
  %v5380 = vadd.f32 %v5309, %v5377
  %v5381 = vadd.f32 %v5310, %v5377
  %v5382 = vadd.f32 %v5311, %v5377
  %v5383 = vadd.f32 %v5312, %v5377
  %v5384 = vadd.f32 %v5313, %v5377
  %v5385 = vadd.f32 %v5314, %v5377
  %v5386 = vadd.f32 %v5315, %v5377
  %v5387 = vadd.f32 %v5316, %v5377
  %v5388 = vadd.f32 %v5317, %v5377
  %v5389 = vadd.f32 %v5318, %v5377
  %v5390 = vadd.f32 %v5319, %v5377
  %v5391 = vadd.f32 %v5320, %v5377
  %v5392 = vadd.f32 %v5321, %v5377
  %v5393 = vadd.f32 %v5322, %v5377
  %v5394 = vadd.f32 %v5323, %v5377
  %v5395 = vadd.f32 %v5324, %v5377
  %v5396 = vadd.f32 %v5325, %v5377
  %v5397 = vadd.f32 %v5326, %v5377
  %v5398 = vadd.f32 %v5327, %v5377
  %v5399 = vadd.f32 %v5328, %v5377
  %v5400 = vadd.f32 %v5329, %v5377
  %v5401 = vadd.f32 %v5330, %v5377
  %v5402 = vadd.f32 %v5331, %v5377
  %v5403 = vadd.f32 %v5332, %v5377
  %v5404 = vadd.f32 %v5333, %v5377
  %v5405 = vadd.f32 %v5334, %v5377
  %v5406 = vadd.f32 %v5335, %v5377
  %v5407 = vadd.f32 %v5336, %v5377
  %v5408 = vadd.f32 %v5337, %v5377
  %v5409 = vadd.f32 %v5338, %v5377
  %v5410 = vadd.f32 %v5339, %v5377
  %v5411 = vadd.f32 %v5340, %v5377
  %v5412 = vadd.f32 %v5341, %v5377
  %v5413 = vadd.f32 %v5342, %v5377
  %v5414 = vadd.f32 %v5343, %v5377
  %v5415 = vadd.f32 %v5344, %v5377
  %v5416 = vadd.f32 %v5345, %v5377
  %v5417 = vadd.f32 %v5346, %v5377
  %v5418 = vadd.f32 %v5347, %v5377
  %v5419 = vadd.f32 %v5348, %v5377
  %v5420 = vadd.f32 %v5349, %v5377
  %v5421 = vadd.f32 %v5350, %v5377
  %v5422 = vadd.f32 %v5351, %v5377
  %v5423 = vadd.f32 %v5352, %v5377
  %v5424 = vadd.f32 %v5353, %v5377
  %v5425 = vadd.f32 %v5354, %v5377
  %v5426 = vadd.f32 %v5355, %v5377
  %v5427 = vadd.f32 %v5356, %v5377
  %v5428 = vadd.f32 %v5357, %v5377
  %v5429 = vadd.f32 %v5358, %v5377
  %v5430 = vadd.f32 %v5359, %v5377
  %v5431 = vadd.f32 %v5360, %v5377
  %v5432 = vadd.f32 %v5361, %v5377
  %v5433 = vadd.f32 %v5362, %v5377
  %v5434 = vadd.f32 %v5363, %v5377
  %v5435 = vadd.f32 %v5364, %v5377
  %v5436 = vadd.f32 %v5365, %v5377
  %v5437 = vadd.f32 %v5366, %v5377
  %v5438 = vadd.f32 %v5367, %v5377
  %v5439 = vadd.f32 %v5368, %v5377
  %v5440 = vadd.f32 %v5369, %v5377
  %v5441 = vadd.f32 %v5370, %v5377
  %v5442 = vadd.f32 %v5371, %v5377
  %v5443 = vxor.u32 %v5379, 2147483648
  %v5444 = vxor.u32 %v5380, 2147483648
  %v5445 = vxor.u32 %v5381, 2147483648
  %v5446 = vxor.u32 %v5382, 2147483648
  %v5447 = vxor.u32 %v5383, 2147483648
  %v5448 = vxor.u32 %v5384, 2147483648
  %v5449 = vxor.u32 %v5385, 2147483648
  %v5450 = vxor.u32 %v5386, 2147483648
  %v5451 = vxor.u32 %v5387, 2147483648
  %v5452 = vxor.u32 %v5388, 2147483648
  %v5453 = vxor.u32 %v5389, 2147483648
  %v5454 = vxor.u32 %v5390, 2147483648
  %v5455 = vxor.u32 %v5391, 2147483648
  %v5456 = vxor.u32 %v5392, 2147483648
  %v5457 = vxor.u32 %v5393, 2147483648
  %v5458 = vxor.u32 %v5394, 2147483648
  %v5459 = vxor.u32 %v5395, 2147483648
  %v5460 = vxor.u32 %v5396, 2147483648
  %v5461 = vxor.u32 %v5397, 2147483648
  %v5462 = vxor.u32 %v5398, 2147483648
  %v5463 = vxor.u32 %v5399, 2147483648
  %v5464 = vxor.u32 %v5400, 2147483648
  %v5465 = vxor.u32 %v5401, 2147483648
  %v5466 = vxor.u32 %v5402, 2147483648
  %v5467 = vxor.u32 %v5403, 2147483648
  %v5468 = vxor.u32 %v5404, 2147483648
  %v5469 = vxor.u32 %v5405, 2147483648
  %v5470 = vxor.u32 %v5406, 2147483648
  %v5471 = vxor.u32 %v5407, 2147483648
  %v5472 = vxor.u32 %v5408, 2147483648
  %v5473 = vxor.u32 %v5409, 2147483648
  %v5474 = vxor.u32 %v5410, 2147483648
  %v5475 = vxor.u32 %v5411, 2147483648
  %v5476 = vxor.u32 %v5412, 2147483648
  %v5477 = vxor.u32 %v5413, 2147483648
  %v5478 = vxor.u32 %v5414, 2147483648
  %v5479 = vxor.u32 %v5415, 2147483648
  %v5480 = vxor.u32 %v5416, 2147483648
  %v5481 = vxor.u32 %v5417, 2147483648
  %v5482 = vxor.u32 %v5418, 2147483648
  %v5483 = vxor.u32 %v5419, 2147483648
  %v5484 = vxor.u32 %v5420, 2147483648
  %v5485 = vxor.u32 %v5421, 2147483648
  %v5486 = vxor.u32 %v5422, 2147483648
  %v5487 = vxor.u32 %v5423, 2147483648
  %v5488 = vxor.u32 %v5424, 2147483648
  %v5489 = vxor.u32 %v5425, 2147483648
  %v5490 = vxor.u32 %v5426, 2147483648
  %v5491 = vxor.u32 %v5427, 2147483648
  %v5492 = vxor.u32 %v5428, 2147483648
  %v5493 = vxor.u32 %v5429, 2147483648
  %v5494 = vxor.u32 %v5430, 2147483648
  %v5495 = vxor.u32 %v5431, 2147483648
  %v5496 = vxor.u32 %v5432, 2147483648
  %v5497 = vxor.u32 %v5433, 2147483648
  %v5498 = vxor.u32 %v5434, 2147483648
  %v5499 = vxor.u32 %v5435, 2147483648
  %v5500 = vxor.u32 %v5436, 2147483648
  %v5501 = vxor.u32 %v5437, 2147483648
  %v5502 = vxor.u32 %v5438, 2147483648
  %v5503 = vxor.u32 %v5439, 2147483648
  %v5504 = vxor.u32 %v5440, 2147483648
  %v5505 = vxor.u32 %v5441, 2147483648
  %v5506 = vxor.u32 %v5442, 2147483648
  %v5507 = vmul.f32 %v5443, 1.442695
  %v5508 = vpow.pop %v5507
  %v5509 = vmul.f32 %v5444, 1.442695
  %v5510 = vpow.pop %v5509
  %v5511 = vmul.f32 %v5445, 1.442695
  %v5512 = vpow.pop %v5511
  %v5513 = vmul.f32 %v5446, 1.442695
  %v5514 = vpow.pop %v5513
  %v5515 = vmul.f32 %v5447, 1.442695
  %v5516 = vpow.pop %v5515
  %v5517 = vmul.f32 %v5448, 1.442695
  %v5518 = vpow.pop %v5517
  %v5519 = vmul.f32 %v5449, 1.442695
  %v5520 = vpow.pop %v5519
  %v5521 = vmul.f32 %v5450, 1.442695
  %v5522 = vpow.pop %v5521
  %v5523 = vmul.f32 %v5451, 1.442695
  %v5524 = vpow.pop %v5523
  %v5525 = vmul.f32 %v5452, 1.442695
  %v5526 = vpow.pop %v5525
  %v5527 = vmul.f32 %v5453, 1.442695
  %v5528 = vpow.pop %v5527
  %v5529 = vmul.f32 %v5454, 1.442695
  %v5530 = vpow.pop %v5529
  %v5531 = vmul.f32 %v5455, 1.442695
  %v5532 = vpow.pop %v5531
  %v5533 = vmul.f32 %v5456, 1.442695
  %v5534 = vpow.pop %v5533
  %v5535 = vmul.f32 %v5457, 1.442695
  %v5536 = vpow.pop %v5535
  %v5537 = vmul.f32 %v5458, 1.442695
  %v5538 = vpow.pop %v5537
  %v5539 = vmul.f32 %v5459, 1.442695
  %v5540 = vpow.pop %v5539
  %v5541 = vmul.f32 %v5460, 1.442695
  %v5542 = vpow.pop %v5541
  %v5543 = vmul.f32 %v5461, 1.442695
  %v5544 = vpow.pop %v5543
  %v5545 = vmul.f32 %v5462, 1.442695
  %v5546 = vpow.pop %v5545
  %v5547 = vmul.f32 %v5463, 1.442695
  %v5548 = vpow.pop %v5547
  %v5549 = vmul.f32 %v5464, 1.442695
  %v5550 = vpow.pop %v5549
  %v5551 = vmul.f32 %v5465, 1.442695
  %v5552 = vpow.pop %v5551
  %v5553 = vmul.f32 %v5466, 1.442695
  %v5554 = vpow.pop %v5553
  %v5555 = vmul.f32 %v5467, 1.442695
  %v5556 = vpow.pop %v5555
  %v5557 = vmul.f32 %v5468, 1.442695
  %v5558 = vpow.pop %v5557
  %v5559 = vmul.f32 %v5469, 1.442695
  %v5560 = vpow.pop %v5559
  %v5561 = vmul.f32 %v5470, 1.442695
  %v5562 = vpow.pop %v5561
  %v5563 = vmul.f32 %v5471, 1.442695
  %v5564 = vpow.pop %v5563
  %v5565 = vmul.f32 %v5472, 1.442695
  %v5566 = vpow.pop %v5565
  %v5567 = vmul.f32 %v5473, 1.442695
  %v5568 = vpow.pop %v5567
  %v5569 = vmul.f32 %v5474, 1.442695
  %v5570 = vpow.pop %v5569
  %v5571 = vmul.f32 %v5475, 1.442695
  %v5572 = vpow.pop %v5571
  %v5573 = vmul.f32 %v5476, 1.442695
  %v5574 = vpow.pop %v5573
  %v5575 = vmul.f32 %v5477, 1.442695
  %v5576 = vpow.pop %v5575
  %v5577 = vmul.f32 %v5478, 1.442695
  %v5578 = vpow.pop %v5577
  %v5579 = vmul.f32 %v5479, 1.442695
  %v5580 = vpow.pop %v5579
  %v5581 = vmul.f32 %v5480, 1.442695
  %v5582 = vpow.pop %v5581
  %v5583 = vmul.f32 %v5481, 1.442695
  %v5584 = vpow.pop %v5583
  %v5585 = vmul.f32 %v5482, 1.442695
  %v5586 = vpow.pop %v5585
  %v5587 = vmul.f32 %v5483, 1.442695
  %v5588 = vpow.pop %v5587
  %v5589 = vmul.f32 %v5484, 1.442695
  %v5590 = vpow.pop %v5589
  %v5591 = vmul.f32 %v5485, 1.442695
  %v5592 = vpow.pop %v5591
  %v5593 = vmul.f32 %v5486, 1.442695
  %v5594 = vpow.pop %v5593
  %v5595 = vmul.f32 %v5487, 1.442695
  %v5596 = vpow.pop %v5595
  %v5597 = vmul.f32 %v5488, 1.442695
  %v5598 = vpow.pop %v5597
  %v5599 = vmul.f32 %v5489, 1.442695
  %v5600 = vpow.pop %v5599
  %v5601 = vmul.f32 %v5490, 1.442695
  %v5602 = vpow.pop %v5601
  %v5603 = vmul.f32 %v5491, 1.442695
  %v5604 = vpow.pop %v5603
  %v5605 = vmul.f32 %v5492, 1.442695
  %v5606 = vpow.pop %v5605
  %v5607 = vmul.f32 %v5493, 1.442695
  %v5608 = vpow.pop %v5607
  %v5609 = vmul.f32 %v5494, 1.442695
  %v5610 = vpow.pop %v5609
  %v5611 = vmul.f32 %v5495, 1.442695
  %v5612 = vpow.pop %v5611
  %v5613 = vmul.f32 %v5496, 1.442695
  %v5614 = vpow.pop %v5613
  %v5615 = vmul.f32 %v5497, 1.442695
  %v5616 = vpow.pop %v5615
  %v5617 = vmul.f32 %v5498, 1.442695
  %v5618 = vpow.pop %v5617
  %v5619 = vmul.f32 %v5499, 1.442695
  %v5620 = vpow.pop %v5619
  %v5621 = vmul.f32 %v5500, 1.442695
  %v5622 = vpow.pop %v5621
  %v5623 = vmul.f32 %v5501, 1.442695
  %v5624 = vpow.pop %v5623
  %v5625 = vmul.f32 %v5502, 1.442695
  %v5626 = vpow.pop %v5625
  %v5627 = vmul.f32 %v5503, 1.442695
  %v5628 = vpow.pop %v5627
  %v5629 = vmul.f32 %v5504, 1.442695
  %v5630 = vpow.pop %v5629
  %v5631 = vmul.f32 %v5505, 1.442695
  %v5632 = vpow.pop %v5631
  %v5633 = vmul.f32 %v5506, 1.442695
  %v5634 = vpow.pop %v5633
  %v5635 = vadd.f32 %v5508, 1.0
  %v5636 = vadd.f32 %v5510, 1.0
  %v5637 = vadd.f32 %v5512, 1.0
  %v5638 = vadd.f32 %v5514, 1.0
  %v5639 = vadd.f32 %v5516, 1.0
  %v5640 = vadd.f32 %v5518, 1.0
  %v5641 = vadd.f32 %v5520, 1.0
  %v5642 = vadd.f32 %v5522, 1.0
  %v5643 = vadd.f32 %v5524, 1.0
  %v5644 = vadd.f32 %v5526, 1.0
  %v5645 = vadd.f32 %v5528, 1.0
  %v5646 = vadd.f32 %v5530, 1.0
  %v5647 = vadd.f32 %v5532, 1.0
  %v5648 = vadd.f32 %v5534, 1.0
  %v5649 = vadd.f32 %v5536, 1.0
  %v5650 = vadd.f32 %v5538, 1.0
  %v5651 = vadd.f32 %v5540, 1.0
  %v5652 = vadd.f32 %v5542, 1.0
  %v5653 = vadd.f32 %v5544, 1.0
  %v5654 = vadd.f32 %v5546, 1.0
  %v5655 = vadd.f32 %v5548, 1.0
  %v5656 = vadd.f32 %v5550, 1.0
  %v5657 = vadd.f32 %v5552, 1.0
  %v5658 = vadd.f32 %v5554, 1.0
  %v5659 = vadd.f32 %v5556, 1.0
  %v5660 = vadd.f32 %v5558, 1.0
  %v5661 = vadd.f32 %v5560, 1.0
  %v5662 = vadd.f32 %v5562, 1.0
  %v5663 = vadd.f32 %v5564, 1.0
  %v5664 = vadd.f32 %v5566, 1.0
  %v5665 = vadd.f32 %v5568, 1.0
  %v5666 = vadd.f32 %v5570, 1.0
  %v5667 = vadd.f32 %v5572, 1.0
  %v5668 = vadd.f32 %v5574, 1.0
  %v5669 = vadd.f32 %v5576, 1.0
  %v5670 = vadd.f32 %v5578, 1.0
  %v5671 = vadd.f32 %v5580, 1.0
  %v5672 = vadd.f32 %v5582, 1.0
  %v5673 = vadd.f32 %v5584, 1.0
  %v5674 = vadd.f32 %v5586, 1.0
  %v5675 = vadd.f32 %v5588, 1.0
  %v5676 = vadd.f32 %v5590, 1.0
  %v5677 = vadd.f32 %v5592, 1.0
  %v5678 = vadd.f32 %v5594, 1.0
  %v5679 = vadd.f32 %v5596, 1.0
  %v5680 = vadd.f32 %v5598, 1.0
  %v5681 = vadd.f32 %v5600, 1.0
  %v5682 = vadd.f32 %v5602, 1.0
  %v5683 = vadd.f32 %v5604, 1.0
  %v5684 = vadd.f32 %v5606, 1.0
  %v5685 = vadd.f32 %v5608, 1.0
  %v5686 = vadd.f32 %v5610, 1.0
  %v5687 = vadd.f32 %v5612, 1.0
  %v5688 = vadd.f32 %v5614, 1.0
  %v5689 = vadd.f32 %v5616, 1.0
  %v5690 = vadd.f32 %v5618, 1.0
  %v5691 = vadd.f32 %v5620, 1.0
  %v5692 = vadd.f32 %v5622, 1.0
  %v5693 = vadd.f32 %v5624, 1.0
  %v5694 = vadd.f32 %v5626, 1.0
  %v5695 = vadd.f32 %v5628, 1.0
  %v5696 = vadd.f32 %v5630, 1.0
  %v5697 = vadd.f32 %v5632, 1.0
  %v5698 = vadd.f32 %v5634, 1.0
  %v5699 = vrcp.pop %v5635
  %v5700 = vmul.f32 1.0, %v5699
  %v5701 = vrcp.pop %v5636
  %v5702 = vmul.f32 1.0, %v5701
  %v5703 = vrcp.pop %v5637
  %v5704 = vmul.f32 1.0, %v5703
  %v5705 = vrcp.pop %v5638
  %v5706 = vmul.f32 1.0, %v5705
  %v5707 = vrcp.pop %v5639
  %v5708 = vmul.f32 1.0, %v5707
  %v5709 = vrcp.pop %v5640
  %v5710 = vmul.f32 1.0, %v5709
  %v5711 = vrcp.pop %v5641
  %v5712 = vmul.f32 1.0, %v5711
  %v5713 = vrcp.pop %v5642
  %v5714 = vmul.f32 1.0, %v5713
  %v5715 = vrcp.pop %v5643
  %v5716 = vmul.f32 1.0, %v5715
  %v5717 = vrcp.pop %v5644
  %v5718 = vmul.f32 1.0, %v5717
  %v5719 = vrcp.pop %v5645
  %v5720 = vmul.f32 1.0, %v5719
  %v5721 = vrcp.pop %v5646
  %v5722 = vmul.f32 1.0, %v5721
  %v5723 = vrcp.pop %v5647
  %v5724 = vmul.f32 1.0, %v5723
  %v5725 = vrcp.pop %v5648
  %v5726 = vmul.f32 1.0, %v5725
  %v5727 = vrcp.pop %v5649
  %v5728 = vmul.f32 1.0, %v5727
  %v5729 = vrcp.pop %v5650
  %v5730 = vmul.f32 1.0, %v5729
  %v5731 = vrcp.pop %v5651
  %v5732 = vmul.f32 1.0, %v5731
  %v5733 = vrcp.pop %v5652
  %v5734 = vmul.f32 1.0, %v5733
  %v5735 = vrcp.pop %v5653
  %v5736 = vmul.f32 1.0, %v5735
  %v5737 = vrcp.pop %v5654
  %v5738 = vmul.f32 1.0, %v5737
  %v5739 = vrcp.pop %v5655
  %v5740 = vmul.f32 1.0, %v5739
  %v5741 = vrcp.pop %v5656
  %v5742 = vmul.f32 1.0, %v5741
  %v5743 = vrcp.pop %v5657
  %v5744 = vmul.f32 1.0, %v5743
  %v5745 = vrcp.pop %v5658
  %v5746 = vmul.f32 1.0, %v5745
  %v5747 = vrcp.pop %v5659
  %v5748 = vmul.f32 1.0, %v5747
  %v5749 = vrcp.pop %v5660
  %v5750 = vmul.f32 1.0, %v5749
  %v5751 = vrcp.pop %v5661
  %v5752 = vmul.f32 1.0, %v5751
  %v5753 = vrcp.pop %v5662
  %v5754 = vmul.f32 1.0, %v5753
  %v5755 = vrcp.pop %v5663
  %v5756 = vmul.f32 1.0, %v5755
  %v5757 = vrcp.pop %v5664
  %v5758 = vmul.f32 1.0, %v5757
  %v5759 = vrcp.pop %v5665
  %v5760 = vmul.f32 1.0, %v5759
  %v5761 = vrcp.pop %v5666
  %v5762 = vmul.f32 1.0, %v5761
  %v5763 = vrcp.pop %v5667
  %v5764 = vmul.f32 1.0, %v5763
  %v5765 = vrcp.pop %v5668
  %v5766 = vmul.f32 1.0, %v5765
  %v5767 = vrcp.pop %v5669
  %v5768 = vmul.f32 1.0, %v5767
  %v5769 = vrcp.pop %v5670
  %v5770 = vmul.f32 1.0, %v5769
  %v5771 = vrcp.pop %v5671
  %v5772 = vmul.f32 1.0, %v5771
  %v5773 = vrcp.pop %v5672
  %v5774 = vmul.f32 1.0, %v5773
  %v5775 = vrcp.pop %v5673
  %v5776 = vmul.f32 1.0, %v5775
  %v5777 = vrcp.pop %v5674
  %v5778 = vmul.f32 1.0, %v5777
  %v5779 = vrcp.pop %v5675
  %v5780 = vmul.f32 1.0, %v5779
  %v5781 = vrcp.pop %v5676
  %v5782 = vmul.f32 1.0, %v5781
  %v5783 = vrcp.pop %v5677
  %v5784 = vmul.f32 1.0, %v5783
  %v5785 = vrcp.pop %v5678
  %v5786 = vmul.f32 1.0, %v5785
  %v5787 = vrcp.pop %v5679
  %v5788 = vmul.f32 1.0, %v5787
  %v5789 = vrcp.pop %v5680
  %v5790 = vmul.f32 1.0, %v5789
  %v5791 = vrcp.pop %v5681
  %v5792 = vmul.f32 1.0, %v5791
  %v5793 = vrcp.pop %v5682
  %v5794 = vmul.f32 1.0, %v5793
  %v5795 = vrcp.pop %v5683
  %v5796 = vmul.f32 1.0, %v5795
  %v5797 = vrcp.pop %v5684
  %v5798 = vmul.f32 1.0, %v5797
  %v5799 = vrcp.pop %v5685
  %v5800 = vmul.f32 1.0, %v5799
  %v5801 = vrcp.pop %v5686
  %v5802 = vmul.f32 1.0, %v5801
  %v5803 = vrcp.pop %v5687
  %v5804 = vmul.f32 1.0, %v5803
  %v5805 = vrcp.pop %v5688
  %v5806 = vmul.f32 1.0, %v5805
  %v5807 = vrcp.pop %v5689
  %v5808 = vmul.f32 1.0, %v5807
  %v5809 = vrcp.pop %v5690
  %v5810 = vmul.f32 1.0, %v5809
  %v5811 = vrcp.pop %v5691
  %v5812 = vmul.f32 1.0, %v5811
  %v5813 = vrcp.pop %v5692
  %v5814 = vmul.f32 1.0, %v5813
  %v5815 = vrcp.pop %v5693
  %v5816 = vmul.f32 1.0, %v5815
  %v5817 = vrcp.pop %v5694
  %v5818 = vmul.f32 1.0, %v5817
  %v5819 = vrcp.pop %v5695
  %v5820 = vmul.f32 1.0, %v5819
  %v5821 = vrcp.pop %v5696
  %v5822 = vmul.f32 1.0, %v5821
  %v5823 = vrcp.pop %v5697
  %v5824 = vmul.f32 1.0, %v5823
  %v5825 = vrcp.pop %v5698
  %v5826 = vmul.f32 1.0, %v5825
  %vm5827 = vcmask 7168
  %5828 = vst.msk [vmem:[%s14] sm:$0xff] %vm5827, %v5700
  %5829 = vst.msk [vmem:[%s14 + $0x8] sm:$0xff] %vm5827, %v5702
  %5830 = vst.msk [vmem:[%s14 + $0x10] sm:$0xff] %vm5827, %v5704
  %5831 = vst.msk [vmem:[%s14 + $0x18] sm:$0xff] %vm5827, %v5706
  %5832 = vst.msk [vmem:[%s14 + $0x20] sm:$0xff] %vm5827, %v5708
  %5833 = vst.msk [vmem:[%s14 + $0x28] sm:$0xff] %vm5827, %v5710
  %5834 = vst.msk [vmem:[%s14 + $0x30] sm:$0xff] %vm5827, %v5712
  %5835 = vst.msk [vmem:[%s14 + $0x38] sm:$0xff] %vm5827, %v5714
  %5836 = vst.msk [vmem:[%s14 + $0x40] sm:$0xff] %vm5827, %v5716
  %5837 = vst.msk [vmem:[%s14 + $0x48] sm:$0xff] %vm5827, %v5718
  %5838 = vst.msk [vmem:[%s14 + $0x50] sm:$0xff] %vm5827, %v5720
  %5839 = vst.msk [vmem:[%s14 + $0x58] sm:$0xff] %vm5827, %v5722
  %5840 = vst.msk [vmem:[%s14 + $0x60] sm:$0xff] %vm5827, %v5724
  %5841 = vst.msk [vmem:[%s14 + $0x68] sm:$0xff] %vm5827, %v5726
  %5842 = vst.msk [vmem:[%s14 + $0x70] sm:$0xff] %vm5827, %v5728
  %5843 = vst.msk [vmem:[%s14 + $0x78] sm:$0xff] %vm5827, %v5730
  %5844 = vst.msk [vmem:[%s14 + $0x80] sm:$0xff] %vm5827, %v5732
  %5845 = vst.msk [vmem:[%s14 + $0x88] sm:$0xff] %vm5827, %v5734
  %5846 = vst.msk [vmem:[%s14 + $0x90] sm:$0xff] %vm5827, %v5736
  %5847 = vst.msk [vmem:[%s14 + $0x98] sm:$0xff] %vm5827, %v5738
  %5848 = vst.msk [vmem:[%s14 + $0xa0] sm:$0xff] %vm5827, %v5740
  %5849 = vst.msk [vmem:[%s14 + $0xa8] sm:$0xff] %vm5827, %v5742
  %5850 = vst.msk [vmem:[%s14 + $0xb0] sm:$0xff] %vm5827, %v5744
  %5851 = vst.msk [vmem:[%s14 + $0xb8] sm:$0xff] %vm5827, %v5746
  %5852 = vst.msk [vmem:[%s14 + $0xc0] sm:$0xff] %vm5827, %v5748
  %5853 = vst.msk [vmem:[%s14 + $0xc8] sm:$0xff] %vm5827, %v5750
  %5854 = vst.msk [vmem:[%s14 + $0xd0] sm:$0xff] %vm5827, %v5752
  %5855 = vst.msk [vmem:[%s14 + $0xd8] sm:$0xff] %vm5827, %v5754
  %5856 = vst.msk [vmem:[%s14 + $0xe0] sm:$0xff] %vm5827, %v5756
  %5857 = vst.msk [vmem:[%s14 + $0xe8] sm:$0xff] %vm5827, %v5758
  %5858 = vst.msk [vmem:[%s14 + $0xf0] sm:$0xff] %vm5827, %v5760
  %5859 = vst.msk [vmem:[%s14 + $0xf8] sm:$0xff] %vm5827, %v5762
  %5860 = vst.msk [vmem:[%s14 + $0x100] sm:$0xff] %vm5827, %v5764
  %5861 = vst.msk [vmem:[%s14 + $0x108] sm:$0xff] %vm5827, %v5766
  %5862 = vst.msk [vmem:[%s14 + $0x110] sm:$0xff] %vm5827, %v5768
  %5863 = vst.msk [vmem:[%s14 + $0x118] sm:$0xff] %vm5827, %v5770
  %5864 = vst.msk [vmem:[%s14 + $0x120] sm:$0xff] %vm5827, %v5772
  %5865 = vst.msk [vmem:[%s14 + $0x128] sm:$0xff] %vm5827, %v5774
  %5866 = vst.msk [vmem:[%s14 + $0x130] sm:$0xff] %vm5827, %v5776
  %5867 = vst.msk [vmem:[%s14 + $0x138] sm:$0xff] %vm5827, %v5778
  %5868 = vst.msk [vmem:[%s14 + $0x140] sm:$0xff] %vm5827, %v5780
  %5869 = vst.msk [vmem:[%s14 + $0x148] sm:$0xff] %vm5827, %v5782
  %5870 = vst.msk [vmem:[%s14 + $0x150] sm:$0xff] %vm5827, %v5784
  %5871 = vst.msk [vmem:[%s14 + $0x158] sm:$0xff] %vm5827, %v5786
  %5872 = vst.msk [vmem:[%s14 + $0x160] sm:$0xff] %vm5827, %v5788
  %5873 = vst.msk [vmem:[%s14 + $0x168] sm:$0xff] %vm5827, %v5790
  %5874 = vst.msk [vmem:[%s14 + $0x170] sm:$0xff] %vm5827, %v5792
  %5875 = vst.msk [vmem:[%s14 + $0x178] sm:$0xff] %vm5827, %v5794
  %5876 = vst.msk [vmem:[%s14 + $0x180] sm:$0xff] %vm5827, %v5796
  %5877 = vst.msk [vmem:[%s14 + $0x188] sm:$0xff] %vm5827, %v5798
  %5878 = vst.msk [vmem:[%s14 + $0x190] sm:$0xff] %vm5827, %v5800
  %5879 = vst.msk [vmem:[%s14 + $0x198] sm:$0xff] %vm5827, %v5802
  %5880 = vst.msk [vmem:[%s14 + $0x1a0] sm:$0xff] %vm5827, %v5804
  %5881 = vst.msk [vmem:[%s14 + $0x1a8] sm:$0xff] %vm5827, %v5806
  %5882 = vst.msk [vmem:[%s14 + $0x1b0] sm:$0xff] %vm5827, %v5808
  %5883 = vst.msk [vmem:[%s14 + $0x1b8] sm:$0xff] %vm5827, %v5810
  %5884 = vst.msk [vmem:[%s14 + $0x1c0] sm:$0xff] %vm5827, %v5812
  %5885 = vst.msk [vmem:[%s14 + $0x1c8] sm:$0xff] %vm5827, %v5814
  %5886 = vst.msk [vmem:[%s14 + $0x1d0] sm:$0xff] %vm5827, %v5816
  %5887 = vst.msk [vmem:[%s14 + $0x1d8] sm:$0xff] %vm5827, %v5818
  %5888 = vst.msk [vmem:[%s14 + $0x1e0] sm:$0xff] %vm5827, %v5820
  %5889 = vst.msk [vmem:[%s14 + $0x1e8] sm:$0xff] %vm5827, %v5822
  %5890 = vst.msk [vmem:[%s14 + $0x1f0] sm:$0xff] %vm5827, %v5824
  %5891 = vst.msk [vmem:[%s14 + $0x1f8] sm:$0xff] %vm5827, %v5826
  // Predicated region
  $region58: #{neumf_forward.1} parent=0 // pred_check
    _
  $region59: #{neumf_forward.1} parent=0 // pred_check_branch
    %5893 = sbr.rel (0) target = $region61
  $region60: #{neumf_forward.1} parent=0 // pred_region
    _
  $region61: #{neumf_forward.1} parent=0 // pred_fallthru
    _
  // Predicated region
  $region62: #{neumf_forward.1} parent=0 // pred_check
    _
  $region63: #{neumf_forward.1} parent=0 // pred_check_branch
    %5895 = sbr.rel (0) target = $region65
  $region64: #{neumf_forward.1} parent=0 // pred_region
    _
  $region65: #{neumf_forward.1} parent=0 // pred_fallthru
    _

</llo_original>
